<compile_context>
chip_gen: v7x
topology: tpu7x:2x2x1
jax: 0.10.0
libtpu: 0.0.40
codegen_flags: <defaults>
</compile_context>

<pallas_src>
import jax
import jax.numpy as jnp
from jax import lax
from jax.experimental import pallas as pl
from jax.experimental.pallas import tpu as pltpu


LRELU_SLOPE = 0.2
BN_EPS = 1e-5
TAPS = 16                         # 4x4 conv -> 16 im2col taps
_VMEM_LIMIT = 32 * 1024 * 1024    # safe on v5e/v6e (128 MiB) and v7x (64 MiB)
_TM_CAP = 1024                    # large M tiles for mem-bound kernels
_K_SINGLE_MAX = 2048              # full-K single-block matmul path up to this K


def _round_up(x, m):
    return ((x + m - 1) // m) * m


# ----------------------------------------------------------------------------
# Kernels
# ----------------------------------------------------------------------------
def _matmul_kernel(a_ref, w_ref, o_ref):
    """Single-K-block matmul (conv1): no accumulator, no epilogue activation."""
    o_ref[...] = jnp.dot(a_ref[...], w_ref[...],
                         preferred_element_type=jnp.float32).astype(o_ref.dtype)


def _matmul_acc_kernel(a_ref, w_ref, o_ref, acc_ref):
    """Multi-K-block matmul fallback."""
    k = pl.program_id(1)

    @pl.when(k == 0)
    def _():
        acc_ref[...] = jnp.zeros_like(acc_ref)

    acc_ref[...] += jnp.dot(a_ref[...], w_ref[...],
                            preferred_element_type=jnp.float32)

    @pl.when(k == pl.num_programs(1) - 1)
    def _():
        o_ref[...] = acc_ref[...].astype(o_ref.dtype)


def _act_conv_stats_kernel(a_ref, sck_ref, shk_ref, w_ref,
                           y_ref, sum_ref, sq_ref):
    """Fused (previous BN + LeakyReLU) prologue + matmul + per-tile BN stats.

    Single-K-block variant: 1-D parallel grid over M, no scratch.
    """
    a = a_ref[...].astype(jnp.float32) * sck_ref[...] + shk_ref[...]
    a = jnp.where(a > 0.0, a, LRELU_SLOPE * a)
    y = jnp.dot(a.astype(jnp.bfloat16), w_ref[...],
                preferred_element_type=jnp.float32)
    y_ref[...] = y.astype(y_ref.dtype)
    # per-M-tile partial stats (replicated over the 8 sublanes of the block)
    sum_ref[...] = jnp.broadcast_to(jnp.sum(y, axis=0, keepdims=True),
                                    sum_ref.shape)
    sq_ref[...] = jnp.broadcast_to(jnp.sum(y * y, axis=0, keepdims=True),
                                   sq_ref.shape)


def _act_conv_stats_acc_kernel(a_ref, sck_ref, shk_ref, w_ref,
                               y_ref, sum_ref, sq_ref, acc_ref):
    """Multi-K-block variant of the fused act + conv + stats kernel."""
    k = pl.program_id(1)

    @pl.when(k == 0)
    def _():
        acc_ref[...] = jnp.zeros_like(acc_ref)

    a = a_ref[...].astype(jnp.float32) * sck_ref[...] + shk_ref[...]
    a = jnp.where(a > 0.0, a, LRELU_SLOPE * a)
    acc_ref[...] += jnp.dot(a.astype(jnp.bfloat16), w_ref[...],
                            preferred_element_type=jnp.float32)

    @pl.when(k == pl.num_programs(1) - 1)
    def _():
        y = acc_ref[...]
        y_ref[...] = y.astype(y_ref.dtype)
        sum_ref[...] = jnp.broadcast_to(jnp.sum(y, axis=0, keepdims=True),
                                        sum_ref.shape)
        sq_ref[...] = jnp.broadcast_to(jnp.sum(y * y, axis=0, keepdims=True),
                                       sq_ref.shape)


def _head_kernel(y_ref, scale_ref, shift_ref, w5_ref, o_ref):
    """Fused BN4 + LeakyReLU + conv5 (4x4 valid, Cout=1) + Sigmoid."""
    x = y_ref[...].astype(jnp.float32) * scale_ref[...] + shift_ref[...]
    x = jnp.where(x > 0.0, x, LRELU_SLOPE * x)
    rows, npc = x.shape
    bn = rows // TAPS
    prod = x.reshape(bn, TAPS, npc) * w5_ref[...]        # broadcast (16, npc)
    s = jnp.sum(prod, axis=1)                            # (bn, npc)
    s = jnp.sum(s, axis=-1, keepdims=True)               # (bn, 1)
    # numerically stable sigmoid (no inf intermediates)
    e = jnp.exp(-jnp.abs(s))
    sig = jnp.where(s >= 0.0, 1.0 / (1.0 + e), e / (1.0 + e))
    o_ref[...] = sig.astype(o_ref.dtype)


# ----------------------------------------------------------------------------
# XLA glue (im2col, BN scale/shift folding)
# ----------------------------------------------------------------------------
def _im2col_4s2p1(x_nhwc, pad_val_c=None):
    """k=4, s=2, p=1 im2col.  Returns ((N*Ho*Wo, 16*C) bf16, (N, Ho, Wo)).

    `pad_val_c` (per-channel) is painted onto the 1-pixel border so that a
    downstream fused (BN + LeakyReLU) prologue maps padded entries to ~0,
    preserving the semantics of zero-padding the post-activation tensor.
    """
    N, H, W, C = x_nhwc.shape
    xp = jnp.pad(x_nhwc, ((0, 0), (1, 1), (1, 1), (0, 0)))
    if pad_val_c is not None:
        Hp, Wp = H + 2, W + 2
        r = jnp.arange(Hp)[:, None]
        c = jnp.arange(Wp)[None, :]
        border = (r == 0) | (r == Hp - 1) | (c == 0) | (c == Wp - 1)
        xp = jnp.where(border[None, :, :, None],
                       pad_val_c[None, None, None, :].astype(xp.dtype), xp)
    Ho, Wo = H // 2, W // 2
    taps = [xp[:, kh:kh + 2 * Ho:2, kw:kw + 2 * Wo:2, :]
            for kh in range(4) for kw in range(4)]
    p = jnp.concatenate(taps, axis=-1)          # channel order (kh, kw, c)
    return p.reshape(N * Ho * Wo, TAPS * C), (N, Ho, Wo)


def _next_patches(y_raw, M, Cout, nhw, scale=None, shift=None):
    """Build the next conv's im2col patches from the raw (pre-BN/LReLU) output.

    Returns (patches_bf16, scale_k, shift_k, pad_k, (N, Ho2, Wo2)) where
    scale_k/shift_k are the per-K vectors consumed by the fused prologue
    (identity if scale is None, i.e. plain LeakyReLU for the conv1->conv2 edge).
    """
    N, Ho, Wo = nhw
    y = y_raw[:M, :Cout].reshape(N, Ho, Wo, Cout)          # bf16
    if scale is None:
        scale_c = jnp.ones((Cout,), jnp.float32)
        shift_c = jnp.zeros((Cout,), jnp.float32)
    else:
        scale_c = scale[:Cout].astype(jnp.float32)
        shift_c = shift[:Cout].astype(jnp.float32)
    safe = jnp.where(scale_c != 0.0, scale_c, 1.0)
    pc = jnp.where(scale_c != 0.0, -shift_c / safe, 0.0).astype(jnp.bfloat16)
    patches, out_nhw = _im2col_4s2p1(y, pad_val_c=pc)
    K = TAPS * Cout
    scale_k = jnp.tile(scale_c, TAPS).reshape(1, K)
    shift_k = jnp.tile(shift_c, TAPS).reshape(1, K)
    pad_k = jnp.tile(pc, TAPS)                             # (K,) bf16
    return patches, scale_k, shift_k, pad_k, out_nhw


def _bn_scale_shift(s_sum, s_sq, m_true, gamma, beta, n_pad):
    """Fold batch-statistics BN into per-channel scale/shift (tiny XLA math)."""
    cout = gamma.shape[0]
    g = jnp.pad(gamma, (0, n_pad - cout))
    b = jnp.pad(beta, (0, n_pad - cout))
    tot = s_sum.reshape(-1, 8, n_pad)[:, 0, :].sum(axis=0)
    tot2 = s_sq.reshape(-1, 8, n_pad)[:, 0, :].sum(axis=0)
    mean = tot / m_true
    var = jnp.maximum(tot2 / m_true - mean * mean, 0.0)    # biased var, clamped
    scale = g * lax.rsqrt(var + BN_EPS)
    shift = b - mean * scale
    return scale, shift                                    # (n_pad,) each


# ----------------------------------------------------------------------------
# Pallas conv wrapper
# ----------------------------------------------------------------------------
def _conv_pallas(patches, w_oikk, *, scale_k=None, shift_k=None, pad_k=None,
                 with_stats=False):
    """im2col conv as a tiled Pallas matmul (bf16 MXU, f32 accumulation)."""
    M, K = patches.shape
    Cout = w_oikk.shape[0]
    Np = _round_up(Cout, 128)                 # lane-dense output stores
    tm = min(_TM_CAP, _round_up(M, 8))
    M_pad = _round_up(M, tm)
    m_tiles = M_pad // tm

    a = patches.astype(jnp.bfloat16)
    if M_pad != M:
        # Pad rows with the value the fused prologue maps to 0, so padding
        # never pollutes the BN statistics.
        if pad_k is None:
            fill = jnp.zeros((M_pad - M, K), jnp.bfloat16)
        else:
            fill = jnp.broadcast_to(pad_k.reshape(1, K).astype(jnp.bfloat16),
                                    (M_pad - M, K))
        a = jnp.concatenate([a, fill], axis=0)

    # PyTorch weight [Cout, Cin, KH, KW] -> [KH, KW, Cin, Cout] -> [K, Cout]
    w2d = jnp.transpose(w_oikk, (2, 3, 1, 0)).reshape(K, Cout)

    if K <= _K_SINGLE_MAX:
        # Single full-K block: no accumulator scratch, no K axis, 1-D
        # "parallel" grid over M.  K is left un-padded (full-dim block).
        w = jnp.pad(w2d, ((0, 0), (0, Np - Cout))).astype(jnp.bfloat16)
        a_spec = pl.BlockSpec((tm, K), lambda i: (i, 0))
        w_spec = pl.BlockSpec((K, Np), lambda i: (0, 0))
        y_spec = pl.BlockSpec((tm, Np), lambda i: (i, 0))
        v_spec = pl.BlockSpec((1, K), lambda i: (0, 0))
        stat_spec = pl.BlockSpec((8, Np), lambda i: (i, 0))
        cparams = pltpu.CompilerParams(
            dimension_semantics=("parallel",),
            vmem_limit_bytes=_VMEM_LIMIT)
        if with_stats:
            y, s_sum, s_sq = pl.pallas_call(
                _act_conv_stats_kernel,
                grid=(m_tiles,),
                in_specs=[a_spec, v_spec, v_spec, w_spec],
                out_specs=(y_spec, stat_spec, stat_spec),
                out_shape=(jax.ShapeDtypeStruct((M_pad, Np), jnp.bfloat16),
                           jax.ShapeDtypeStruct((m_tiles * 8, Np), jnp.float32),
                           jax.ShapeDtypeStruct((m_tiles * 8, Np), jnp.float32)),
                compiler_params=cparams,
            )(a, scale_k, shift_k, w)
            return y, s_sum, s_sq, (M, Cout, Np)
        y = pl.pallas_call(
            _matmul_kernel,
            grid=(m_tiles,),
            in_specs=[a_spec, w_spec],
            out_specs=y_spec,
            out_shape=jax.ShapeDtypeStruct((M_pad, Np), jnp.bfloat16),
            compiler_params=cparams,
        )(a, w)
        return y, None, None, (M, Cout, Np)

    # ---- multi-K-tile fallback (large Cin, e.g. realistic ndf on layer 4) ----
    K_pad = _round_up(K, 128)
    tk = 128
    for cand in (512, 256, 128):        # v6e/v7x MXUs are 256 wide: prefer >=256
        if K_pad % cand == 0:
            tk = cand
            break
    a = jnp.pad(a, ((0, 0), (0, K_pad - K)))
    w = jnp.pad(w2d, ((0, K_pad - K), (0, Np - Cout))).astype(jnp.bfloat16)
    grid = (m_tiles, K_pad // tk)
    a_spec = pl.BlockSpec((tm, tk), lambda i, k: (i, k))
    w_spec = pl.BlockSpec((tk, Np), lambda i, k: (k, 0))
    y_spec = pl.BlockSpec((tm, Np), lambda i, k: (i, 0))
    v_spec = pl.BlockSpec((1, tk), lambda i, k: (0, k))
    stat_spec = pl.BlockSpec((8, Np), lambda i, k: (i, 0))
    cparams = pltpu.CompilerParams(
        dimension_semantics=("parallel", "arbitrary"),
        vmem_limit_bytes=_VMEM_LIMIT)
    if with_stats:
        sck = jnp.pad(scale_k, ((0, 0), (0, K_pad - K)), constant_values=1.0)
        shk = jnp.pad(shift_k, ((0, 0), (0, K_pad - K)))
        y, s_sum, s_sq = pl.pallas_call(
            _act_conv_stats_acc_kernel,
            grid=grid,
            in_specs=[a_spec, v_spec, v_spec, w_spec],
            out_specs=(y_spec, stat_spec, stat_spec),
            out_shape=(jax.ShapeDtypeStruct((M_pad, Np), jnp.bfloat16),
                       jax.ShapeDtypeStruct((m_tiles * 8, Np), jnp.float32),
                       jax.ShapeDtypeStruct((m_tiles * 8, Np), jnp.float32)),
            scratch_shapes=[pltpu.VMEM((tm, Np), jnp.float32)],
            compiler_params=cparams,
        )(a, sck, shk, w)
        return y, s_sum, s_sq, (M, Cout, Np)
    y = pl.pallas_call(
        _matmul_acc_kernel,
        grid=grid,
        in_specs=[a_spec, w_spec],
        out_specs=y_spec,
        out_shape=jax.ShapeDtypeStruct((M_pad, Np), jnp.bfloat16),
        scratch_shapes=[pltpu.VMEM((tm, Np), jnp.float32)],
        compiler_params=cparams,
    )(a, w)
    return y, None, None, (M, Cout, Np)


def _head(y4, M4, Np4, nhw4, scale4, shift4, w5):
    """Fused BN4 + LeakyReLU + conv5 (4x4 valid, Cout=1) + Sigmoid, gridded
    over batch blocks (no O(N^2) selector)."""
    N, Ho, Wo = nhw4
    assert Ho == 4 and Wo == 4, "final 4x4 valid conv requires 64x64 input"
    y = y4[:M4]                                            # (N*16, Np4) bf16
    if N >= 8:
        bN = 8
        N_pad = _round_up(N, 8)
    else:
        bN = N
        N_pad = N
    if N_pad != N:
        y = jnp.pad(y, ((0, (N_pad - N) * TAPS), (0, 0)))
    # conv5 weight [1, Cin4, 4, 4] -> (16, Np4) in (kh, kw, cin) row order
    w5_2d = jnp.transpose(w5, (0, 2, 3, 1)).reshape(TAPS, -1)
    w5_2d = jnp.pad(w5_2d, ((0, 0), (0, Np4 - w5_2d.shape[1]))).astype(jnp.float32)
    sc = scale4.reshape(1, Np4).astype(jnp.float32)
    sh = shift4.reshape(1, Np4).astype(jnp.float32)
    rows = bN * TAPS
    out = pl.pallas_call(
        _head_kernel,
        grid=(N_pad // bN,),
        in_specs=[pl.BlockSpec((rows, Np4), lambda i: (i, 0)),
                  pl.BlockSpec((1, Np4), lambda i: (0, 0)),
                  pl.BlockSpec((1, Np4), lambda i: (0, 0)),
                  pl.BlockSpec((TAPS, Np4), lambda i: (0, 0))],
        out_specs=pl.BlockSpec((bN, 1), lambda i: (i, 0)),
        out_shape=jax.ShapeDtypeStruct((N_pad, 1), jnp.float32),
        compiler_params=pltpu.CompilerParams(
            dimension_semantics=("parallel",),
            vmem_limit_bytes=_VMEM_LIMIT),
    )(y, sc, sh, w5_2d)
    return out[:N].reshape(N, 1, 1, 1)


# ----------------------------------------------------------------------------
# Full module forward.
# ----------------------------------------------------------------------------
def discriminator_stage_1(x_nchw, params):
    x = jnp.transpose(x_nchw, (0, 2, 3, 1)).astype(jnp.bfloat16)   # NCHW -> NHWC
    N = x.shape[0]

    # layer 1: conv1 (raw output; LeakyReLU is fused into layer 2's prologue)
    p1, (_, H1, W1) = _im2col_4s2p1(x)
    y1, _, _, (M1, C1, _) = _conv_pallas(p1, params["w1"])

    # layer 2: LReLU(y1) -> conv2, + BN2 batch stats
    a2, sck2, shk2, pk2, (_, H2, W2) = _next_patches(y1, M1, C1, (N, H1, W1))
    y2, ss2, sq2, (M2, C2, Np2) = _conv_pallas(
        a2, params["w2"], scale_k=sck2, shift_k=shk2, pad_k=pk2, with_stats=True)
    scale2, shift2 = _bn_scale_shift(ss2, sq2, M2, params["g2"], params["b2"], Np2)

    # layer 3: BN2+LReLU (fused prologue) -> conv3, + BN3 stats
    a3, sck3, shk3, pk3, (_, H3, W3) = _next_patches(
        y2, M2, C2, (N, H2, W2), scale2, shift2)
    y3, ss3, sq3, (M3, C3, Np3) = _conv_pallas(
        a3, params["w3"], scale_k=sck3, shift_k=shk3, pad_k=pk3, with_stats=True)
    scale3, shift3 = _bn_scale_shift(ss3, sq3, M3, params["g3"], params["b3"], Np3)

    # layer 4: BN3+LReLU (fused prologue) -> conv4, + BN4 stats
    a4, sck4, shk4, pk4, (_, H4, W4) = _next_patches(
        y3, M3, C3, (N, H3, W3), scale3, shift3)
    y4, ss4, sq4, (M4, _, Np4) = _conv_pallas(
        a4, params["w4"], scale_k=sck4, shift_k=shk4, pad_k=pk4, with_stats=True)
    scale4, shift4 = _bn_scale_shift(ss4, sq4, M4, params["g4"], params["b4"], Np4)

    # head: BN4 + LReLU + conv5 (4x4 valid) + Sigmoid
    return _head(y4, M4, Np4, (N, H4, W4), scale4, shift4, params["w5"])


# ----------------------------------------------------------------------------
# Pure-JAX f32 reference (for a loose numerical check) and param init.
# ----------------------------------------------------------------------------
def _reference_forward(x_nchw, params):
    def conv(x, w, stride, pad):
        return lax.conv_general_dilated(
            x, w, window_strides=(stride, stride),
            padding=[(pad, pad), (pad, pad)],
            dimension_numbers=("NHWC", "OIHW", "NHWC"))

    def bn_lrelu(x, g, b):
        mean = jnp.mean(x, axis=(0, 1, 2))
        var = jnp.var(x, axis=(0, 1, 2))
        xh = (x - mean) * lax.rsqrt(var + BN_EPS) * g + b
        return jnp.where(xh > 0, xh, LRELU_SLOPE * xh)

    x = jnp.transpose(x_nchw, (0, 2, 3, 1)).astype(jnp.float32)
    x = conv(x, params["w1"], 2, 1)
    x = jnp.where(x > 0, x, LRELU_SLOPE * x)
    x = conv(x, params["w2"], 2, 1)
    x = bn_lrelu(x, params["g2"], params["b2"])
    x = conv(x, params["w3"], 2, 1)
    x = bn_lrelu(x, params["g3"], params["b3"])
    x = conv(x, params["w4"], 2, 1)
    x = bn_lrelu(x, params["g4"], params["b4"])
    x = conv(x, params["w5"], 1, 0)
    x = jax.nn.sigmoid(x)
    return jnp.transpose(x, (0, 3, 1, 2))


def init_params(key, nc, ndf):
    ks = jax.random.split(key, 5)
    return {
        "w1": 0.02 * jax.random.normal(ks[0], (ndf,     nc,      4, 4), jnp.float32),
        "w2": 0.02 * jax.random.normal(ks[1], (ndf * 2, ndf,     4, 4), jnp.float32),
        "w3": 0.02 * jax.random.normal(ks[2], (ndf * 4, ndf * 2, 4, 4), jnp.float32),
        "w4": 0.02 * jax.random.normal(ks[3], (ndf * 8, ndf * 4, 4, 4), jnp.float32),
        "w5": 0.02 * jax.random.normal(ks[4], (1,       ndf * 8, 4, 4), jnp.float32),
        "g2": jnp.ones((ndf * 2,), jnp.float32), "b2": jnp.zeros((ndf * 2,), jnp.float32),
        "g3": jnp.ones((ndf * 4,), jnp.float32), "b3": jnp.zeros((ndf * 4,), jnp.float32),
        "g4": jnp.ones((ndf * 8,), jnp.float32), "b4": jnp.zeros((ndf * 8,), jnp.float32),
    }


if __name__ == "__main__":
    nc, ndf = 3, 8
    batch = 2
    key = jax.random.PRNGKey(0)
    kx, kp = jax.random.split(key)

    # Final conv (k=4, s=1, p=0) implies 64x64 input (4 stride-2 halvings -> 4x4).
    x = jax.random.normal(kx, (batch, nc, 64, 64), jnp.float32)
    params = init_params(kp, nc, ndf)

    fwd = jax.jit(discriminator_stage_1)
    out = jax.block_until_ready(fwd(x, params))

    assert out.shape == (batch, 1, 1, 1), out.shape
    assert bool(jnp.all(jnp.isfinite(out)))
    assert bool(jnp.all((out >= 0.0) & (out <= 1.0)))   # sigmoid range

    # loose numerical check vs f32 reference (kernels run in bf16)
    ref = jax.block_until_ready(jax.jit(_reference_forward)(x, params))
    max_diff = float(jnp.max(jnp.abs(out - ref)))
    assert max_diff < 0.1, max_diff

    print("KERNEL_OK")
</pallas_src>

<mosaic_0001>
module attributes {stable_mosaic.version = 11 : i64} {
  func.func @_matmul_kernel(%arg0: i32, %arg1: memref<1024x48xbf16, #tpu.memory_space<vmem>>, %arg2: memref<48x128xbf16, #tpu.memory_space<vmem>>, %arg3: memref<1024x128xbf16, #tpu.memory_space<vmem>>) attributes {dimension_semantics = [#tpu.dimension_semantics<parallel>], iteration_bounds = array<i64: 2>, scalar_prefetch = 0 : i64, scratch_operands = 0 : i64, tpu.core_type = #tpu.core_type<tc>, window_params = [{transform_indices = @transform_0, window_bounds = array<i64: 1024, 48>}, {pipeline_mode = #tpu.pipeline_mode<synchronous>, transform_indices = @transform_1, window_bounds = array<i64: 48, 128>}, {transform_indices = @transform_2, window_bounds = array<i64: 1024, 128>}]} {
    %c0 = arith.constant 0 : index
    %c0_0 = arith.constant 0 : index
    %0 = vector.load %arg1[%c0, %c0_0] : memref<1024x48xbf16, #tpu.memory_space<vmem>>, vector<1024x48xbf16>
    %c0_1 = arith.constant 0 : index
    %c0_2 = arith.constant 0 : index
    %1 = vector.load %arg2[%c0_1, %c0_2] : memref<48x128xbf16, #tpu.memory_space<vmem>>, vector<48x128xbf16>
    %cst = arith.constant dense<0.000000e+00> : vector<1024x128xf32>
    %2 = tpu.matmul %0, %1, %cst {dimension_numbers = #tpu.dot_dimension_numbers<[1], [0], [0], [1], [0, 0, 1, 1], [], []>} : vector<1024x48xbf16>, vector<48x128xbf16>, vector<1024x128xf32> -> vector<1024x128xf32>
    %3 = arith.truncf %2 : vector<1024x128xf32> to vector<1024x128xbf16>
    %c0_3 = arith.constant 0 : index
    %c0_4 = arith.constant 0 : index
    %4 = vector.load %arg3[%c0_3, %c0_4] : memref<1024x128xbf16, #tpu.memory_space<vmem>>, vector<1024x128xbf16>
    tpu.vector_store %arg3[%c0_3, %c0_4], %3 {strides = array<i32>} : memref<1024x128xbf16, #tpu.memory_space<vmem>>, vector<1024x128xbf16>,
    return
  }
  func.func @transform_0(%arg0: i32) -> (i32, i32) {
    %c0_i32 = arith.constant 0 : i32
    %c0_i32_0 = arith.constant 0 : i32
    return %arg0, %c0_i32 : i32, i32
  }
  func.func @transform_1(%arg0: i32) -> (i32, i32) {
    %c0_i32 = arith.constant 0 : i32
    %c0_i32_0 = arith.constant 0 : i32
    %c0_i32_1 = arith.constant 0 : i32
    return %c0_i32, %c0_i32_0 : i32, i32
  }
  func.func @transform_2(%arg0: i32) -> (i32, i32) {
    %c0_i32 = arith.constant 0 : i32
    %c0_i32_0 = arith.constant 0 : i32
    return %arg0, %c0_i32 : i32, i32
  }
}

module attributes {stable_mosaic.version = 11 : i64} {
  func.func @_act_conv_stats_kernel(%arg0: i32, %arg1: memref<512x128xbf16, #tpu.memory_space<vmem>>, %arg2: memref<1x128xf32, #tpu.memory_space<vmem>>, %arg3: memref<1x128xf32, #tpu.memory_space<vmem>>, %arg4: memref<128x128xbf16, #tpu.memory_space<vmem>>, %arg5: memref<512x128xbf16, #tpu.memory_space<vmem>>, %arg6: memref<8x128xf32, #tpu.memory_space<vmem>>, %arg7: memref<8x128xf32, #tpu.memory_space<vmem>>) attributes {dimension_semantics = [#tpu.dimension_semantics<parallel>], iteration_bounds = array<i64: 1>, scalar_prefetch = 0 : i64, scratch_operands = 0 : i64, tpu.core_type = #tpu.core_type<tc>, window_params = [{transform_indices = @transform_0, window_bounds = array<i64: 512, 128>}, {pipeline_mode = #tpu.pipeline_mode<synchronous>, transform_indices = @transform_1, window_bounds = array<i64: 1, 128>}, {pipeline_mode = #tpu.pipeline_mode<synchronous>, transform_indices = @transform_2, window_bounds = array<i64: 1, 128>}, {pipeline_mode = #tpu.pipeline_mode<synchronous>, transform_indices = @transform_3, window_bounds = array<i64: 128, 128>}, {transform_indices = @transform_4, window_bounds = array<i64: 512, 128>}, {transform_indices = @transform_5, window_bounds = array<i64: 8, 128>}, {transform_indices = @transform_6, window_bounds = array<i64: 8, 128>}]} {
    %c0 = arith.constant 0 : index
    %c0_0 = arith.constant 0 : index
    %0 = vector.load %arg1[%c0, %c0_0] : memref<512x128xbf16, #tpu.memory_space<vmem>>, vector<512x128xbf16>
    %1 = arith.extf %0 : vector<512x128xbf16> to vector<512x128xf32>
    %c0_1 = arith.constant 0 : index
    %c0_2 = arith.constant 0 : index
    %2 = vector.load %arg2[%c0_1, %c0_2] : memref<1x128xf32, #tpu.memory_space<vmem>>, vector<1x128xf32>
    %3 = vector.broadcast %2 : vector<1x128xf32> to vector<512x128xf32>
    %4 = arith.mulf %1, %3 : vector<512x128xf32>
    %c0_3 = arith.constant 0 : index
    %c0_4 = arith.constant 0 : index
    %5 = vector.load %arg3[%c0_3, %c0_4] : memref<1x128xf32, #tpu.memory_space<vmem>>, vector<1x128xf32>
    %6 = vector.broadcast %5 : vector<1x128xf32> to vector<512x128xf32>
    %7 = arith.addf %4, %6 : vector<512x128xf32>
    %cst = arith.constant 0.000000e+00 : f32
    %8 = vector.broadcast %cst : f32 to vector<512x128xf32>
    %9 = arith.cmpf ogt, %7, %8 : vector<512x128xf32>
    %cst_5 = arith.constant 2.000000e-01 : f32
    %10 = vector.broadcast %cst_5 : f32 to vector<512x128xf32>
    %11 = arith.mulf %10, %7 : vector<512x128xf32>
    %12 = arith.select %9, %7, %11 : vector<512x128xi1>, vector<512x128xf32>
    %13 = arith.truncf %12 : vector<512x128xf32> to vector<512x128xbf16>
    %c0_6 = arith.constant 0 : index
    %c0_7 = arith.constant 0 : index
    %14 = vector.load %arg4[%c0_6, %c0_7] : memref<128x128xbf16, #tpu.memory_space<vmem>>, vector<128x128xbf16>
    %cst_8 = arith.constant dense<0.000000e+00> : vector<512x128xf32>
    %15 = tpu.matmul %13, %14, %cst_8 {dimension_numbers = #tpu.dot_dimension_numbers<[1], [0], [0], [1], [0, 0, 1, 1], [], []>} : vector<512x128xbf16>, vector<128x128xbf16>, vector<512x128xf32> -> vector<512x128xf32>
    %16 = arith.truncf %15 : vector<512x128xf32> to vector<512x128xbf16>
    %c0_9 = arith.constant 0 : index
    %c0_10 = arith.constant 0 : index
    %17 = vector.load %arg5[%c0_9, %c0_10] : memref<512x128xbf16, #tpu.memory_space<vmem>>, vector<512x128xbf16>
    tpu.vector_store %arg5[%c0_9, %c0_10], %16 {strides = array<i32>} : memref<512x128xbf16, #tpu.memory_space<vmem>>, vector<512x128xbf16>,
    %cst_11 = arith.constant dense<0.000000e+00> : vector<128xf32>
    %18 = vector.multi_reduction <add>, %15, %cst_11 [0] : vector<512x128xf32> to vector<128xf32>
    %19 = vector.shape_cast %18 : vector<128xf32> to vector<1x128xf32>
    %20 = vector.shape_cast %19 : vector<1x128xf32> to vector<1x128xf32>
    %21 = vector.broadcast %20 : vector<1x128xf32> to vector<8x128xf32>
    %c0_12 = arith.constant 0 : index
    %c0_13 = arith.constant 0 : index
    %22 = vector.load %arg6[%c0_12, %c0_13] : memref<8x128xf32, #tpu.memory_space<vmem>>, vector<8x128xf32>
    tpu.vector_store %arg6[%c0_12, %c0_13], %21 {strides = array<i32>} : memref<8x128xf32, #tpu.memory_space<vmem>>, vector<8x128xf32>,
    %23 = arith.mulf %15, %15 : vector<512x128xf32>
    %cst_14 = arith.constant dense<0.000000e+00> : vector<128xf32>
    %24 = vector.multi_reduction <add>, %23, %cst_14 [0] : vector<512x128xf32> to vector<128xf32>
    %25 = vector.shape_cast %24 : vector<128xf32> to vector<1x128xf32>
    %26 = vector.shape_cast %25 : vector<1x128xf32> to vector<1x128xf32>
    %27 = vector.broadcast %26 : vector<1x128xf32> to vector<8x128xf32>
    %c0_15 = arith.constant 0 : index
    %c0_16 = arith.constant 0 : index
    %28 = vector.load %arg7[%c0_15, %c0_16] : memref<8x128xf32, #tpu.memory_space<vmem>>, vector<8x128xf32>
    tpu.vector_store %arg7[%c0_15, %c0_16], %27 {strides = array<i32>} : memref<8x128xf32, #tpu.memory_space<vmem>>, vector<8x128xf32>,
    return
  }
  func.func @transform_0(%arg0: i32) -> (i32, i32) {
    %c0_i32 = arith.constant 0 : i32
    %c0_i32_0 = arith.constant 0 : i32
    return %arg0, %c0_i32 : i32, i32
  }
  func.func @transform_1(%arg0: i32) -> (i32, i32) {
    %c0_i32 = arith.constant 0 : i32
    %c0_i32_0 = arith.constant 0 : i32
    %c0_i32_1 = arith.constant 0 : i32
    return %c0_i32, %c0_i32_0 : i32, i32
  }
  func.func @transform_2(%arg0: i32) -> (i32, i32) {
    %c0_i32 = arith.constant 0 : i32
    %c0_i32_0 = arith.constant 0 : i32
    %c0_i32_1 = arith.constant 0 : i32
    return %c0_i32, %c0_i32_0 : i32, i32
  }
  func.func @transform_3(%arg0: i32) -> (i32, i32) {
    %c0_i32 = arith.constant 0 : i32
    %c0_i32_0 = arith.constant 0 : i32
    %c0_i32_1 = arith.constant 0 : i32
    return %c0_i32, %c0_i32_0 : i32, i32
  }
  func.func @transform_4(%arg0: i32) -> (i32, i32) {
    %c0_i32 = arith.constant 0 : i32
    %c0_i32_0 = arith.constant 0 : i32
    return %arg0, %c0_i32 : i32, i32
  }
  func.func @transform_5(%arg0: i32) -> (i32, i32) {
    %c0_i32 = arith.constant 0 : i32
    %c0_i32_0 = arith.constant 0 : i32
    return %arg0, %c0_i32 : i32, i32
  }
  func.func @transform_6(%arg0: i32) -> (i32, i32) {
    %c0_i32 = arith.constant 0 : i32
    %c0_i32_0 = arith.constant 0 : i32
    return %arg0, %c0_i32 : i32, i32
  }
}

module attributes {stable_mosaic.version = 11 : i64} {
  func.func @_act_conv_stats_kernel(%arg0: i32, %arg1: memref<128x256xbf16, #tpu.memory_space<vmem>>, %arg2: memref<1x256xf32, #tpu.memory_space<vmem>>, %arg3: memref<1x256xf32, #tpu.memory_space<vmem>>, %arg4: memref<256x128xbf16, #tpu.memory_space<vmem>>, %arg5: memref<128x128xbf16, #tpu.memory_space<vmem>>, %arg6: memref<8x128xf32, #tpu.memory_space<vmem>>, %arg7: memref<8x128xf32, #tpu.memory_space<vmem>>) attributes {dimension_semantics = [#tpu.dimension_semantics<parallel>], iteration_bounds = array<i64: 1>, scalar_prefetch = 0 : i64, scratch_operands = 0 : i64, tpu.core_type = #tpu.core_type<tc>, window_params = [{transform_indices = @transform_0, window_bounds = array<i64: 128, 256>}, {pipeline_mode = #tpu.pipeline_mode<synchronous>, transform_indices = @transform_1, window_bounds = array<i64: 1, 256>}, {pipeline_mode = #tpu.pipeline_mode<synchronous>, transform_indices = @transform_2, window_bounds = array<i64: 1, 256>}, {pipeline_mode = #tpu.pipeline_mode<synchronous>, transform_indices = @transform_3, window_bounds = array<i64: 256, 128>}, {transform_indices = @transform_4, window_bounds = array<i64: 128, 128>}, {transform_indices = @transform_5, window_bounds = array<i64: 8, 128>}, {transform_indices = @transform_6, window_bounds = array<i64: 8, 128>}]} {
    %c0 = arith.constant 0 : index
    %c0_0 = arith.constant 0 : index
    %0 = vector.load %arg1[%c0, %c0_0] : memref<128x256xbf16, #tpu.memory_space<vmem>>, vector<128x256xbf16>
    %1 = arith.extf %0 : vector<128x256xbf16> to vector<128x256xf32>
    %c0_1 = arith.constant 0 : index
    %c0_2 = arith.constant 0 : index
    %2 = vector.load %arg2[%c0_1, %c0_2] : memref<1x256xf32, #tpu.memory_space<vmem>>, vector<1x256xf32>
    %3 = vector.broadcast %2 : vector<1x256xf32> to vector<128x256xf32>
    %4 = arith.mulf %1, %3 : vector<128x256xf32>
    %c0_3 = arith.constant 0 : index
    %c0_4 = arith.constant 0 : index
    %5 = vector.load %arg3[%c0_3, %c0_4] : memref<1x256xf32, #tpu.memory_space<vmem>>, vector<1x256xf32>
    %6 = vector.broadcast %5 : vector<1x256xf32> to vector<128x256xf32>
    %7 = arith.addf %4, %6 : vector<128x256xf32>
    %cst = arith.constant 0.000000e+00 : f32
    %8 = vector.broadcast %cst : f32 to vector<128x256xf32>
    %9 = arith.cmpf ogt, %7, %8 : vector<128x256xf32>
    %cst_5 = arith.constant 2.000000e-01 : f32
    %10 = vector.broadcast %cst_5 : f32 to vector<128x256xf32>
    %11 = arith.mulf %10, %7 : vector<128x256xf32>
    %12 = arith.select %9, %7, %11 : vector<128x256xi1>, vector<128x256xf32>
    %13 = arith.truncf %12 : vector<128x256xf32> to vector<128x256xbf16>
    %c0_6 = arith.constant 0 : index
    %c0_7 = arith.constant 0 : index
    %14 = vector.load %arg4[%c0_6, %c0_7] : memref<256x128xbf16, #tpu.memory_space<vmem>>, vector<256x128xbf16>
    %cst_8 = arith.constant dense<0.000000e+00> : vector<128x128xf32>
    %15 = tpu.matmul %13, %14, %cst_8 {dimension_numbers = #tpu.dot_dimension_numbers<[1], [0], [0], [1], [0, 0, 1, 1], [], []>} : vector<128x256xbf16>, vector<256x128xbf16>, vector<128x128xf32> -> vector<128x128xf32>
    %16 = arith.truncf %15 : vector<128x128xf32> to vector<128x128xbf16>
    %c0_9 = arith.constant 0 : index
    %c0_10 = arith.constant 0 : index
    %17 = vector.load %arg5[%c0_9, %c0_10] : memref<128x128xbf16, #tpu.memory_space<vmem>>, vector<128x128xbf16>
    tpu.vector_store %arg5[%c0_9, %c0_10], %16 {strides = array<i32>} : memref<128x128xbf16, #tpu.memory_space<vmem>>, vector<128x128xbf16>,
    %cst_11 = arith.constant dense<0.000000e+00> : vector<128xf32>
    %18 = vector.multi_reduction <add>, %15, %cst_11 [0] : vector<128x128xf32> to vector<128xf32>
    %19 = vector.shape_cast %18 : vector<128xf32> to vector<1x128xf32>
    %20 = vector.shape_cast %19 : vector<1x128xf32> to vector<1x128xf32>
    %21 = vector.broadcast %20 : vector<1x128xf32> to vector<8x128xf32>
    %c0_12 = arith.constant 0 : index
    %c0_13 = arith.constant 0 : index
    %22 = vector.load %arg6[%c0_12, %c0_13] : memref<8x128xf32, #tpu.memory_space<vmem>>, vector<8x128xf32>
    tpu.vector_store %arg6[%c0_12, %c0_13], %21 {strides = array<i32>} : memref<8x128xf32, #tpu.memory_space<vmem>>, vector<8x128xf32>,
    %23 = arith.mulf %15, %15 : vector<128x128xf32>
    %cst_14 = arith.constant dense<0.000000e+00> : vector<128xf32>
    %24 = vector.multi_reduction <add>, %23, %cst_14 [0] : vector<128x128xf32> to vector<128xf32>
    %25 = vector.shape_cast %24 : vector<128xf32> to vector<1x128xf32>
    %26 = vector.shape_cast %25 : vector<1x128xf32> to vector<1x128xf32>
    %27 = vector.broadcast %26 : vector<1x128xf32> to vector<8x128xf32>
    %c0_15 = arith.constant 0 : index
    %c0_16 = arith.constant 0 : index
    %28 = vector.load %arg7[%c0_15, %c0_16] : memref<8x128xf32, #tpu.memory_space<vmem>>, vector<8x128xf32>
    tpu.vector_store %arg7[%c0_15, %c0_16], %27 {strides = array<i32>} : memref<8x128xf32, #tpu.memory_space<vmem>>, vector<8x128xf32>,
    return
  }
  func.func @transform_0(%arg0: i32) -> (i32, i32) {
    %c0_i32 = arith.constant 0 : i32
    %c0_i32_0 = arith.constant 0 : i32
    return %arg0, %c0_i32 : i32, i32
  }
  func.func @transform_1(%arg0: i32) -> (i32, i32) {
    %c0_i32 = arith.constant 0 : i32
    %c0_i32_0 = arith.constant 0 : i32
    %c0_i32_1 = arith.constant 0 : i32
    return %c0_i32, %c0_i32_0 : i32, i32
  }
  func.func @transform_2(%arg0: i32) -> (i32, i32) {
    %c0_i32 = arith.constant 0 : i32
    %c0_i32_0 = arith.constant 0 : i32
    %c0_i32_1 = arith.constant 0 : i32
    return %c0_i32, %c0_i32_0 : i32, i32
  }
  func.func @transform_3(%arg0: i32) -> (i32, i32) {
    %c0_i32 = arith.constant 0 : i32
    %c0_i32_0 = arith.constant 0 : i32
    %c0_i32_1 = arith.constant 0 : i32
    return %c0_i32, %c0_i32_0 : i32, i32
  }
  func.func @transform_4(%arg0: i32) -> (i32, i32) {
    %c0_i32 = arith.constant 0 : i32
    %c0_i32_0 = arith.constant 0 : i32
    return %arg0, %c0_i32 : i32, i32
  }
  func.func @transform_5(%arg0: i32) -> (i32, i32) {
    %c0_i32 = arith.constant 0 : i32
    %c0_i32_0 = arith.constant 0 : i32
    return %arg0, %c0_i32 : i32, i32
  }
  func.func @transform_6(%arg0: i32) -> (i32, i32) {
    %c0_i32 = arith.constant 0 : i32
    %c0_i32_0 = arith.constant 0 : i32
    return %arg0, %c0_i32 : i32, i32
  }
}

module attributes {stable_mosaic.version = 11 : i64} {
  func.func @_act_conv_stats_kernel(%arg0: i32, %arg1: memref<32x512xbf16, #tpu.memory_space<vmem>>, %arg2: memref<1x512xf32, #tpu.memory_space<vmem>>, %arg3: memref<1x512xf32, #tpu.memory_space<vmem>>, %arg4: memref<512x128xbf16, #tpu.memory_space<vmem>>, %arg5: memref<32x128xbf16, #tpu.memory_space<vmem>>, %arg6: memref<8x128xf32, #tpu.memory_space<vmem>>, %arg7: memref<8x128xf32, #tpu.memory_space<vmem>>) attributes {dimension_semantics = [#tpu.dimension_semantics<parallel>], iteration_bounds = array<i64: 1>, scalar_prefetch = 0 : i64, scratch_operands = 0 : i64, tpu.core_type = #tpu.core_type<tc>, window_params = [{transform_indices = @transform_0, window_bounds = array<i64: 32, 512>}, {pipeline_mode = #tpu.pipeline_mode<synchronous>, transform_indices = @transform_1, window_bounds = array<i64: 1, 512>}, {pipeline_mode = #tpu.pipeline_mode<synchronous>, transform_indices = @transform_2, window_bounds = array<i64: 1, 512>}, {pipeline_mode = #tpu.pipeline_mode<synchronous>, transform_indices = @transform_3, window_bounds = array<i64: 512, 128>}, {transform_indices = @transform_4, window_bounds = array<i64: 32, 128>}, {transform_indices = @transform_5, window_bounds = array<i64: 8, 128>}, {transform_indices = @transform_6, window_bounds = array<i64: 8, 128>}]} {
    %c0 = arith.constant 0 : index
    %c0_0 = arith.constant 0 : index
    %0 = vector.load %arg1[%c0, %c0_0] : memref<32x512xbf16, #tpu.memory_space<vmem>>, vector<32x512xbf16>
    %1 = arith.extf %0 : vector<32x512xbf16> to vector<32x512xf32>
    %c0_1 = arith.constant 0 : index
    %c0_2 = arith.constant 0 : index
    %2 = vector.load %arg2[%c0_1, %c0_2] : memref<1x512xf32, #tpu.memory_space<vmem>>, vector<1x512xf32>
    %3 = vector.broadcast %2 : vector<1x512xf32> to vector<32x512xf32>
    %4 = arith.mulf %1, %3 : vector<32x512xf32>
    %c0_3 = arith.constant 0 : index
    %c0_4 = arith.constant 0 : index
    %5 = vector.load %arg3[%c0_3, %c0_4] : memref<1x512xf32, #tpu.memory_space<vmem>>, vector<1x512xf32>
    %6 = vector.broadcast %5 : vector<1x512xf32> to vector<32x512xf32>
    %7 = arith.addf %4, %6 : vector<32x512xf32>
    %cst = arith.constant 0.000000e+00 : f32
    %8 = vector.broadcast %cst : f32 to vector<32x512xf32>
    %9 = arith.cmpf ogt, %7, %8 : vector<32x512xf32>
    %cst_5 = arith.constant 2.000000e-01 : f32
    %10 = vector.broadcast %cst_5 : f32 to vector<32x512xf32>
    %11 = arith.mulf %10, %7 : vector<32x512xf32>
    %12 = arith.select %9, %7, %11 : vector<32x512xi1>, vector<32x512xf32>
    %13 = arith.truncf %12 : vector<32x512xf32> to vector<32x512xbf16>
    %c0_6 = arith.constant 0 : index
    %c0_7 = arith.constant 0 : index
    %14 = vector.load %arg4[%c0_6, %c0_7] : memref<512x128xbf16, #tpu.memory_space<vmem>>, vector<512x128xbf16>
    %cst_8 = arith.constant dense<0.000000e+00> : vector<32x128xf32>
    %15 = tpu.matmul %13, %14, %cst_8 {dimension_numbers = #tpu.dot_dimension_numbers<[1], [0], [0], [1], [0, 0, 1, 1], [], []>} : vector<32x512xbf16>, vector<512x128xbf16>, vector<32x128xf32> -> vector<32x128xf32>
    %16 = arith.truncf %15 : vector<32x128xf32> to vector<32x128xbf16>
    %c0_9 = arith.constant 0 : index
    %c0_10 = arith.constant 0 : index
    %17 = vector.load %arg5[%c0_9, %c0_10] : memref<32x128xbf16, #tpu.memory_space<vmem>>, vector<32x128xbf16>
    tpu.vector_store %arg5[%c0_9, %c0_10], %16 {strides = array<i32>} : memref<32x128xbf16, #tpu.memory_space<vmem>>, vector<32x128xbf16>,
    %cst_11 = arith.constant dense<0.000000e+00> : vector<128xf32>
    %18 = vector.multi_reduction <add>, %15, %cst_11 [0] : vector<32x128xf32> to vector<128xf32>
    %19 = vector.shape_cast %18 : vector<128xf32> to vector<1x128xf32>
    %20 = vector.shape_cast %19 : vector<1x128xf32> to vector<1x128xf32>
    %21 = vector.broadcast %20 : vector<1x128xf32> to vector<8x128xf32>
    %c0_12 = arith.constant 0 : index
    %c0_13 = arith.constant 0 : index
    %22 = vector.load %arg6[%c0_12, %c0_13] : memref<8x128xf32, #tpu.memory_space<vmem>>, vector<8x128xf32>
    tpu.vector_store %arg6[%c0_12, %c0_13], %21 {strides = array<i32>} : memref<8x128xf32, #tpu.memory_space<vmem>>, vector<8x128xf32>,
    %23 = arith.mulf %15, %15 : vector<32x128xf32>
    %cst_14 = arith.constant dense<0.000000e+00> : vector<128xf32>
    %24 = vector.multi_reduction <add>, %23, %cst_14 [0] : vector<32x128xf32> to vector<128xf32>
    %25 = vector.shape_cast %24 : vector<128xf32> to vector<1x128xf32>
    %26 = vector.shape_cast %25 : vector<1x128xf32> to vector<1x128xf32>
    %27 = vector.broadcast %26 : vector<1x128xf32> to vector<8x128xf32>
    %c0_15 = arith.constant 0 : index
    %c0_16 = arith.constant 0 : index
    %28 = vector.load %arg7[%c0_15, %c0_16] : memref<8x128xf32, #tpu.memory_space<vmem>>, vector<8x128xf32>
    tpu.vector_store %arg7[%c0_15, %c0_16], %27 {strides = array<i32>} : memref<8x128xf32, #tpu.memory_space<vmem>>, vector<8x128xf32>,
    return
  }
  func.func @transform_0(%arg0: i32) -> (i32, i32) {
    %c0_i32 = arith.constant 0 : i32
    %c0_i32_0 = arith.constant 0 : i32
    return %arg0, %c0_i32 : i32, i32
  }
  func.func @transform_1(%arg0: i32) -> (i32, i32) {
    %c0_i32 = arith.constant 0 : i32
    %c0_i32_0 = arith.constant 0 : i32
    %c0_i32_1 = arith.constant 0 : i32
    return %c0_i32, %c0_i32_0 : i32, i32
  }
  func.func @transform_2(%arg0: i32) -> (i32, i32) {
    %c0_i32 = arith.constant 0 : i32
    %c0_i32_0 = arith.constant 0 : i32
    %c0_i32_1 = arith.constant 0 : i32
    return %c0_i32, %c0_i32_0 : i32, i32
  }
  func.func @transform_3(%arg0: i32) -> (i32, i32) {
    %c0_i32 = arith.constant 0 : i32
    %c0_i32_0 = arith.constant 0 : i32
    %c0_i32_1 = arith.constant 0 : i32
    return %c0_i32, %c0_i32_0 : i32, i32
  }
  func.func @transform_4(%arg0: i32) -> (i32, i32) {
    %c0_i32 = arith.constant 0 : i32
    %c0_i32_0 = arith.constant 0 : i32
    return %arg0, %c0_i32 : i32, i32
  }
  func.func @transform_5(%arg0: i32) -> (i32, i32) {
    %c0_i32 = arith.constant 0 : i32
    %c0_i32_0 = arith.constant 0 : i32
    return %arg0, %c0_i32 : i32, i32
  }
  func.func @transform_6(%arg0: i32) -> (i32, i32) {
    %c0_i32 = arith.constant 0 : i32
    %c0_i32_0 = arith.constant 0 : i32
    return %arg0, %c0_i32 : i32, i32
  }
}

module attributes {stable_mosaic.version = 11 : i64} {
  func.func @_head_kernel(%arg0: i32, %arg1: memref<32x128xbf16, #tpu.memory_space<vmem>>, %arg2: memref<1x128xf32, #tpu.memory_space<vmem>>, %arg3: memref<1x128xf32, #tpu.memory_space<vmem>>, %arg4: memref<16x128xf32, #tpu.memory_space<vmem>>, %arg5: memref<2x1xf32, #tpu.memory_space<vmem>>) attributes {dimension_semantics = [#tpu.dimension_semantics<parallel>], iteration_bounds = array<i64: 1>, scalar_prefetch = 0 : i64, scratch_operands = 0 : i64, tpu.core_type = #tpu.core_type<tc>, window_params = [{transform_indices = @transform_0, window_bounds = array<i64: 32, 128>}, {pipeline_mode = #tpu.pipeline_mode<synchronous>, transform_indices = @transform_1, window_bounds = array<i64: 1, 128>}, {pipeline_mode = #tpu.pipeline_mode<synchronous>, transform_indices = @transform_2, window_bounds = array<i64: 1, 128>}, {pipeline_mode = #tpu.pipeline_mode<synchronous>, transform_indices = @transform_3, window_bounds = array<i64: 16, 128>}, {transform_indices = @transform_4, window_bounds = array<i64: 2, 1>}]} {
    %c0 = arith.constant 0 : index
    %c0_0 = arith.constant 0 : index
    %0 = vector.load %arg1[%c0, %c0_0] : memref<32x128xbf16, #tpu.memory_space<vmem>>, vector<32x128xbf16>
    %1 = arith.extf %0 : vector<32x128xbf16> to vector<32x128xf32>
    %c0_1 = arith.constant 0 : index
    %c0_2 = arith.constant 0 : index
    %2 = vector.load %arg2[%c0_1, %c0_2] : memref<1x128xf32, #tpu.memory_space<vmem>>, vector<1x128xf32>
    %3 = vector.broadcast %2 : vector<1x128xf32> to vector<32x128xf32>
    %4 = arith.mulf %1, %3 : vector<32x128xf32>
    %c0_3 = arith.constant 0 : index
    %c0_4 = arith.constant 0 : index
    %5 = vector.load %arg3[%c0_3, %c0_4] : memref<1x128xf32, #tpu.memory_space<vmem>>, vector<1x128xf32>
    %6 = vector.broadcast %5 : vector<1x128xf32> to vector<32x128xf32>
    %7 = arith.addf %4, %6 : vector<32x128xf32>
    %cst = arith.constant 0.000000e+00 : f32
    %8 = vector.broadcast %cst : f32 to vector<32x128xf32>
    %9 = arith.cmpf ogt, %7, %8 : vector<32x128xf32>
    %cst_5 = arith.constant 2.000000e-01 : f32
    %10 = vector.broadcast %cst_5 : f32 to vector<32x128xf32>
    %11 = arith.mulf %10, %7 : vector<32x128xf32>
    %12 = arith.select %9, %7, %11 : vector<32x128xi1>, vector<32x128xf32>
    %13 = vector.shape_cast %12 : vector<32x128xf32> to vector<2x16x128xf32>
    %c0_6 = arith.constant 0 : index
    %c0_7 = arith.constant 0 : index
    %14 = vector.load %arg4[%c0_6, %c0_7] : memref<16x128xf32, #tpu.memory_space<vmem>>, vector<16x128xf32>
    %15 = vector.shape_cast %14 : vector<16x128xf32> to vector<1x16x128xf32>
    %16 = vector.broadcast %15 : vector<1x16x128xf32> to vector<2x16x128xf32>
    %17 = arith.mulf %13, %16 : vector<2x16x128xf32>
    %cst_8 = arith.constant dense<0.000000e+00> : vector<2x128xf32>
    %18 = vector.multi_reduction <add>, %17, %cst_8 [1] : vector<2x16x128xf32> to vector<2x128xf32>
    %cst_9 = arith.constant dense<0.000000e+00> : vector<2xf32>
    %19 = vector.multi_reduction <add>, %18, %cst_9 [1] : vector<2x128xf32> to vector<2xf32>
    %20 = vector.shape_cast %19 : vector<2xf32> to vector<2x1xf32>
    %21 = math.absf %20 : vector<2x1xf32>
    %cst_10 = arith.constant 0.000000e+00 : f32
    %22 = vector.broadcast %cst_10 : f32 to vector<2x1xf32>
    %23 = arith.subf %22, %21 : vector<2x1xf32>
    %24 = math.exp %23 : vector<2x1xf32>
    %cst_11 = arith.constant 0.000000e+00 : f32
    %25 = vector.broadcast %cst_11 : f32 to vector<2x1xf32>
    %26 = arith.cmpf oge, %20, %25 : vector<2x1xf32>
    %cst_12 = arith.constant 1.000000e+00 : f32
    %27 = vector.broadcast %cst_12 : f32 to vector<2x1xf32>
    %28 = arith.addf %27, %24 : vector<2x1xf32>
    %cst_13 = arith.constant 1.000000e+00 : f32
    %29 = vector.broadcast %cst_13 : f32 to vector<2x1xf32>
    %30 = arith.divf %29, %28 : vector<2x1xf32>
    %cst_14 = arith.constant 1.000000e+00 : f32
    %31 = vector.broadcast %cst_14 : f32 to vector<2x1xf32>
    %32 = arith.addf %31, %24 : vector<2x1xf32>
    %33 = arith.divf %24, %32 : vector<2x1xf32>
    %34 = arith.select %26, %30, %33 : vector<2x1xi1>, vector<2x1xf32>
    %c0_15 = arith.constant 0 : index
    %c0_16 = arith.constant 0 : index
    %35 = vector.load %arg5[%c0_15, %c0_16] : memref<2x1xf32, #tpu.memory_space<vmem>>, vector<2x1xf32>
    tpu.vector_store %arg5[%c0_15, %c0_16], %34 {strides = array<i32>} : memref<2x1xf32, #tpu.memory_space<vmem>>, vector<2x1xf32>,
    return
  }
  func.func @transform_0(%arg0: i32) -> (i32, i32) {
    %c0_i32 = arith.constant 0 : i32
    %c0_i32_0 = arith.constant 0 : i32
    return %arg0, %c0_i32 : i32, i32
  }
  func.func @transform_1(%arg0: i32) -> (i32, i32) {
    %c0_i32 = arith.constant 0 : i32
    %c0_i32_0 = arith.constant 0 : i32
    %c0_i32_1 = arith.constant 0 : i32
    return %c0_i32, %c0_i32_0 : i32, i32
  }
  func.func @transform_2(%arg0: i32) -> (i32, i32) {
    %c0_i32 = arith.constant 0 : i32
    %c0_i32_0 = arith.constant 0 : i32
    %c0_i32_1 = arith.constant 0 : i32
    return %c0_i32, %c0_i32_0 : i32, i32
  }
  func.func @transform_3(%arg0: i32) -> (i32, i32) {
    %c0_i32 = arith.constant 0 : i32
    %c0_i32_0 = arith.constant 0 : i32
    %c0_i32_1 = arith.constant 0 : i32
    return %c0_i32, %c0_i32_0 : i32, i32
  }
  func.func @transform_4(%arg0: i32) -> (i32, i32) {
    %c0_i32 = arith.constant 0 : i32
    %c0_i32_0 = arith.constant 0 : i32
    return %arg0, %c0_i32 : i32, i32
  }
}

</mosaic_0001>

<llo_original>
// kernel: discriminator_stage_1.5
$region0: #{discriminator_stage_1.5}
  #allocation0 [shape = 'u32[]', space=smem, size = 0x4, offset = 0x4, fixed_abs, tag = 'smem constant byte address 0x4 - core index']
  #allocation1 [shape = 'u32[144,128]{1,0:T(1,128)}', space=vmem, size = 0x12000, scoped, tag = 'internal scratch']
  %s0 = inlined_call_operand.vmem [shape: bf16[2048,48], index: 0, kind: input, shape index: {}]
  %s1 = inlined_call_operand.vmem [shape: bf16[48,128], index: 1, kind: input, shape index: {}]
  %s2 = inlined_call_operand.vmem [shape: bf16[2048,128], index: 2, kind: output, shape index: {}]
  %s3 = sld [smem:[#allocation0]]
  $region41: #{discriminator_stage_1.5} parent=0
    _
  %s5 = ssub.s32 1, %s3
  %s6 = scalar_select 0, %s5, %s3
  loop: start=0, step=1, limit=4
  $region2: #{discriminator_stage_1.5} parent=0 // loop_pre_header
    _
  $region3: #{discriminator_stage_1.5} parent=0 // loop_header
    %s8 = sphi 0, %s12
    %p9 = scmp.ge.s32.totalorder %s8, 4
    %s18 = sphi 0, %s20
    %s21 = sphi 0, %s18
    %s22 = sphi 0, %s21
    %s38 = sphi 0, %s22
    %s42 = sphi 0, %s42
    %s44 = sphi 0, %s42
    %s45 = sphi 0, %s44
    %s59 = sphi 0, %s45
    %s65 = sphi 0, %s67
    %s68 = sphi 0, %s65
    %s69 = sphi 0, %s68
    %s85 = sphi 0, %s69
  $region4: #{discriminator_stage_1.5} parent=0 // loop_header_branch
    %11 = sbr.rel (%p9) target = $region8
  $region5: #{discriminator_stage_1.5} parent=0 // loop_body
    %s13 = ssub.s32 %s8, 1
    %s14 = ssub.s32 %s8, 2
    %s15 = sadd.s32 %s8, 1
    %s16 = ssub.s32 %s8, %s15
    %p17 = scmp.eq.s32.totalorder %s16, 0
    %s19 = sadd.s32 %s18, 1
    %s20 = scalar_select %p17, %s18, %s19
    %p23 = pneg %p17
    %p24 = scmp.eq.s32.totalorder %s8, 1
    %p25 = por %p23, %p24
    %p26 = scmp.ne.s32.totalorder %s18, %s21
    %p27 = scmp.eq.s32.totalorder %s8, 0
    %p28 = por %p26, %p27
    %p29 = scmp.ne.s32.totalorder %s18, %s21
    %p30 = scmp.eq.s32.totalorder %s13, 1
    %p31 = por %p29, %p30
    %p32 = scmp.ne.s32.totalorder %s21, %s22
    %p33 = scmp.eq.s32.totalorder %s13, 0
    %p34 = por %p32, %p33
    %p35 = scmp.ne.s32.totalorder %s21, %s22
    %p36 = scmp.eq.s32.totalorder %s14, 1
    %p37 = por %p35, %p36
    %p39 = scmp.ne.s32.totalorder %s22, %s38
    %p40 = scmp.eq.s32.totalorder %s14, 0
    %p41 = por %p39, %p40
    %s43 = sadd.s32 %s42, 1
    %p46 = scmp.eq.s32.totalorder %s8, 1
    %p47 = scmp.ne.s32.totalorder %s42, %s44
    %p48 = scmp.eq.s32.totalorder %s8, 0
    %p49 = por %p47, %p48
    %p50 = scmp.ne.s32.totalorder %s42, %s44
    %p51 = scmp.eq.s32.totalorder %s13, 1
    %p52 = por %p50, %p51
    %p53 = scmp.ne.s32.totalorder %s44, %s45
    %p54 = scmp.eq.s32.totalorder %s13, 0
    %p55 = por %p53, %p54
    %p56 = scmp.ne.s32.totalorder %s44, %s45
    %p57 = scmp.eq.s32.totalorder %s14, 1
    %p58 = por %p56, %p57
    %p60 = scmp.ne.s32.totalorder %s45, %s59
    %p61 = scmp.eq.s32.totalorder %s14, 0
    %p62 = por %p60, %p61
    %s63 = ssub.s32 %s8, %s15
    %p64 = scmp.eq.s32.totalorder %s63, 0
    %s66 = sadd.s32 %s65, 1
    %s67 = scalar_select %p64, %s65, %s66
    %p70 = pneg %p64
    %p71 = scmp.eq.s32.totalorder %s8, 1
    %p72 = por %p70, %p71
    %p73 = scmp.ne.s32.totalorder %s65, %s68
    %p74 = scmp.eq.s32.totalorder %s8, 0
    %p75 = por %p73, %p74
    %p76 = scmp.ne.s32.totalorder %s65, %s68
    %p77 = scmp.eq.s32.totalorder %s13, 1
    %p78 = por %p76, %p77
    %p79 = scmp.ne.s32.totalorder %s68, %s69
    %p80 = scmp.eq.s32.totalorder %s13, 0
    %p81 = por %p79, %p80
    %p82 = scmp.ne.s32.totalorder %s68, %s69
    %p83 = scmp.eq.s32.totalorder %s14, 1
    %p84 = por %p82, %p83
    %p86 = scmp.ne.s32.totalorder %s69, %s85
    %p87 = scmp.eq.s32.totalorder %s14, 0
    %p88 = por %p86, %p87
    %p89 = scmp.le.s32.totalorder 1, %s8
    %p90 = scmp.lt.s32.totalorder %s8, 3
    %p91 = pnand %p89, %p90
    %p92 = pneg %p91
    // Predicated region
    $region9: #{discriminator_stage_1.5} parent=5 // pred_check
      _
    $region10: #{discriminator_stage_1.5} parent=5 // pred_check_branch
      %94 = sbr.rel (%p91) target = $region12
    $region11: #{discriminator_stage_1.5} parent=5 // pred_region
      %s95 = ssub.s32 %s8, 1
      // Predicated region
      $region13: #{discriminator_stage_1.5} parent=11 // pred_check
        %p96 = pneg %p55
      $region14: #{discriminator_stage_1.5} parent=11 // pred_check_branch
        %98 = sbr.rel (%p96) target = $region16
      $region15: #{discriminator_stage_1.5} parent=11 // pred_region
        _
      $region16: #{discriminator_stage_1.5} parent=11 // pred_fallthru
        _
    $region12: #{discriminator_stage_1.5} parent=5 // pred_fallthru
      _
    %p99 = scmp.lt.s32.totalorder %s8, 2
    // Predicated region
    $region17: #{discriminator_stage_1.5} parent=5 // pred_check
      %p100 = pneg %p99
    $region18: #{discriminator_stage_1.5} parent=5 // pred_check_branch
      %102 = sbr.rel (%p100) target = $region20
    $region19: #{discriminator_stage_1.5} parent=5 // pred_region
      // Predicated region
      $region21: #{discriminator_stage_1.5} parent=19 // pred_check
        %p103 = pneg %p28
      $region22: #{discriminator_stage_1.5} parent=19 // pred_check_branch
        %105 = sbr.rel (%p103) target = $region24
      $region23: #{discriminator_stage_1.5} parent=19 // pred_region
        %s106 = smul.u32 128, %s8
        %p107 = scmp.lt.s32.totalorder %s106, 255
        %s108 = scalar_select %p107, %s106, 255
        %s109 = smul.addr %s108, 4
        %s110 = scalar_lea.vmem %s0, %s109
        %s111 = smul.u32 128, %s8
      $region24: #{discriminator_stage_1.5} parent=19 // pred_fallthru
        _
    $region20: #{discriminator_stage_1.5} parent=5 // pred_fallthru
      _
    %p112 = scmp.le.s32.totalorder 1, %s8
    %p113 = scmp.lt.s32.totalorder %s8, 3
    %p114 = pnand %p112, %p113
    %p115 = pneg %p114
    // Predicated region
    $region25: #{discriminator_stage_1.5} parent=5 // pred_check
      _
    $region26: #{discriminator_stage_1.5} parent=5 // pred_check_branch
      %117 = sbr.rel (%p114) target = $region28
    $region27: #{discriminator_stage_1.5} parent=5 // pred_region
      %s118 = ssub.s32 %s8, 1
      %s119 = smul.u32 128, %s13
      %p120 = scmp.lt.s32.totalorder %s119, 255
      %s121 = scalar_select %p120, %s119, 255
      %s122 = smul.addr %s121, 4
      %s123 = scalar_lea.vmem %s0, %s122
      %p124 = pneg %p34
      %p125 = pneg %p31
      %p126 = pneg %p55
      %p127 = pneg %p52
      %p128 = pneg %p81
      %p129 = pneg %p78
      %s130 = smul.u32 128, %s13
      %p131 = scmp.lt.s32.totalorder %s130, 255
      %s132 = scalar_select %p131, %s130, 255
      %s133 = smul.addr %s132, 4
      %s134 = scalar_lea.vmem %s2, %s133
      %s135 = smul.u32 128, %s13
      %p136 = scmp.lt.s32.totalorder %s135, 255
      %s137 = scalar_select %p136, %s135, 255
      %s138 = smul.addr %s137, 4
      %s139 = scalar_lea.vmem %s0, %s138
      %s140 = smul.u32 128, %s13
      %s141 = smul.u32 128, %s13
      %p142 = scmp.lt.s32.totalorder %s141, 255
      %s143 = scalar_select %p142, %s141, 255
      %s144 = smul.addr %s143, 4
      %s145 = scalar_lea.vmem %s2, %s144
      %s146 = smul.u32 128, %s13
      %v148 = vld [vmem:[%s139] sm:$0xf]
      %v149 = vld [vmem:[%s139 + $0x4] sm:$0xf]
      %v150 = vld [vmem:[%s139 + $0x8] sm:$0xf]
      %v151 = vld [vmem:[%s139 + $0xc] sm:$0xf]
      %v152 = vld [vmem:[%s139 + $0x10] sm:$0xf]
      %v153 = vld [vmem:[%s139 + $0x14] sm:$0xf]
      %v154 = vld [vmem:[%s139 + $0x18] sm:$0xf]
      %v155 = vld [vmem:[%s139 + $0x1c] sm:$0xf]
      %v156 = vld [vmem:[%s139 + $0x20] sm:$0xf]
      %v157 = vld [vmem:[%s139 + $0x24] sm:$0xf]
      %v158 = vld [vmem:[%s139 + $0x28] sm:$0xf]
      %v159 = vld [vmem:[%s139 + $0x2c] sm:$0xf]
      %v160 = vld [vmem:[%s139 + $0x30] sm:$0xf]
      %v161 = vld [vmem:[%s139 + $0x34] sm:$0xf]
      %v162 = vld [vmem:[%s139 + $0x38] sm:$0xf]
      %v163 = vld [vmem:[%s139 + $0x3c] sm:$0xf]
      %v164 = vld [vmem:[%s139 + $0x40] sm:$0xf]
      %v165 = vld [vmem:[%s139 + $0x44] sm:$0xf]
      %v166 = vld [vmem:[%s139 + $0x48] sm:$0xf]
      %v167 = vld [vmem:[%s139 + $0x4c] sm:$0xf]
      %v168 = vld [vmem:[%s139 + $0x50] sm:$0xf]
      %v169 = vld [vmem:[%s139 + $0x54] sm:$0xf]
      %v170 = vld [vmem:[%s139 + $0x58] sm:$0xf]
      %v171 = vld [vmem:[%s139 + $0x5c] sm:$0xf]
      %v172 = vld [vmem:[%s139 + $0x60] sm:$0xf]
      %v173 = vld [vmem:[%s139 + $0x64] sm:$0xf]
      %v174 = vld [vmem:[%s139 + $0x68] sm:$0xf]
      %v175 = vld [vmem:[%s139 + $0x6c] sm:$0xf]
      %v176 = vld [vmem:[%s139 + $0x70] sm:$0xf]
      %v177 = vld [vmem:[%s139 + $0x74] sm:$0xf]
      %v178 = vld [vmem:[%s139 + $0x78] sm:$0xf]
      %v179 = vld [vmem:[%s139 + $0x7c] sm:$0xf]
      %v180 = vld [vmem:[%s139 + $0x80] sm:$0xf]
      %v181 = vld [vmem:[%s139 + $0x84] sm:$0xf]
      %v182 = vld [vmem:[%s139 + $0x88] sm:$0xf]
      %v183 = vld [vmem:[%s139 + $0x8c] sm:$0xf]
      %v184 = vld [vmem:[%s139 + $0x90] sm:$0xf]
      %v185 = vld [vmem:[%s139 + $0x94] sm:$0xf]
      %v186 = vld [vmem:[%s139 + $0x98] sm:$0xf]
      %v187 = vld [vmem:[%s139 + $0x9c] sm:$0xf]
      %v188 = vld [vmem:[%s139 + $0xa0] sm:$0xf]
      %v189 = vld [vmem:[%s139 + $0xa4] sm:$0xf]
      %v190 = vld [vmem:[%s139 + $0xa8] sm:$0xf]
      %v191 = vld [vmem:[%s139 + $0xac] sm:$0xf]
      %v192 = vld [vmem:[%s139 + $0xb0] sm:$0xf]
      %v193 = vld [vmem:[%s139 + $0xb4] sm:$0xf]
      %v194 = vld [vmem:[%s139 + $0xb8] sm:$0xf]
      %v195 = vld [vmem:[%s139 + $0xbc] sm:$0xf]
      %v196 = vld [vmem:[%s139 + $0xc0] sm:$0xf]
      %v197 = vld [vmem:[%s139 + $0xc4] sm:$0xf]
      %v198 = vld [vmem:[%s139 + $0xc8] sm:$0xf]
      %v199 = vld [vmem:[%s139 + $0xcc] sm:$0xf]
      %v200 = vld [vmem:[%s139 + $0xd0] sm:$0xf]
      %v201 = vld [vmem:[%s139 + $0xd4] sm:$0xf]
      %v202 = vld [vmem:[%s139 + $0xd8] sm:$0xf]
      %v203 = vld [vmem:[%s139 + $0xdc] sm:$0xf]
      %v204 = vld [vmem:[%s139 + $0xe0] sm:$0xf]
      %v205 = vld [vmem:[%s139 + $0xe4] sm:$0xf]
      %v206 = vld [vmem:[%s139 + $0xe8] sm:$0xf]
      %v207 = vld [vmem:[%s139 + $0xec] sm:$0xf]
      %v208 = vld [vmem:[%s139 + $0xf0] sm:$0xf]
      %v209 = vld [vmem:[%s139 + $0xf4] sm:$0xf]
      %v210 = vld [vmem:[%s139 + $0xf8] sm:$0xf]
      %v211 = vld [vmem:[%s139 + $0xfc] sm:$0xf]
      %v212 = vld [vmem:[%s139 + $0x100] sm:$0xf]
      %v213 = vld [vmem:[%s139 + $0x104] sm:$0xf]
      %v214 = vld [vmem:[%s139 + $0x108] sm:$0xf]
      %v215 = vld [vmem:[%s139 + $0x10c] sm:$0xf]
      %v216 = vld [vmem:[%s139 + $0x110] sm:$0xf]
      %v217 = vld [vmem:[%s139 + $0x114] sm:$0xf]
      %v218 = vld [vmem:[%s139 + $0x118] sm:$0xf]
      %v219 = vld [vmem:[%s139 + $0x11c] sm:$0xf]
      %v220 = vld [vmem:[%s139 + $0x120] sm:$0xf]
      %v221 = vld [vmem:[%s139 + $0x124] sm:$0xf]
      %v222 = vld [vmem:[%s139 + $0x128] sm:$0xf]
      %v223 = vld [vmem:[%s139 + $0x12c] sm:$0xf]
      %v224 = vld [vmem:[%s139 + $0x130] sm:$0xf]
      %v225 = vld [vmem:[%s139 + $0x134] sm:$0xf]
      %v226 = vld [vmem:[%s139 + $0x138] sm:$0xf]
      %v227 = vld [vmem:[%s139 + $0x13c] sm:$0xf]
      %v228 = vld [vmem:[%s139 + $0x140] sm:$0xf]
      %v229 = vld [vmem:[%s139 + $0x144] sm:$0xf]
      %v230 = vld [vmem:[%s139 + $0x148] sm:$0xf]
      %v231 = vld [vmem:[%s139 + $0x14c] sm:$0xf]
      %v232 = vld [vmem:[%s139 + $0x150] sm:$0xf]
      %v233 = vld [vmem:[%s139 + $0x154] sm:$0xf]
      %v234 = vld [vmem:[%s139 + $0x158] sm:$0xf]
      %v235 = vld [vmem:[%s139 + $0x15c] sm:$0xf]
      %v236 = vld [vmem:[%s139 + $0x160] sm:$0xf]
      %v237 = vld [vmem:[%s139 + $0x164] sm:$0xf]
      %v238 = vld [vmem:[%s139 + $0x168] sm:$0xf]
      %v239 = vld [vmem:[%s139 + $0x16c] sm:$0xf]
      %v240 = vld [vmem:[%s139 + $0x170] sm:$0xf]
      %v241 = vld [vmem:[%s139 + $0x174] sm:$0xf]
      %v242 = vld [vmem:[%s139 + $0x178] sm:$0xf]
      %v243 = vld [vmem:[%s139 + $0x17c] sm:$0xf]
      %v244 = vld [vmem:[%s139 + $0x180] sm:$0xf]
      %v245 = vld [vmem:[%s139 + $0x184] sm:$0xf]
      %v246 = vld [vmem:[%s139 + $0x188] sm:$0xf]
      %v247 = vld [vmem:[%s139 + $0x18c] sm:$0xf]
      %v248 = vld [vmem:[%s139 + $0x190] sm:$0xf]
      %v249 = vld [vmem:[%s139 + $0x194] sm:$0xf]
      %v250 = vld [vmem:[%s139 + $0x198] sm:$0xf]
      %v251 = vld [vmem:[%s139 + $0x19c] sm:$0xf]
      %v252 = vld [vmem:[%s139 + $0x1a0] sm:$0xf]
      %v253 = vld [vmem:[%s139 + $0x1a4] sm:$0xf]
      %v254 = vld [vmem:[%s139 + $0x1a8] sm:$0xf]
      %v255 = vld [vmem:[%s139 + $0x1ac] sm:$0xf]
      %v256 = vld [vmem:[%s139 + $0x1b0] sm:$0xf]
      %v257 = vld [vmem:[%s139 + $0x1b4] sm:$0xf]
      %v258 = vld [vmem:[%s139 + $0x1b8] sm:$0xf]
      %v259 = vld [vmem:[%s139 + $0x1bc] sm:$0xf]
      %v260 = vld [vmem:[%s139 + $0x1c0] sm:$0xf]
      %v261 = vld [vmem:[%s139 + $0x1c4] sm:$0xf]
      %v262 = vld [vmem:[%s139 + $0x1c8] sm:$0xf]
      %v263 = vld [vmem:[%s139 + $0x1cc] sm:$0xf]
      %v264 = vld [vmem:[%s139 + $0x1d0] sm:$0xf]
      %v265 = vld [vmem:[%s139 + $0x1d4] sm:$0xf]
      %v266 = vld [vmem:[%s139 + $0x1d8] sm:$0xf]
      %v267 = vld [vmem:[%s139 + $0x1dc] sm:$0xf]
      %v268 = vld [vmem:[%s139 + $0x1e0] sm:$0xf]
      %v269 = vld [vmem:[%s139 + $0x1e4] sm:$0xf]
      %v270 = vld [vmem:[%s139 + $0x1e8] sm:$0xf]
      %v271 = vld [vmem:[%s139 + $0x1ec] sm:$0xf]
      %v272 = vld [vmem:[%s139 + $0x1f0] sm:$0xf]
      %v273 = vld [vmem:[%s139 + $0x1f4] sm:$0xf]
      %v274 = vld [vmem:[%s139 + $0x1f8] sm:$0xf]
      %v275 = vld [vmem:[%s139 + $0x1fc] sm:$0xf]
      %v276 = vld [vmem:[%s1] sm:$0xf]
      %v277 = vld [vmem:[%s1 + $0x4] sm:$0xf]
      %v278 = vld [vmem:[%s1 + $0x8] sm:$0xf]
      %v279 = vld [vmem:[%s1 + $0xc] sm:$0xf]
      %v280 = vld [vmem:[%s1 + $0x10] sm:$0xf]
      %v281 = vld [vmem:[%s1 + $0x14] sm:$0xf]
      %v410 = vunpack.c.l.b16 %v148
      %v411 = vunpack.c.l.b16 %v149
      %v412 = vunpack.c.l.b16 %v150
      %v413 = vunpack.c.l.b16 %v151
      %v414 = vunpack.c.l.b16 %v152
      %v415 = vunpack.c.l.b16 %v153
      %v416 = vunpack.c.l.b16 %v154
      %v417 = vunpack.c.l.b16 %v155
      %v418 = vunpack.c.l.b16 %v156
      %v419 = vunpack.c.l.b16 %v157
      %v420 = vunpack.c.l.b16 %v158
      %v421 = vunpack.c.l.b16 %v159
      %v422 = vunpack.c.l.b16 %v160
      %v423 = vunpack.c.l.b16 %v161
      %v424 = vunpack.c.l.b16 %v162
      %v425 = vunpack.c.l.b16 %v163
      %v426 = vunpack.c.l.b16 %v164
      %v427 = vunpack.c.l.b16 %v165
      %v428 = vunpack.c.l.b16 %v166
      %v429 = vunpack.c.l.b16 %v167
      %v430 = vunpack.c.l.b16 %v168
      %v431 = vunpack.c.l.b16 %v169
      %v432 = vunpack.c.l.b16 %v170
      %v433 = vunpack.c.l.b16 %v171
      %v434 = vunpack.c.l.b16 %v172
      %v435 = vunpack.c.l.b16 %v173
      %v436 = vunpack.c.l.b16 %v174
      %v437 = vunpack.c.l.b16 %v175
      %v438 = vunpack.c.l.b16 %v176
      %v439 = vunpack.c.l.b16 %v177
      %v440 = vunpack.c.l.b16 %v178
      %v441 = vunpack.c.l.b16 %v179
      %v442 = vunpack.c.l.b16 %v180
      %v443 = vunpack.c.l.b16 %v181
      %v444 = vunpack.c.l.b16 %v182
      %v445 = vunpack.c.l.b16 %v183
      %v446 = vunpack.c.l.b16 %v184
      %v447 = vunpack.c.l.b16 %v185
      %v448 = vunpack.c.l.b16 %v186
      %v449 = vunpack.c.l.b16 %v187
      %v450 = vunpack.c.l.b16 %v188
      %v451 = vunpack.c.l.b16 %v189
      %v452 = vunpack.c.l.b16 %v190
      %v453 = vunpack.c.l.b16 %v191
      %v454 = vunpack.c.l.b16 %v192
      %v455 = vunpack.c.l.b16 %v193
      %v456 = vunpack.c.l.b16 %v194
      %v457 = vunpack.c.l.b16 %v195
      %v458 = vunpack.c.l.b16 %v196
      %v459 = vunpack.c.l.b16 %v197
      %v460 = vunpack.c.l.b16 %v198
      %v461 = vunpack.c.l.b16 %v199
      %v462 = vunpack.c.l.b16 %v200
      %v463 = vunpack.c.l.b16 %v201
      %v464 = vunpack.c.l.b16 %v202
      %v465 = vunpack.c.l.b16 %v203
      %v466 = vunpack.c.l.b16 %v204
      %v467 = vunpack.c.l.b16 %v205
      %v468 = vunpack.c.l.b16 %v206
      %v469 = vunpack.c.l.b16 %v207
      %v470 = vunpack.c.l.b16 %v208
      %v471 = vunpack.c.l.b16 %v209
      %v472 = vunpack.c.l.b16 %v210
      %v473 = vunpack.c.l.b16 %v211
      %v474 = vunpack.c.l.b16 %v212
      %v475 = vunpack.c.l.b16 %v213
      %v476 = vunpack.c.l.b16 %v214
      %v477 = vunpack.c.l.b16 %v215
      %v478 = vunpack.c.l.b16 %v216
      %v479 = vunpack.c.l.b16 %v217
      %v480 = vunpack.c.l.b16 %v218
      %v481 = vunpack.c.l.b16 %v219
      %v482 = vunpack.c.l.b16 %v220
      %v483 = vunpack.c.l.b16 %v221
      %v484 = vunpack.c.l.b16 %v222
      %v485 = vunpack.c.l.b16 %v223
      %v486 = vunpack.c.l.b16 %v224
      %v487 = vunpack.c.l.b16 %v225
      %v488 = vunpack.c.l.b16 %v226
      %v489 = vunpack.c.l.b16 %v227
      %v490 = vunpack.c.l.b16 %v228
      %v491 = vunpack.c.l.b16 %v229
      %v492 = vunpack.c.l.b16 %v230
      %v493 = vunpack.c.l.b16 %v231
      %v494 = vunpack.c.l.b16 %v232
      %v495 = vunpack.c.l.b16 %v233
      %v496 = vunpack.c.l.b16 %v234
      %v497 = vunpack.c.l.b16 %v235
      %v498 = vunpack.c.l.b16 %v236
      %v499 = vunpack.c.l.b16 %v237
      %v500 = vunpack.c.l.b16 %v238
      %v501 = vunpack.c.l.b16 %v239
      %v502 = vunpack.c.l.b16 %v240
      %v503 = vunpack.c.l.b16 %v241
      %v504 = vunpack.c.l.b16 %v242
      %v505 = vunpack.c.l.b16 %v243
      %v506 = vunpack.c.l.b16 %v244
      %v507 = vunpack.c.l.b16 %v245
      %v508 = vunpack.c.l.b16 %v246
      %v509 = vunpack.c.l.b16 %v247
      %v510 = vunpack.c.l.b16 %v248
      %v511 = vunpack.c.l.b16 %v249
      %v512 = vunpack.c.l.b16 %v250
      %v513 = vunpack.c.l.b16 %v251
      %v514 = vunpack.c.l.b16 %v252
      %v515 = vunpack.c.l.b16 %v253
      %v516 = vunpack.c.l.b16 %v254
      %v517 = vunpack.c.l.b16 %v255
      %v518 = vunpack.c.l.b16 %v256
      %v519 = vunpack.c.l.b16 %v257
      %v520 = vunpack.c.l.b16 %v258
      %v521 = vunpack.c.l.b16 %v259
      %v522 = vunpack.c.l.b16 %v260
      %v523 = vunpack.c.l.b16 %v261
      %v524 = vunpack.c.l.b16 %v262
      %v525 = vunpack.c.l.b16 %v263
      %v526 = vunpack.c.l.b16 %v264
      %v527 = vunpack.c.l.b16 %v265
      %v528 = vunpack.c.l.b16 %v266
      %v529 = vunpack.c.l.b16 %v267
      %v530 = vunpack.c.l.b16 %v268
      %v531 = vunpack.c.l.b16 %v269
      %v532 = vunpack.c.l.b16 %v270
      %v533 = vunpack.c.l.b16 %v271
      %v534 = vunpack.c.l.b16 %v272
      %v535 = vunpack.c.l.b16 %v273
      %v536 = vunpack.c.l.b16 %v274
      %v537 = vunpack.c.l.b16 %v275
      %v538 = vpack.c.b16 %v411, %v410
      %v539 = vpack.c.b16 %v413, %v412
      %v540 = vpack.c.b16 %v415, %v414
      %v541 = vpack.c.b16 %v417, %v416
      %v542 = vpack.c.b16 %v419, %v418
      %v543 = vpack.c.b16 %v421, %v420
      %v544 = vpack.c.b16 %v423, %v422
      %v545 = vpack.c.b16 %v425, %v424
      %v546 = vpack.c.b16 %v427, %v426
      %v547 = vpack.c.b16 %v429, %v428
      %v548 = vpack.c.b16 %v431, %v430
      %v549 = vpack.c.b16 %v433, %v432
      %v550 = vpack.c.b16 %v435, %v434
      %v551 = vpack.c.b16 %v437, %v436
      %v552 = vpack.c.b16 %v439, %v438
      %v553 = vpack.c.b16 %v441, %v440
      %v554 = vpack.c.b16 %v443, %v442
      %v555 = vpack.c.b16 %v445, %v444
      %v556 = vpack.c.b16 %v447, %v446
      %v557 = vpack.c.b16 %v449, %v448
      %v558 = vpack.c.b16 %v451, %v450
      %v559 = vpack.c.b16 %v453, %v452
      %v560 = vpack.c.b16 %v455, %v454
      %v561 = vpack.c.b16 %v457, %v456
      %v562 = vpack.c.b16 %v459, %v458
      %v563 = vpack.c.b16 %v461, %v460
      %v564 = vpack.c.b16 %v463, %v462
      %v565 = vpack.c.b16 %v465, %v464
      %v566 = vpack.c.b16 %v467, %v466
      %v567 = vpack.c.b16 %v469, %v468
      %v568 = vpack.c.b16 %v471, %v470
      %v569 = vpack.c.b16 %v473, %v472
      %v570 = vpack.c.b16 %v475, %v474
      %v571 = vpack.c.b16 %v477, %v476
      %v572 = vpack.c.b16 %v479, %v478
      %v573 = vpack.c.b16 %v481, %v480
      %v574 = vpack.c.b16 %v483, %v482
      %v575 = vpack.c.b16 %v485, %v484
      %v576 = vpack.c.b16 %v487, %v486
      %v577 = vpack.c.b16 %v489, %v488
      %v578 = vpack.c.b16 %v491, %v490
      %v579 = vpack.c.b16 %v493, %v492
      %v580 = vpack.c.b16 %v495, %v494
      %v581 = vpack.c.b16 %v497, %v496
      %v582 = vpack.c.b16 %v499, %v498
      %v583 = vpack.c.b16 %v501, %v500
      %v584 = vpack.c.b16 %v503, %v502
      %v585 = vpack.c.b16 %v505, %v504
      %v586 = vpack.c.b16 %v507, %v506
      %v587 = vpack.c.b16 %v509, %v508
      %v588 = vpack.c.b16 %v511, %v510
      %v589 = vpack.c.b16 %v513, %v512
      %v590 = vpack.c.b16 %v515, %v514
      %v591 = vpack.c.b16 %v517, %v516
      %v592 = vpack.c.b16 %v519, %v518
      %v593 = vpack.c.b16 %v521, %v520
      %v594 = vpack.c.b16 %v523, %v522
      %v595 = vpack.c.b16 %v525, %v524
      %v596 = vpack.c.b16 %v527, %v526
      %v597 = vpack.c.b16 %v529, %v528
      %v598 = vpack.c.b16 %v531, %v530
      %v599 = vpack.c.b16 %v533, %v532
      %v600 = vpack.c.b16 %v535, %v534
      %v601 = vpack.c.b16 %v537, %v536
      %v608 = vunpack.c.l.b16 %v276
      %v609 = vunpack.c.l.b16 %v277
      %v610 = vunpack.c.l.b16 %v278
      %v611 = vunpack.c.l.b16 %v279
      %v612 = vunpack.c.l.b16 %v280
      %v613 = vunpack.c.l.b16 %v281
      %v614 = vpack.c.b16 %v609, %v608
      %v615 = vpack.c.b16 %v611, %v610
      %v616 = vpack.c.b16 %v613, %v612
      %vm620 = vcmask 392192
      %v622 = vsel %vm620, %v538, 0
      %v625 = vsel %vm620, %v539, 0
      %v628 = vsel %vm620, %v540, 0
      %v631 = vsel %vm620, %v541, 0
      %v634 = vsel %vm620, %v542, 0
      %v637 = vsel %vm620, %v543, 0
      %v640 = vsel %vm620, %v544, 0
      %v643 = vsel %vm620, %v545, 0
      %v646 = vsel %vm620, %v546, 0
      %v649 = vsel %vm620, %v547, 0
      %v652 = vsel %vm620, %v548, 0
      %v655 = vsel %vm620, %v549, 0
      %v658 = vsel %vm620, %v550, 0
      %v661 = vsel %vm620, %v551, 0
      %v664 = vsel %vm620, %v552, 0
      %v667 = vsel %vm620, %v553, 0
      %v670 = vsel %vm620, %v554, 0
      %v673 = vsel %vm620, %v555, 0
      %v676 = vsel %vm620, %v556, 0
      %v679 = vsel %vm620, %v557, 0
      %v682 = vsel %vm620, %v558, 0
      %v685 = vsel %vm620, %v559, 0
      %v688 = vsel %vm620, %v560, 0
      %v691 = vsel %vm620, %v561, 0
      %v694 = vsel %vm620, %v562, 0
      %v697 = vsel %vm620, %v563, 0
      %v700 = vsel %vm620, %v564, 0
      %v703 = vsel %vm620, %v565, 0
      %v706 = vsel %vm620, %v566, 0
      %v709 = vsel %vm620, %v567, 0
      %v712 = vsel %vm620, %v568, 0
      %v715 = vsel %vm620, %v569, 0
      %v718 = vsel %vm620, %v570, 0
      %v721 = vsel %vm620, %v571, 0
      %v724 = vsel %vm620, %v572, 0
      %v727 = vsel %vm620, %v573, 0
      %v730 = vsel %vm620, %v574, 0
      %v733 = vsel %vm620, %v575, 0
      %v736 = vsel %vm620, %v576, 0
      %v739 = vsel %vm620, %v577, 0
      %v742 = vsel %vm620, %v578, 0
      %v745 = vsel %vm620, %v579, 0
      %v748 = vsel %vm620, %v580, 0
      %v751 = vsel %vm620, %v581, 0
      %v754 = vsel %vm620, %v582, 0
      %v757 = vsel %vm620, %v583, 0
      %v760 = vsel %vm620, %v584, 0
      %v763 = vsel %vm620, %v585, 0
      %v766 = vsel %vm620, %v586, 0
      %v769 = vsel %vm620, %v587, 0
      %v772 = vsel %vm620, %v588, 0
      %v775 = vsel %vm620, %v589, 0
      %v778 = vsel %vm620, %v590, 0
      %v781 = vsel %vm620, %v591, 0
      %v784 = vsel %vm620, %v592, 0
      %v787 = vsel %vm620, %v593, 0
      %v790 = vsel %vm620, %v594, 0
      %v793 = vsel %vm620, %v595, 0
      %v796 = vsel %vm620, %v596, 0
      %v799 = vsel %vm620, %v597, 0
      %v802 = vsel %vm620, %v598, 0
      %v805 = vsel %vm620, %v599, 0
      %v808 = vsel %vm620, %v600, 0
      %v811 = vsel %vm620, %v601, 0
      %813 = vmatprep.subr.bf16.mxu0 0
      %814 = vmatpush1.bf16.msra.mxu0 %v614
      %815 = vmatprep.subr.bf16.mxu0 0
      %816 = vmatpush1.bf16.msra.mxu0 %v615
      %817 = vmatprep.subr.bf16.mxu0 0
      %818 = vmatpush1.bf16.msra.mxu0 %v616
      %819 = vmatprep.subr.bf16.mxu0 0
      %820 = vmatpush1.bf16.msra.mxu0 0
      %821 = vmatprep.subr.bf16.mxu0 0
      %822 = vmatpush1.bf16.msra.mxu0 0
      %823 = vmatprep.subr.bf16.mxu0 0
      %824 = vmatpush1.bf16.msra.mxu0 0
      %825 = vmatprep.subr.bf16.mxu0 0
      %826 = vmatpush1.bf16.msra.mxu0 0
      %827 = vmatprep.subr.bf16.mxu0 0
      %828 = vmatpush1.bf16.msra.mxu0 0
      %829 = vmatprep.subr.bf16.mxu0 0
      %830 = vmatpush1.bf16.msra.mxu0 0
      %831 = vmatprep.subr.bf16.mxu0 0
      %832 = vmatpush1.bf16.msra.mxu0 0
      %833 = vmatprep.subr.bf16.mxu0 0
      %834 = vmatpush1.bf16.msra.mxu0 0
      %835 = vmatprep.subr.bf16.mxu0 0
      %836 = vmatpush1.bf16.msra.mxu0 0
      %837 = vmatprep.subr.bf16.mxu0 0
      %838 = vmatpush1.bf16.msra.mxu0 0
      %839 = vmatprep.subr.bf16.mxu0 0
      %840 = vmatpush1.bf16.msra.mxu0 0
      %841 = vmatprep.subr.bf16.mxu0 0
      %842 = vmatpush1.bf16.msra.mxu0 0
      %843 = vmatprep.subr.bf16.mxu0 0
      %844 = vmatpush1.bf16.msra.mxu0 0
      %845 = vmatprep.mubr.bf16.mxu0 0
      %846 = vmatmul.mubr.bf16.gmra.mrb[0].mxu0 %v622
      %v847 = vpop.f32.mrb[0].mxu0
      %v848 = vadd.f32 0.0, %v847
      %v849 = vpop.f32.mrb[0].mxu0
      %v850 = vpop.f32.mrb[0].mxu0
      %v851 = vadd.f32 0.0, %v850
      %v852 = vpop.f32.mrb[0].mxu0
      %853 = vmatprep.mubr.bf16.mxu0 0
      %854 = vmatmul.mubr.bf16.gmra.mrb[0].mxu0 %v625
      %v855 = vpop.f32.mrb[0].mxu0
      %v856 = vadd.f32 0.0, %v855
      %v857 = vpop.f32.mrb[0].mxu0
      %v858 = vpop.f32.mrb[0].mxu0
      %v859 = vadd.f32 0.0, %v858
      %v860 = vpop.f32.mrb[0].mxu0
      %861 = vmatprep.mubr.bf16.mxu0 0
      %862 = vmatmul.mubr.bf16.gmra.mrb[0].mxu0 %v628
      %v863 = vpop.f32.mrb[0].mxu0
      %v864 = vadd.f32 0.0, %v863
      %v865 = vpop.f32.mrb[0].mxu0
      %v866 = vpop.f32.mrb[0].mxu0
      %v867 = vadd.f32 0.0, %v866
      %v868 = vpop.f32.mrb[0].mxu0
      %869 = vmatprep.mubr.bf16.mxu0 0
      %870 = vmatmul.mubr.bf16.gmra.mrb[0].mxu0 %v631
      %v871 = vpop.f32.mrb[0].mxu0
      %v872 = vadd.f32 0.0, %v871
      %v873 = vpop.f32.mrb[0].mxu0
      %v874 = vpop.f32.mrb[0].mxu0
      %v875 = vadd.f32 0.0, %v874
      %v876 = vpop.f32.mrb[0].mxu0
      %877 = vmatprep.mubr.bf16.mxu0 0
      %878 = vmatmul.mubr.bf16.gmra.mrb[0].mxu0 %v634
      %v879 = vpop.f32.mrb[0].mxu0
      %v880 = vadd.f32 0.0, %v879
      %v881 = vpop.f32.mrb[0].mxu0
      %v882 = vpop.f32.mrb[0].mxu0
      %v883 = vadd.f32 0.0, %v882
      %v884 = vpop.f32.mrb[0].mxu0
      %885 = vmatprep.mubr.bf16.mxu0 0
      %886 = vmatmul.mubr.bf16.gmra.mrb[0].mxu0 %v637
      %v887 = vpop.f32.mrb[0].mxu0
      %v888 = vadd.f32 0.0, %v887
      %v889 = vpop.f32.mrb[0].mxu0
      %v890 = vpop.f32.mrb[0].mxu0
      %v891 = vadd.f32 0.0, %v890
      %v892 = vpop.f32.mrb[0].mxu0
      %893 = vmatprep.mubr.bf16.mxu0 0
      %894 = vmatmul.mubr.bf16.gmra.mrb[0].mxu0 %v640
      %v895 = vpop.f32.mrb[0].mxu0
      %v896 = vadd.f32 0.0, %v895
      %v897 = vpop.f32.mrb[0].mxu0
      %v898 = vpop.f32.mrb[0].mxu0
      %v899 = vadd.f32 0.0, %v898
      %v900 = vpop.f32.mrb[0].mxu0
      %901 = vmatprep.mubr.bf16.mxu0 0
      %902 = vmatmul.mubr.bf16.gmra.mrb[0].mxu0 %v643
      %v903 = vpop.f32.mrb[0].mxu0
      %v904 = vadd.f32 0.0, %v903
      %v905 = vpop.f32.mrb[0].mxu0
      %v906 = vpop.f32.mrb[0].mxu0
      %v907 = vadd.f32 0.0, %v906
      %v908 = vpop.f32.mrb[0].mxu0
      %909 = vmatprep.mubr.bf16.mxu0 0
      %910 = vmatmul.mubr.bf16.gmra.mrb[0].mxu0 %v646
      %v911 = vpop.f32.mrb[0].mxu0
      %v912 = vadd.f32 0.0, %v911
      %v913 = vpop.f32.mrb[0].mxu0
      %v914 = vpop.f32.mrb[0].mxu0
      %v915 = vadd.f32 0.0, %v914
      %v916 = vpop.f32.mrb[0].mxu0
      %917 = vmatprep.mubr.bf16.mxu0 0
      %918 = vmatmul.mubr.bf16.gmra.mrb[0].mxu0 %v649
      %v919 = vpop.f32.mrb[0].mxu0
      %v920 = vadd.f32 0.0, %v919
      %v921 = vpop.f32.mrb[0].mxu0
      %v922 = vpop.f32.mrb[0].mxu0
      %v923 = vadd.f32 0.0, %v922
      %v924 = vpop.f32.mrb[0].mxu0
      %925 = vmatprep.mubr.bf16.mxu0 0
      %926 = vmatmul.mubr.bf16.gmra.mrb[0].mxu0 %v652
      %v927 = vpop.f32.mrb[0].mxu0
      %v928 = vadd.f32 0.0, %v927
      %v929 = vpop.f32.mrb[0].mxu0
      %v930 = vpop.f32.mrb[0].mxu0
      %v931 = vadd.f32 0.0, %v930
      %v932 = vpop.f32.mrb[0].mxu0
      %933 = vmatprep.mubr.bf16.mxu0 0
      %934 = vmatmul.mubr.bf16.gmra.mrb[0].mxu0 %v655
      %v935 = vpop.f32.mrb[0].mxu0
      %v936 = vadd.f32 0.0, %v935
      %v937 = vpop.f32.mrb[0].mxu0
      %v938 = vpop.f32.mrb[0].mxu0
      %v939 = vadd.f32 0.0, %v938
      %v940 = vpop.f32.mrb[0].mxu0
      %941 = vmatprep.mubr.bf16.mxu0 0
      %942 = vmatmul.mubr.bf16.gmra.mrb[0].mxu0 %v658
      %v943 = vpop.f32.mrb[0].mxu0
      %v944 = vadd.f32 0.0, %v943
      %v945 = vpop.f32.mrb[0].mxu0
      %v946 = vpop.f32.mrb[0].mxu0
      %v947 = vadd.f32 0.0, %v946
      %v948 = vpop.f32.mrb[0].mxu0
      %949 = vmatprep.mubr.bf16.mxu0 0
      %950 = vmatmul.mubr.bf16.gmra.mrb[0].mxu0 %v661
      %v951 = vpop.f32.mrb[0].mxu0
      %v952 = vadd.f32 0.0, %v951
      %v953 = vpop.f32.mrb[0].mxu0
      %v954 = vpop.f32.mrb[0].mxu0
      %v955 = vadd.f32 0.0, %v954
      %v956 = vpop.f32.mrb[0].mxu0
      %957 = vmatprep.mubr.bf16.mxu0 0
      %958 = vmatmul.mubr.bf16.gmra.mrb[0].mxu0 %v664
      %v959 = vpop.f32.mrb[0].mxu0
      %v960 = vadd.f32 0.0, %v959
      %v961 = vpop.f32.mrb[0].mxu0
      %v962 = vpop.f32.mrb[0].mxu0
      %v963 = vadd.f32 0.0, %v962
      %v964 = vpop.f32.mrb[0].mxu0
      %965 = vmatprep.mubr.bf16.mxu0 0
      %966 = vmatmul.mubr.bf16.gmra.mrb[0].mxu0 %v667
      %v967 = vpop.f32.mrb[0].mxu0
      %v968 = vadd.f32 0.0, %v967
      %v969 = vpop.f32.mrb[0].mxu0
      %v970 = vpop.f32.mrb[0].mxu0
      %v971 = vadd.f32 0.0, %v970
      %v972 = vpop.f32.mrb[0].mxu0
      %973 = vmatprep.mubr.bf16.mxu0 0
      %974 = vmatmul.mubr.bf16.gmra.mrb[0].mxu0 %v670
      %v975 = vpop.f32.mrb[0].mxu0
      %v976 = vadd.f32 0.0, %v975
      %v977 = vpop.f32.mrb[0].mxu0
      %v978 = vpop.f32.mrb[0].mxu0
      %v979 = vadd.f32 0.0, %v978
      %v980 = vpop.f32.mrb[0].mxu0
      %981 = vmatprep.mubr.bf16.mxu0 0
      %982 = vmatmul.mubr.bf16.gmra.mrb[0].mxu0 %v673
      %v983 = vpop.f32.mrb[0].mxu0
      %v984 = vadd.f32 0.0, %v983
      %v985 = vpop.f32.mrb[0].mxu0
      %v986 = vpop.f32.mrb[0].mxu0
      %v987 = vadd.f32 0.0, %v986
      %v988 = vpop.f32.mrb[0].mxu0
      %989 = vmatprep.mubr.bf16.mxu0 0
      %990 = vmatmul.mubr.bf16.gmra.mrb[0].mxu0 %v676
      %v991 = vpop.f32.mrb[0].mxu0
      %v992 = vadd.f32 0.0, %v991
      %v993 = vpop.f32.mrb[0].mxu0
      %v994 = vpop.f32.mrb[0].mxu0
      %v995 = vadd.f32 0.0, %v994
      %v996 = vpop.f32.mrb[0].mxu0
      %997 = vmatprep.mubr.bf16.mxu0 0
      %998 = vmatmul.mubr.bf16.gmra.mrb[0].mxu0 %v679
      %v999 = vpop.f32.mrb[0].mxu0
      %v1000 = vadd.f32 0.0, %v999
      %v1001 = vpop.f32.mrb[0].mxu0
      %v1002 = vpop.f32.mrb[0].mxu0
      %v1003 = vadd.f32 0.0, %v1002
      %v1004 = vpop.f32.mrb[0].mxu0
      %1005 = vmatprep.mubr.bf16.mxu0 0
      %1006 = vmatmul.mubr.bf16.gmra.mrb[0].mxu0 %v682
      %v1007 = vpop.f32.mrb[0].mxu0
      %v1008 = vadd.f32 0.0, %v1007
      %v1009 = vpop.f32.mrb[0].mxu0
      %v1010 = vpop.f32.mrb[0].mxu0
      %v1011 = vadd.f32 0.0, %v1010
      %v1012 = vpop.f32.mrb[0].mxu0
      %1013 = vmatprep.mubr.bf16.mxu0 0
      %1014 = vmatmul.mubr.bf16.gmra.mrb[0].mxu0 %v685
      %v1015 = vpop.f32.mrb[0].mxu0
      %v1016 = vadd.f32 0.0, %v1015
      %v1017 = vpop.f32.mrb[0].mxu0
      %v1018 = vpop.f32.mrb[0].mxu0
      %v1019 = vadd.f32 0.0, %v1018
      %v1020 = vpop.f32.mrb[0].mxu0
      %1021 = vmatprep.mubr.bf16.mxu0 0
      %1022 = vmatmul.mubr.bf16.gmra.mrb[0].mxu0 %v688
      %v1023 = vpop.f32.mrb[0].mxu0
      %v1024 = vadd.f32 0.0, %v1023
      %v1025 = vpop.f32.mrb[0].mxu0
      %v1026 = vpop.f32.mrb[0].mxu0
      %v1027 = vadd.f32 0.0, %v1026
      %v1028 = vpop.f32.mrb[0].mxu0
      %1029 = vmatprep.mubr.bf16.mxu0 0
      %1030 = vmatmul.mubr.bf16.gmra.mrb[0].mxu0 %v691
      %v1031 = vpop.f32.mrb[0].mxu0
      %v1032 = vadd.f32 0.0, %v1031
      %v1033 = vpop.f32.mrb[0].mxu0
      %v1034 = vpop.f32.mrb[0].mxu0
      %v1035 = vadd.f32 0.0, %v1034
      %v1036 = vpop.f32.mrb[0].mxu0
      %1037 = vmatprep.mubr.bf16.mxu0 0
      %1038 = vmatmul.mubr.bf16.gmra.mrb[0].mxu0 %v694
      %v1039 = vpop.f32.mrb[0].mxu0
      %v1040 = vadd.f32 0.0, %v1039
      %v1041 = vpop.f32.mrb[0].mxu0
      %v1042 = vpop.f32.mrb[0].mxu0
      %v1043 = vadd.f32 0.0, %v1042
      %v1044 = vpop.f32.mrb[0].mxu0
      %1045 = vmatprep.mubr.bf16.mxu0 0
      %1046 = vmatmul.mubr.bf16.gmra.mrb[0].mxu0 %v697
      %v1047 = vpop.f32.mrb[0].mxu0
      %v1048 = vadd.f32 0.0, %v1047
      %v1049 = vpop.f32.mrb[0].mxu0
      %v1050 = vpop.f32.mrb[0].mxu0
      %v1051 = vadd.f32 0.0, %v1050
      %v1052 = vpop.f32.mrb[0].mxu0
      %1053 = vmatprep.mubr.bf16.mxu0 0
      %1054 = vmatmul.mubr.bf16.gmra.mrb[0].mxu0 %v700
      %v1055 = vpop.f32.mrb[0].mxu0
      %v1056 = vadd.f32 0.0, %v1055
      %v1057 = vpop.f32.mrb[0].mxu0
      %v1058 = vpop.f32.mrb[0].mxu0
      %v1059 = vadd.f32 0.0, %v1058
      %v1060 = vpop.f32.mrb[0].mxu0
      %1061 = vmatprep.mubr.bf16.mxu0 0
      %1062 = vmatmul.mubr.bf16.gmra.mrb[0].mxu0 %v703
      %v1063 = vpop.f32.mrb[0].mxu0
      %v1064 = vadd.f32 0.0, %v1063
      %v1065 = vpop.f32.mrb[0].mxu0
      %v1066 = vpop.f32.mrb[0].mxu0
      %v1067 = vadd.f32 0.0, %v1066
      %v1068 = vpop.f32.mrb[0].mxu0
      %1069 = vmatprep.mubr.bf16.mxu0 0
      %1070 = vmatmul.mubr.bf16.gmra.mrb[0].mxu0 %v706
      %v1071 = vpop.f32.mrb[0].mxu0
      %v1072 = vadd.f32 0.0, %v1071
      %v1073 = vpop.f32.mrb[0].mxu0
      %v1074 = vpop.f32.mrb[0].mxu0
      %v1075 = vadd.f32 0.0, %v1074
      %v1076 = vpop.f32.mrb[0].mxu0
      %1077 = vmatprep.mubr.bf16.mxu0 0
      %1078 = vmatmul.mubr.bf16.gmra.mrb[0].mxu0 %v709
      %v1079 = vpop.f32.mrb[0].mxu0
      %v1080 = vadd.f32 0.0, %v1079
      %v1081 = vpop.f32.mrb[0].mxu0
      %v1082 = vpop.f32.mrb[0].mxu0
      %v1083 = vadd.f32 0.0, %v1082
      %v1084 = vpop.f32.mrb[0].mxu0
      %1085 = vmatprep.mubr.bf16.mxu0 0
      %1086 = vmatmul.mubr.bf16.gmra.mrb[0].mxu0 %v712
      %v1087 = vpop.f32.mrb[0].mxu0
      %v1088 = vadd.f32 0.0, %v1087
      %v1089 = vpop.f32.mrb[0].mxu0
      %v1090 = vpop.f32.mrb[0].mxu0
      %v1091 = vadd.f32 0.0, %v1090
      %v1092 = vpop.f32.mrb[0].mxu0
      %1093 = vmatprep.mubr.bf16.mxu0 0
      %1094 = vmatmul.mubr.bf16.gmra.mrb[0].mxu0 %v715
      %v1095 = vpop.f32.mrb[0].mxu0
      %v1096 = vadd.f32 0.0, %v1095
      %v1097 = vpop.f32.mrb[0].mxu0
      %v1098 = vpop.f32.mrb[0].mxu0
      %v1099 = vadd.f32 0.0, %v1098
      %v1100 = vpop.f32.mrb[0].mxu0
      %1101 = vmatprep.mubr.bf16.mxu0 0
      %1102 = vmatmul.mubr.bf16.gmra.mrb[0].mxu0 %v718
      %v1103 = vpop.f32.mrb[0].mxu0
      %v1104 = vadd.f32 0.0, %v1103
      %v1105 = vpop.f32.mrb[0].mxu0
      %v1106 = vpop.f32.mrb[0].mxu0
      %v1107 = vadd.f32 0.0, %v1106
      %v1108 = vpop.f32.mrb[0].mxu0
      %1109 = vmatprep.mubr.bf16.mxu0 0
      %1110 = vmatmul.mubr.bf16.gmra.mrb[0].mxu0 %v721
      %v1111 = vpop.f32.mrb[0].mxu0
      %v1112 = vadd.f32 0.0, %v1111
      %v1113 = vpop.f32.mrb[0].mxu0
      %v1114 = vpop.f32.mrb[0].mxu0
      %v1115 = vadd.f32 0.0, %v1114
      %v1116 = vpop.f32.mrb[0].mxu0
      %1117 = vmatprep.mubr.bf16.mxu0 0
      %1118 = vmatmul.mubr.bf16.gmra.mrb[0].mxu0 %v724
      %v1119 = vpop.f32.mrb[0].mxu0
      %v1120 = vadd.f32 0.0, %v1119
      %v1121 = vpop.f32.mrb[0].mxu0
      %v1122 = vpop.f32.mrb[0].mxu0
      %v1123 = vadd.f32 0.0, %v1122
      %v1124 = vpop.f32.mrb[0].mxu0
      %1125 = vmatprep.mubr.bf16.mxu0 0
      %1126 = vmatmul.mubr.bf16.gmra.mrb[0].mxu0 %v727
      %v1127 = vpop.f32.mrb[0].mxu0
      %v1128 = vadd.f32 0.0, %v1127
      %v1129 = vpop.f32.mrb[0].mxu0
      %v1130 = vpop.f32.mrb[0].mxu0
      %v1131 = vadd.f32 0.0, %v1130
      %v1132 = vpop.f32.mrb[0].mxu0
      %1133 = vmatprep.mubr.bf16.mxu0 0
      %1134 = vmatmul.mubr.bf16.gmra.mrb[0].mxu0 %v730
      %v1135 = vpop.f32.mrb[0].mxu0
      %v1136 = vadd.f32 0.0, %v1135
      %v1137 = vpop.f32.mrb[0].mxu0
      %v1138 = vpop.f32.mrb[0].mxu0
      %v1139 = vadd.f32 0.0, %v1138
      %v1140 = vpop.f32.mrb[0].mxu0
      %1141 = vmatprep.mubr.bf16.mxu0 0
      %1142 = vmatmul.mubr.bf16.gmra.mrb[0].mxu0 %v733
      %v1143 = vpop.f32.mrb[0].mxu0
      %v1144 = vadd.f32 0.0, %v1143
      %v1145 = vpop.f32.mrb[0].mxu0
      %v1146 = vpop.f32.mrb[0].mxu0
      %v1147 = vadd.f32 0.0, %v1146
      %v1148 = vpop.f32.mrb[0].mxu0
      %1149 = vmatprep.mubr.bf16.mxu0 0
      %1150 = vmatmul.mubr.bf16.gmra.mrb[0].mxu0 %v736
      %v1151 = vpop.f32.mrb[0].mxu0
      %v1152 = vadd.f32 0.0, %v1151
      %v1153 = vpop.f32.mrb[0].mxu0
      %v1154 = vpop.f32.mrb[0].mxu0
      %v1155 = vadd.f32 0.0, %v1154
      %v1156 = vpop.f32.mrb[0].mxu0
      %1157 = vmatprep.mubr.bf16.mxu0 0
      %1158 = vmatmul.mubr.bf16.gmra.mrb[0].mxu0 %v739
      %v1159 = vpop.f32.mrb[0].mxu0
      %v1160 = vadd.f32 0.0, %v1159
      %v1161 = vpop.f32.mrb[0].mxu0
      %v1162 = vpop.f32.mrb[0].mxu0
      %v1163 = vadd.f32 0.0, %v1162
      %v1164 = vpop.f32.mrb[0].mxu0
      %1165 = vmatprep.mubr.bf16.mxu0 0
      %1166 = vmatmul.mubr.bf16.gmra.mrb[0].mxu0 %v742
      %v1167 = vpop.f32.mrb[0].mxu0
      %v1168 = vadd.f32 0.0, %v1167
      %v1169 = vpop.f32.mrb[0].mxu0
      %v1170 = vpop.f32.mrb[0].mxu0
      %v1171 = vadd.f32 0.0, %v1170
      %v1172 = vpop.f32.mrb[0].mxu0
      %1173 = vmatprep.mubr.bf16.mxu0 0
      %1174 = vmatmul.mubr.bf16.gmra.mrb[0].mxu0 %v745
      %v1175 = vpop.f32.mrb[0].mxu0
      %v1176 = vadd.f32 0.0, %v1175
      %v1177 = vpop.f32.mrb[0].mxu0
      %v1178 = vpop.f32.mrb[0].mxu0
      %v1179 = vadd.f32 0.0, %v1178
      %v1180 = vpop.f32.mrb[0].mxu0
      %1181 = vmatprep.mubr.bf16.mxu0 0
      %1182 = vmatmul.mubr.bf16.gmra.mrb[0].mxu0 %v748
      %v1183 = vpop.f32.mrb[0].mxu0
      %v1184 = vadd.f32 0.0, %v1183
      %v1185 = vpop.f32.mrb[0].mxu0
      %v1186 = vpop.f32.mrb[0].mxu0
      %v1187 = vadd.f32 0.0, %v1186
      %v1188 = vpop.f32.mrb[0].mxu0
      %1189 = vmatprep.mubr.bf16.mxu0 0
      %1190 = vmatmul.mubr.bf16.gmra.mrb[0].mxu0 %v751
      %v1191 = vpop.f32.mrb[0].mxu0
      %v1192 = vadd.f32 0.0, %v1191
      %v1193 = vpop.f32.mrb[0].mxu0
      %v1194 = vpop.f32.mrb[0].mxu0
      %v1195 = vadd.f32 0.0, %v1194
      %v1196 = vpop.f32.mrb[0].mxu0
      %1197 = vmatprep.mubr.bf16.mxu0 0
      %1198 = vmatmul.mubr.bf16.gmra.mrb[0].mxu0 %v754
      %v1199 = vpop.f32.mrb[0].mxu0
      %v1200 = vadd.f32 0.0, %v1199
      %v1201 = vpop.f32.mrb[0].mxu0
      %v1202 = vpop.f32.mrb[0].mxu0
      %v1203 = vadd.f32 0.0, %v1202
      %v1204 = vpop.f32.mrb[0].mxu0
      %1205 = vmatprep.mubr.bf16.mxu0 0
      %1206 = vmatmul.mubr.bf16.gmra.mrb[0].mxu0 %v757
      %v1207 = vpop.f32.mrb[0].mxu0
      %v1208 = vadd.f32 0.0, %v1207
      %v1209 = vpop.f32.mrb[0].mxu0
      %v1210 = vpop.f32.mrb[0].mxu0
      %v1211 = vadd.f32 0.0, %v1210
      %v1212 = vpop.f32.mrb[0].mxu0
      %1213 = vmatprep.mubr.bf16.mxu0 0
      %1214 = vmatmul.mubr.bf16.gmra.mrb[0].mxu0 %v760
      %v1215 = vpop.f32.mrb[0].mxu0
      %v1216 = vadd.f32 0.0, %v1215
      %v1217 = vpop.f32.mrb[0].mxu0
      %v1218 = vpop.f32.mrb[0].mxu0
      %v1219 = vadd.f32 0.0, %v1218
      %v1220 = vpop.f32.mrb[0].mxu0
      %1221 = vmatprep.mubr.bf16.mxu0 0
      %1222 = vmatmul.mubr.bf16.gmra.mrb[0].mxu0 %v763
      %v1223 = vpop.f32.mrb[0].mxu0
      %v1224 = vadd.f32 0.0, %v1223
      %v1225 = vpop.f32.mrb[0].mxu0
      %v1226 = vpop.f32.mrb[0].mxu0
      %v1227 = vadd.f32 0.0, %v1226
      %v1228 = vpop.f32.mrb[0].mxu0
      %1229 = vmatprep.mubr.bf16.mxu0 0
      %1230 = vmatmul.mubr.bf16.gmra.mrb[0].mxu0 %v766
      %v1231 = vpop.f32.mrb[0].mxu0
      %v1232 = vadd.f32 0.0, %v1231
      %v1233 = vpop.f32.mrb[0].mxu0
      %v1234 = vpop.f32.mrb[0].mxu0
      %v1235 = vadd.f32 0.0, %v1234
      %v1236 = vpop.f32.mrb[0].mxu0
      %1237 = vmatprep.mubr.bf16.mxu0 0
      %1238 = vmatmul.mubr.bf16.gmra.mrb[0].mxu0 %v769
      %v1239 = vpop.f32.mrb[0].mxu0
      %v1240 = vadd.f32 0.0, %v1239
      %v1241 = vpop.f32.mrb[0].mxu0
      %v1242 = vpop.f32.mrb[0].mxu0
      %v1243 = vadd.f32 0.0, %v1242
      %v1244 = vpop.f32.mrb[0].mxu0
      %1245 = vmatprep.mubr.bf16.mxu0 0
      %1246 = vmatmul.mubr.bf16.gmra.mrb[0].mxu0 %v772
      %v1247 = vpop.f32.mrb[0].mxu0
      %v1248 = vadd.f32 0.0, %v1247
      %v1249 = vpop.f32.mrb[0].mxu0
      %v1250 = vpop.f32.mrb[0].mxu0
      %v1251 = vadd.f32 0.0, %v1250
      %v1252 = vpop.f32.mrb[0].mxu0
      %1253 = vmatprep.mubr.bf16.mxu0 0
      %1254 = vmatmul.mubr.bf16.gmra.mrb[0].mxu0 %v775
      %v1255 = vpop.f32.mrb[0].mxu0
      %v1256 = vadd.f32 0.0, %v1255
      %v1257 = vpop.f32.mrb[0].mxu0
      %v1258 = vpop.f32.mrb[0].mxu0
      %v1259 = vadd.f32 0.0, %v1258
      %v1260 = vpop.f32.mrb[0].mxu0
      %1261 = vmatprep.mubr.bf16.mxu0 0
      %1262 = vmatmul.mubr.bf16.gmra.mrb[0].mxu0 %v778
      %v1263 = vpop.f32.mrb[0].mxu0
      %v1264 = vadd.f32 0.0, %v1263
      %v1265 = vpop.f32.mrb[0].mxu0
      %v1266 = vpop.f32.mrb[0].mxu0
      %v1267 = vadd.f32 0.0, %v1266
      %v1268 = vpop.f32.mrb[0].mxu0
      %1269 = vmatprep.mubr.bf16.mxu0 0
      %1270 = vmatmul.mubr.bf16.gmra.mrb[0].mxu0 %v781
      %v1271 = vpop.f32.mrb[0].mxu0
      %v1272 = vadd.f32 0.0, %v1271
      %v1273 = vpop.f32.mrb[0].mxu0
      %v1274 = vpop.f32.mrb[0].mxu0
      %v1275 = vadd.f32 0.0, %v1274
      %v1276 = vpop.f32.mrb[0].mxu0
      %1277 = vmatprep.mubr.bf16.mxu0 0
      %1278 = vmatmul.mubr.bf16.gmra.mrb[0].mxu0 %v784
      %v1279 = vpop.f32.mrb[0].mxu0
      %v1280 = vadd.f32 0.0, %v1279
      %v1281 = vpop.f32.mrb[0].mxu0
      %v1282 = vpop.f32.mrb[0].mxu0
      %v1283 = vadd.f32 0.0, %v1282
      %v1284 = vpop.f32.mrb[0].mxu0
      %1285 = vmatprep.mubr.bf16.mxu0 0
      %1286 = vmatmul.mubr.bf16.gmra.mrb[0].mxu0 %v787
      %v1287 = vpop.f32.mrb[0].mxu0
      %v1288 = vadd.f32 0.0, %v1287
      %v1289 = vpop.f32.mrb[0].mxu0
      %v1290 = vpop.f32.mrb[0].mxu0
      %v1291 = vadd.f32 0.0, %v1290
      %v1292 = vpop.f32.mrb[0].mxu0
      %1293 = vmatprep.mubr.bf16.mxu0 0
      %1294 = vmatmul.mubr.bf16.gmra.mrb[0].mxu0 %v790
      %v1295 = vpop.f32.mrb[0].mxu0
      %v1296 = vadd.f32 0.0, %v1295
      %v1297 = vpop.f32.mrb[0].mxu0
      %v1298 = vpop.f32.mrb[0].mxu0
      %v1299 = vadd.f32 0.0, %v1298
      %v1300 = vpop.f32.mrb[0].mxu0
      %1301 = vmatprep.mubr.bf16.mxu0 0
      %1302 = vmatmul.mubr.bf16.gmra.mrb[0].mxu0 %v793
      %v1303 = vpop.f32.mrb[0].mxu0
      %v1304 = vadd.f32 0.0, %v1303
      %v1305 = vpop.f32.mrb[0].mxu0
      %v1306 = vpop.f32.mrb[0].mxu0
      %v1307 = vadd.f32 0.0, %v1306
      %v1308 = vpop.f32.mrb[0].mxu0
      %1309 = vmatprep.mubr.bf16.mxu0 0
      %1310 = vmatmul.mubr.bf16.gmra.mrb[0].mxu0 %v796
      %v1311 = vpop.f32.mrb[0].mxu0
      %v1312 = vadd.f32 0.0, %v1311
      %v1313 = vpop.f32.mrb[0].mxu0
      %v1314 = vpop.f32.mrb[0].mxu0
      %v1315 = vadd.f32 0.0, %v1314
      %v1316 = vpop.f32.mrb[0].mxu0
      %1317 = vmatprep.mubr.bf16.mxu0 0
      %1318 = vmatmul.mubr.bf16.gmra.mrb[0].mxu0 %v799
      %v1319 = vpop.f32.mrb[0].mxu0
      %v1320 = vadd.f32 0.0, %v1319
      %v1321 = vpop.f32.mrb[0].mxu0
      %v1322 = vpop.f32.mrb[0].mxu0
      %v1323 = vadd.f32 0.0, %v1322
      %v1324 = vpop.f32.mrb[0].mxu0
      %1325 = vmatprep.mubr.bf16.mxu0 0
      %1326 = vmatmul.mubr.bf16.gmra.mrb[0].mxu0 %v802
      %v1327 = vpop.f32.mrb[0].mxu0
      %v1328 = vadd.f32 0.0, %v1327
      %v1329 = vpop.f32.mrb[0].mxu0
      %v1330 = vpop.f32.mrb[0].mxu0
      %v1331 = vadd.f32 0.0, %v1330
      %v1332 = vpop.f32.mrb[0].mxu0
      %1333 = vmatprep.mubr.bf16.mxu0 0
      %1334 = vmatmul.mubr.bf16.gmra.mrb[0].mxu0 %v805
      %v1335 = vpop.f32.mrb[0].mxu0
      %v1336 = vadd.f32 0.0, %v1335
      %v1337 = vpop.f32.mrb[0].mxu0
      %v1338 = vpop.f32.mrb[0].mxu0
      %v1339 = vadd.f32 0.0, %v1338
      %v1340 = vpop.f32.mrb[0].mxu0
      %1341 = vmatprep.mubr.bf16.mxu0 0
      %1342 = vmatmul.mubr.bf16.gmra.mrb[0].mxu0 %v808
      %v1343 = vpop.f32.mrb[0].mxu0
      %v1344 = vadd.f32 0.0, %v1343
      %v1345 = vpop.f32.mrb[0].mxu0
      %v1346 = vpop.f32.mrb[0].mxu0
      %v1347 = vadd.f32 0.0, %v1346
      %v1348 = vpop.f32.mrb[0].mxu0
      %1349 = vmatprep.mubr.bf16.mxu0 0
      %1350 = vmatmul.mubr.bf16.gmra.mrb[0].mxu0 %v811
      %v1351 = vpop.f32.mrb[0].mxu0
      %v1352 = vadd.f32 0.0, %v1351
      %v1353 = vpop.f32.mrb[0].mxu0
      %v1354 = vpop.f32.mrb[0].mxu0
      %v1355 = vadd.f32 0.0, %v1354
      %v1356 = vpop.f32.mrb[0].mxu0
      %1357 = vdwg.mxu0
      %v1358 = vpack.c.bf16 %v851, %v848
      %v1359 = vpack.c.bf16 %v859, %v856
      %v1360 = vpack.c.bf16 %v867, %v864
      %v1361 = vpack.c.bf16 %v875, %v872
      %v1362 = vpack.c.bf16 %v883, %v880
      %v1363 = vpack.c.bf16 %v891, %v888
      %v1364 = vpack.c.bf16 %v899, %v896
      %v1365 = vpack.c.bf16 %v907, %v904
      %v1366 = vpack.c.bf16 %v915, %v912
      %v1367 = vpack.c.bf16 %v923, %v920
      %v1368 = vpack.c.bf16 %v931, %v928
      %v1369 = vpack.c.bf16 %v939, %v936
      %v1370 = vpack.c.bf16 %v947, %v944
      %v1371 = vpack.c.bf16 %v955, %v952
      %v1372 = vpack.c.bf16 %v963, %v960
      %v1373 = vpack.c.bf16 %v971, %v968
      %v1374 = vpack.c.bf16 %v979, %v976
      %v1375 = vpack.c.bf16 %v987, %v984
      %v1376 = vpack.c.bf16 %v995, %v992
      %v1377 = vpack.c.bf16 %v1003, %v1000
      %v1378 = vpack.c.bf16 %v1011, %v1008
      %v1379 = vpack.c.bf16 %v1019, %v1016
      %v1380 = vpack.c.bf16 %v1027, %v1024
      %v1381 = vpack.c.bf16 %v1035, %v1032
      %v1382 = vpack.c.bf16 %v1043, %v1040
      %v1383 = vpack.c.bf16 %v1051, %v1048
      %v1384 = vpack.c.bf16 %v1059, %v1056
      %v1385 = vpack.c.bf16 %v1067, %v1064
      %v1386 = vpack.c.bf16 %v1075, %v1072
      %v1387 = vpack.c.bf16 %v1083, %v1080
      %v1388 = vpack.c.bf16 %v1091, %v1088
      %v1389 = vpack.c.bf16 %v1099, %v1096
      %v1390 = vpack.c.bf16 %v1107, %v1104
      %v1391 = vpack.c.bf16 %v1115, %v1112
      %v1392 = vpack.c.bf16 %v1123, %v1120
      %v1393 = vpack.c.bf16 %v1131, %v1128
      %v1394 = vpack.c.bf16 %v1139, %v1136
      %v1395 = vpack.c.bf16 %v1147, %v1144
      %v1396 = vpack.c.bf16 %v1155, %v1152
      %v1397 = vpack.c.bf16 %v1163, %v1160
      %v1398 = vpack.c.bf16 %v1171, %v1168
      %v1399 = vpack.c.bf16 %v1179, %v1176
      %v1400 = vpack.c.bf16 %v1187, %v1184
      %v1401 = vpack.c.bf16 %v1195, %v1192
      %v1402 = vpack.c.bf16 %v1203, %v1200
      %v1403 = vpack.c.bf16 %v1211, %v1208
      %v1404 = vpack.c.bf16 %v1219, %v1216
      %v1405 = vpack.c.bf16 %v1227, %v1224
      %v1406 = vpack.c.bf16 %v1235, %v1232
      %v1407 = vpack.c.bf16 %v1243, %v1240
      %v1408 = vpack.c.bf16 %v1251, %v1248
      %v1409 = vpack.c.bf16 %v1259, %v1256
      %v1410 = vpack.c.bf16 %v1267, %v1264
      %v1411 = vpack.c.bf16 %v1275, %v1272
      %v1412 = vpack.c.bf16 %v1283, %v1280
      %v1413 = vpack.c.bf16 %v1291, %v1288
      %v1414 = vpack.c.bf16 %v1299, %v1296
      %v1415 = vpack.c.bf16 %v1307, %v1304
      %v1416 = vpack.c.bf16 %v1315, %v1312
      %v1417 = vpack.c.bf16 %v1323, %v1320
      %v1418 = vpack.c.bf16 %v1331, %v1328
      %v1419 = vpack.c.bf16 %v1339, %v1336
      %v1420 = vpack.c.bf16 %v1347, %v1344
      %v1421 = vpack.c.bf16 %v1355, %v1352
      %v1486 = vunpack.c.l.b16 %v1358
      %v1487 = vunpack.c.h.b16 %v1358
      %v1488 = vunpack.c.l.b16 %v1359
      %v1489 = vunpack.c.h.b16 %v1359
      %v1490 = vunpack.c.l.b16 %v1360
      %v1491 = vunpack.c.h.b16 %v1360
      %v1492 = vunpack.c.l.b16 %v1361
      %v1493 = vunpack.c.h.b16 %v1361
      %v1494 = vunpack.c.l.b16 %v1362
      %v1495 = vunpack.c.h.b16 %v1362
      %v1496 = vunpack.c.l.b16 %v1363
      %v1497 = vunpack.c.h.b16 %v1363
      %v1498 = vunpack.c.l.b16 %v1364
      %v1499 = vunpack.c.h.b16 %v1364
      %v1500 = vunpack.c.l.b16 %v1365
      %v1501 = vunpack.c.h.b16 %v1365
      %v1502 = vunpack.c.l.b16 %v1366
      %v1503 = vunpack.c.h.b16 %v1366
      %v1504 = vunpack.c.l.b16 %v1367
      %v1505 = vunpack.c.h.b16 %v1367
      %v1506 = vunpack.c.l.b16 %v1368
      %v1507 = vunpack.c.h.b16 %v1368
      %v1508 = vunpack.c.l.b16 %v1369
      %v1509 = vunpack.c.h.b16 %v1369
      %v1510 = vunpack.c.l.b16 %v1370
      %v1511 = vunpack.c.h.b16 %v1370
      %v1512 = vunpack.c.l.b16 %v1371
      %v1513 = vunpack.c.h.b16 %v1371
      %v1514 = vunpack.c.l.b16 %v1372
      %v1515 = vunpack.c.h.b16 %v1372
      %v1516 = vunpack.c.l.b16 %v1373
      %v1517 = vunpack.c.h.b16 %v1373
      %v1518 = vunpack.c.l.b16 %v1374
      %v1519 = vunpack.c.h.b16 %v1374
      %v1520 = vunpack.c.l.b16 %v1375
      %v1521 = vunpack.c.h.b16 %v1375
      %v1522 = vunpack.c.l.b16 %v1376
      %v1523 = vunpack.c.h.b16 %v1376
      %v1524 = vunpack.c.l.b16 %v1377
      %v1525 = vunpack.c.h.b16 %v1377
      %v1526 = vunpack.c.l.b16 %v1378
      %v1527 = vunpack.c.h.b16 %v1378
      %v1528 = vunpack.c.l.b16 %v1379
      %v1529 = vunpack.c.h.b16 %v1379
      %v1530 = vunpack.c.l.b16 %v1380
      %v1531 = vunpack.c.h.b16 %v1380
      %v1532 = vunpack.c.l.b16 %v1381
      %v1533 = vunpack.c.h.b16 %v1381
      %v1534 = vunpack.c.l.b16 %v1382
      %v1535 = vunpack.c.h.b16 %v1382
      %v1536 = vunpack.c.l.b16 %v1383
      %v1537 = vunpack.c.h.b16 %v1383
      %v1538 = vunpack.c.l.b16 %v1384
      %v1539 = vunpack.c.h.b16 %v1384
      %v1540 = vunpack.c.l.b16 %v1385
      %v1541 = vunpack.c.h.b16 %v1385
      %v1542 = vunpack.c.l.b16 %v1386
      %v1543 = vunpack.c.h.b16 %v1386
      %v1544 = vunpack.c.l.b16 %v1387
      %v1545 = vunpack.c.h.b16 %v1387
      %v1546 = vunpack.c.l.b16 %v1388
      %v1547 = vunpack.c.h.b16 %v1388
      %v1548 = vunpack.c.l.b16 %v1389
      %v1549 = vunpack.c.h.b16 %v1389
      %v1550 = vunpack.c.l.b16 %v1390
      %v1551 = vunpack.c.h.b16 %v1390
      %v1552 = vunpack.c.l.b16 %v1391
      %v1553 = vunpack.c.h.b16 %v1391
      %v1554 = vunpack.c.l.b16 %v1392
      %v1555 = vunpack.c.h.b16 %v1392
      %v1556 = vunpack.c.l.b16 %v1393
      %v1557 = vunpack.c.h.b16 %v1393
      %v1558 = vunpack.c.l.b16 %v1394
      %v1559 = vunpack.c.h.b16 %v1394
      %v1560 = vunpack.c.l.b16 %v1395
      %v1561 = vunpack.c.h.b16 %v1395
      %v1562 = vunpack.c.l.b16 %v1396
      %v1563 = vunpack.c.h.b16 %v1396
      %v1564 = vunpack.c.l.b16 %v1397
      %v1565 = vunpack.c.h.b16 %v1397
      %v1566 = vunpack.c.l.b16 %v1398
      %v1567 = vunpack.c.h.b16 %v1398
      %v1568 = vunpack.c.l.b16 %v1399
      %v1569 = vunpack.c.h.b16 %v1399
      %v1570 = vunpack.c.l.b16 %v1400
      %v1571 = vunpack.c.h.b16 %v1400
      %v1572 = vunpack.c.l.b16 %v1401
      %v1573 = vunpack.c.h.b16 %v1401
      %v1574 = vunpack.c.l.b16 %v1402
      %v1575 = vunpack.c.h.b16 %v1402
      %v1576 = vunpack.c.l.b16 %v1403
      %v1577 = vunpack.c.h.b16 %v1403
      %v1578 = vunpack.c.l.b16 %v1404
      %v1579 = vunpack.c.h.b16 %v1404
      %v1580 = vunpack.c.l.b16 %v1405
      %v1581 = vunpack.c.h.b16 %v1405
      %v1582 = vunpack.c.l.b16 %v1406
      %v1583 = vunpack.c.h.b16 %v1406
      %v1584 = vunpack.c.l.b16 %v1407
      %v1585 = vunpack.c.h.b16 %v1407
      %v1586 = vunpack.c.l.b16 %v1408
      %v1587 = vunpack.c.h.b16 %v1408
      %v1588 = vunpack.c.l.b16 %v1409
      %v1589 = vunpack.c.h.b16 %v1409
      %v1590 = vunpack.c.l.b16 %v1410
      %v1591 = vunpack.c.h.b16 %v1410
      %v1592 = vunpack.c.l.b16 %v1411
      %v1593 = vunpack.c.h.b16 %v1411
      %v1594 = vunpack.c.l.b16 %v1412
      %v1595 = vunpack.c.h.b16 %v1412
      %v1596 = vunpack.c.l.b16 %v1413
      %v1597 = vunpack.c.h.b16 %v1413
      %v1598 = vunpack.c.l.b16 %v1414
      %v1599 = vunpack.c.h.b16 %v1414
      %v1600 = vunpack.c.l.b16 %v1415
      %v1601 = vunpack.c.h.b16 %v1415
      %v1602 = vunpack.c.l.b16 %v1416
      %v1603 = vunpack.c.h.b16 %v1416
      %v1604 = vunpack.c.l.b16 %v1417
      %v1605 = vunpack.c.h.b16 %v1417
      %v1606 = vunpack.c.l.b16 %v1418
      %v1607 = vunpack.c.h.b16 %v1418
      %v1608 = vunpack.c.l.b16 %v1419
      %v1609 = vunpack.c.h.b16 %v1419
      %v1610 = vunpack.c.l.b16 %v1420
      %v1611 = vunpack.c.h.b16 %v1420
      %v1612 = vunpack.c.l.b16 %v1421
      %v1613 = vunpack.c.h.b16 %v1421
      %v1614 = vpack.c.b16 %v1486, %v1486
      %v1615 = vpack.c.b16 %v1487, %v1487
      %v1616 = vpack.c.b16 %v1488, %v1488
      %v1617 = vpack.c.b16 %v1489, %v1489
      %v1618 = vpack.c.b16 %v1490, %v1490
      %v1619 = vpack.c.b16 %v1491, %v1491
      %v1620 = vpack.c.b16 %v1492, %v1492
      %v1621 = vpack.c.b16 %v1493, %v1493
      %v1622 = vpack.c.b16 %v1494, %v1494
      %v1623 = vpack.c.b16 %v1495, %v1495
      %v1624 = vpack.c.b16 %v1496, %v1496
      %v1625 = vpack.c.b16 %v1497, %v1497
      %v1626 = vpack.c.b16 %v1498, %v1498
      %v1627 = vpack.c.b16 %v1499, %v1499
      %v1628 = vpack.c.b16 %v1500, %v1500
      %v1629 = vpack.c.b16 %v1501, %v1501
      %v1630 = vpack.c.b16 %v1502, %v1502
      %v1631 = vpack.c.b16 %v1503, %v1503
      %v1632 = vpack.c.b16 %v1504, %v1504
      %v1633 = vpack.c.b16 %v1505, %v1505
      %v1634 = vpack.c.b16 %v1506, %v1506
      %v1635 = vpack.c.b16 %v1507, %v1507
      %v1636 = vpack.c.b16 %v1508, %v1508
      %v1637 = vpack.c.b16 %v1509, %v1509
      %v1638 = vpack.c.b16 %v1510, %v1510
      %v1639 = vpack.c.b16 %v1511, %v1511
      %v1640 = vpack.c.b16 %v1512, %v1512
      %v1641 = vpack.c.b16 %v1513, %v1513
      %v1642 = vpack.c.b16 %v1514, %v1514
      %v1643 = vpack.c.b16 %v1515, %v1515
      %v1644 = vpack.c.b16 %v1516, %v1516
      %v1645 = vpack.c.b16 %v1517, %v1517
      %v1646 = vpack.c.b16 %v1518, %v1518
      %v1647 = vpack.c.b16 %v1519, %v1519
      %v1648 = vpack.c.b16 %v1520, %v1520
      %v1649 = vpack.c.b16 %v1521, %v1521
      %v1650 = vpack.c.b16 %v1522, %v1522
      %v1651 = vpack.c.b16 %v1523, %v1523
      %v1652 = vpack.c.b16 %v1524, %v1524
      %v1653 = vpack.c.b16 %v1525, %v1525
      %v1654 = vpack.c.b16 %v1526, %v1526
      %v1655 = vpack.c.b16 %v1527, %v1527
      %v1656 = vpack.c.b16 %v1528, %v1528
      %v1657 = vpack.c.b16 %v1529, %v1529
      %v1658 = vpack.c.b16 %v1530, %v1530
      %v1659 = vpack.c.b16 %v1531, %v1531
      %v1660 = vpack.c.b16 %v1532, %v1532
      %v1661 = vpack.c.b16 %v1533, %v1533
      %v1662 = vpack.c.b16 %v1534, %v1534
      %v1663 = vpack.c.b16 %v1535, %v1535
      %v1664 = vpack.c.b16 %v1536, %v1536
      %v1665 = vpack.c.b16 %v1537, %v1537
      %v1666 = vpack.c.b16 %v1538, %v1538
      %v1667 = vpack.c.b16 %v1539, %v1539
      %v1668 = vpack.c.b16 %v1540, %v1540
      %v1669 = vpack.c.b16 %v1541, %v1541
      %v1670 = vpack.c.b16 %v1542, %v1542
      %v1671 = vpack.c.b16 %v1543, %v1543
      %v1672 = vpack.c.b16 %v1544, %v1544
      %v1673 = vpack.c.b16 %v1545, %v1545
      %v1674 = vpack.c.b16 %v1546, %v1546
      %v1675 = vpack.c.b16 %v1547, %v1547
      %v1676 = vpack.c.b16 %v1548, %v1548
      %v1677 = vpack.c.b16 %v1549, %v1549
      %v1678 = vpack.c.b16 %v1550, %v1550
      %v1679 = vpack.c.b16 %v1551, %v1551
      %v1680 = vpack.c.b16 %v1552, %v1552
      %v1681 = vpack.c.b16 %v1553, %v1553
      %v1682 = vpack.c.b16 %v1554, %v1554
      %v1683 = vpack.c.b16 %v1555, %v1555
      %v1684 = vpack.c.b16 %v1556, %v1556
      %v1685 = vpack.c.b16 %v1557, %v1557
      %v1686 = vpack.c.b16 %v1558, %v1558
      %v1687 = vpack.c.b16 %v1559, %v1559
      %v1688 = vpack.c.b16 %v1560, %v1560
      %v1689 = vpack.c.b16 %v1561, %v1561
      %v1690 = vpack.c.b16 %v1562, %v1562
      %v1691 = vpack.c.b16 %v1563, %v1563
      %v1692 = vpack.c.b16 %v1564, %v1564
      %v1693 = vpack.c.b16 %v1565, %v1565
      %v1694 = vpack.c.b16 %v1566, %v1566
      %v1695 = vpack.c.b16 %v1567, %v1567
      %v1696 = vpack.c.b16 %v1568, %v1568
      %v1697 = vpack.c.b16 %v1569, %v1569
      %v1698 = vpack.c.b16 %v1570, %v1570
      %v1699 = vpack.c.b16 %v1571, %v1571
      %v1700 = vpack.c.b16 %v1572, %v1572
      %v1701 = vpack.c.b16 %v1573, %v1573
      %v1702 = vpack.c.b16 %v1574, %v1574
      %v1703 = vpack.c.b16 %v1575, %v1575
      %v1704 = vpack.c.b16 %v1576, %v1576
      %v1705 = vpack.c.b16 %v1577, %v1577
      %v1706 = vpack.c.b16 %v1578, %v1578
      %v1707 = vpack.c.b16 %v1579, %v1579
      %v1708 = vpack.c.b16 %v1580, %v1580
      %v1709 = vpack.c.b16 %v1581, %v1581
      %v1710 = vpack.c.b16 %v1582, %v1582
      %v1711 = vpack.c.b16 %v1583, %v1583
      %v1712 = vpack.c.b16 %v1584, %v1584
      %v1713 = vpack.c.b16 %v1585, %v1585
      %v1714 = vpack.c.b16 %v1586, %v1586
      %v1715 = vpack.c.b16 %v1587, %v1587
      %v1716 = vpack.c.b16 %v1588, %v1588
      %v1717 = vpack.c.b16 %v1589, %v1589
      %v1718 = vpack.c.b16 %v1590, %v1590
      %v1719 = vpack.c.b16 %v1591, %v1591
      %v1720 = vpack.c.b16 %v1592, %v1592
      %v1721 = vpack.c.b16 %v1593, %v1593
      %v1722 = vpack.c.b16 %v1594, %v1594
      %v1723 = vpack.c.b16 %v1595, %v1595
      %v1724 = vpack.c.b16 %v1596, %v1596
      %v1725 = vpack.c.b16 %v1597, %v1597
      %v1726 = vpack.c.b16 %v1598, %v1598
      %v1727 = vpack.c.b16 %v1599, %v1599
      %v1728 = vpack.c.b16 %v1600, %v1600
      %v1729 = vpack.c.b16 %v1601, %v1601
      %v1730 = vpack.c.b16 %v1602, %v1602
      %v1731 = vpack.c.b16 %v1603, %v1603
      %v1732 = vpack.c.b16 %v1604, %v1604
      %v1733 = vpack.c.b16 %v1605, %v1605
      %v1734 = vpack.c.b16 %v1606, %v1606
      %v1735 = vpack.c.b16 %v1607, %v1607
      %v1736 = vpack.c.b16 %v1608, %v1608
      %v1737 = vpack.c.b16 %v1609, %v1609
      %v1738 = vpack.c.b16 %v1610, %v1610
      %v1739 = vpack.c.b16 %v1611, %v1611
      %v1740 = vpack.c.b16 %v1612, %v1612
      %v1741 = vpack.c.b16 %v1613, %v1613
      %1870 = vst [vmem:[%s145] sm:$0xf] %v1614
      %1871 = vst [vmem:[%s145 + $0x4] sm:$0xf] %v1615
      %1872 = vst [vmem:[%s145 + $0x8] sm:$0xf] %v1616
      %1873 = vst [vmem:[%s145 + $0xc] sm:$0xf] %v1617
      %1874 = vst [vmem:[%s145 + $0x10] sm:$0xf] %v1618
      %1875 = vst [vmem:[%s145 + $0x14] sm:$0xf] %v1619
      %1876 = vst [vmem:[%s145 + $0x18] sm:$0xf] %v1620
      %1877 = vst [vmem:[%s145 + $0x1c] sm:$0xf] %v1621
      %1878 = vst [vmem:[%s145 + $0x20] sm:$0xf] %v1622
      %1879 = vst [vmem:[%s145 + $0x24] sm:$0xf] %v1623
      %1880 = vst [vmem:[%s145 + $0x28] sm:$0xf] %v1624
      %1881 = vst [vmem:[%s145 + $0x2c] sm:$0xf] %v1625
      %1882 = vst [vmem:[%s145 + $0x30] sm:$0xf] %v1626
      %1883 = vst [vmem:[%s145 + $0x34] sm:$0xf] %v1627
      %1884 = vst [vmem:[%s145 + $0x38] sm:$0xf] %v1628
      %1885 = vst [vmem:[%s145 + $0x3c] sm:$0xf] %v1629
      %1886 = vst [vmem:[%s145 + $0x40] sm:$0xf] %v1630
      %1887 = vst [vmem:[%s145 + $0x44] sm:$0xf] %v1631
      %1888 = vst [vmem:[%s145 + $0x48] sm:$0xf] %v1632
      %1889 = vst [vmem:[%s145 + $0x4c] sm:$0xf] %v1633
      %1890 = vst [vmem:[%s145 + $0x50] sm:$0xf] %v1634
      %1891 = vst [vmem:[%s145 + $0x54] sm:$0xf] %v1635
      %1892 = vst [vmem:[%s145 + $0x58] sm:$0xf] %v1636
      %1893 = vst [vmem:[%s145 + $0x5c] sm:$0xf] %v1637
      %1894 = vst [vmem:[%s145 + $0x60] sm:$0xf] %v1638
      %1895 = vst [vmem:[%s145 + $0x64] sm:$0xf] %v1639
      %1896 = vst [vmem:[%s145 + $0x68] sm:$0xf] %v1640
      %1897 = vst [vmem:[%s145 + $0x6c] sm:$0xf] %v1641
      %1898 = vst [vmem:[%s145 + $0x70] sm:$0xf] %v1642
      %1899 = vst [vmem:[%s145 + $0x74] sm:$0xf] %v1643
      %1900 = vst [vmem:[%s145 + $0x78] sm:$0xf] %v1644
      %1901 = vst [vmem:[%s145 + $0x7c] sm:$0xf] %v1645
      %1902 = vst [vmem:[%s145 + $0x80] sm:$0xf] %v1646
      %1903 = vst [vmem:[%s145 + $0x84] sm:$0xf] %v1647
      %1904 = vst [vmem:[%s145 + $0x88] sm:$0xf] %v1648
      %1905 = vst [vmem:[%s145 + $0x8c] sm:$0xf] %v1649
      %1906 = vst [vmem:[%s145 + $0x90] sm:$0xf] %v1650
      %1907 = vst [vmem:[%s145 + $0x94] sm:$0xf] %v1651
      %1908 = vst [vmem:[%s145 + $0x98] sm:$0xf] %v1652
      %1909 = vst [vmem:[%s145 + $0x9c] sm:$0xf] %v1653
      %1910 = vst [vmem:[%s145 + $0xa0] sm:$0xf] %v1654
      %1911 = vst [vmem:[%s145 + $0xa4] sm:$0xf] %v1655
      %1912 = vst [vmem:[%s145 + $0xa8] sm:$0xf] %v1656
      %1913 = vst [vmem:[%s145 + $0xac] sm:$0xf] %v1657
      %1914 = vst [vmem:[%s145 + $0xb0] sm:$0xf] %v1658
      %1915 = vst [vmem:[%s145 + $0xb4] sm:$0xf] %v1659
      %1916 = vst [vmem:[%s145 + $0xb8] sm:$0xf] %v1660
      %1917 = vst [vmem:[%s145 + $0xbc] sm:$0xf] %v1661
      %1918 = vst [vmem:[%s145 + $0xc0] sm:$0xf] %v1662
      %1919 = vst [vmem:[%s145 + $0xc4] sm:$0xf] %v1663
      %1920 = vst [vmem:[%s145 + $0xc8] sm:$0xf] %v1664
      %1921 = vst [vmem:[%s145 + $0xcc] sm:$0xf] %v1665
      %1922 = vst [vmem:[%s145 + $0xd0] sm:$0xf] %v1666
      %1923 = vst [vmem:[%s145 + $0xd4] sm:$0xf] %v1667
      %1924 = vst [vmem:[%s145 + $0xd8] sm:$0xf] %v1668
      %1925 = vst [vmem:[%s145 + $0xdc] sm:$0xf] %v1669
      %1926 = vst [vmem:[%s145 + $0xe0] sm:$0xf] %v1670
      %1927 = vst [vmem:[%s145 + $0xe4] sm:$0xf] %v1671
      %1928 = vst [vmem:[%s145 + $0xe8] sm:$0xf] %v1672
      %1929 = vst [vmem:[%s145 + $0xec] sm:$0xf] %v1673
      %1930 = vst [vmem:[%s145 + $0xf0] sm:$0xf] %v1674
      %1931 = vst [vmem:[%s145 + $0xf4] sm:$0xf] %v1675
      %1932 = vst [vmem:[%s145 + $0xf8] sm:$0xf] %v1676
      %1933 = vst [vmem:[%s145 + $0xfc] sm:$0xf] %v1677
      %1934 = vst [vmem:[%s145 + $0x100] sm:$0xf] %v1678
      %1935 = vst [vmem:[%s145 + $0x104] sm:$0xf] %v1679
      %1936 = vst [vmem:[%s145 + $0x108] sm:$0xf] %v1680
      %1937 = vst [vmem:[%s145 + $0x10c] sm:$0xf] %v1681
      %1938 = vst [vmem:[%s145 + $0x110] sm:$0xf] %v1682
      %1939 = vst [vmem:[%s145 + $0x114] sm:$0xf] %v1683
      %1940 = vst [vmem:[%s145 + $0x118] sm:$0xf] %v1684
      %1941 = vst [vmem:[%s145 + $0x11c] sm:$0xf] %v1685
      %1942 = vst [vmem:[%s145 + $0x120] sm:$0xf] %v1686
      %1943 = vst [vmem:[%s145 + $0x124] sm:$0xf] %v1687
      %1944 = vst [vmem:[%s145 + $0x128] sm:$0xf] %v1688
      %1945 = vst [vmem:[%s145 + $0x12c] sm:$0xf] %v1689
      %1946 = vst [vmem:[%s145 + $0x130] sm:$0xf] %v1690
      %1947 = vst [vmem:[%s145 + $0x134] sm:$0xf] %v1691
      %1948 = vst [vmem:[%s145 + $0x138] sm:$0xf] %v1692
      %1949 = vst [vmem:[%s145 + $0x13c] sm:$0xf] %v1693
      %1950 = vst [vmem:[%s145 + $0x140] sm:$0xf] %v1694
      %1951 = vst [vmem:[%s145 + $0x144] sm:$0xf] %v1695
      %1952 = vst [vmem:[%s145 + $0x148] sm:$0xf] %v1696
      %1953 = vst [vmem:[%s145 + $0x14c] sm:$0xf] %v1697
      %1954 = vst [vmem:[%s145 + $0x150] sm:$0xf] %v1698
      %1955 = vst [vmem:[%s145 + $0x154] sm:$0xf] %v1699
      %1956 = vst [vmem:[%s145 + $0x158] sm:$0xf] %v1700
      %1957 = vst [vmem:[%s145 + $0x15c] sm:$0xf] %v1701
      %1958 = vst [vmem:[%s145 + $0x160] sm:$0xf] %v1702
      %1959 = vst [vmem:[%s145 + $0x164] sm:$0xf] %v1703
      %1960 = vst [vmem:[%s145 + $0x168] sm:$0xf] %v1704
      %1961 = vst [vmem:[%s145 + $0x16c] sm:$0xf] %v1705
      %1962 = vst [vmem:[%s145 + $0x170] sm:$0xf] %v1706
      %1963 = vst [vmem:[%s145 + $0x174] sm:$0xf] %v1707
      %1964 = vst [vmem:[%s145 + $0x178] sm:$0xf] %v1708
      %1965 = vst [vmem:[%s145 + $0x17c] sm:$0xf] %v1709
      %1966 = vst [vmem:[%s145 + $0x180] sm:$0xf] %v1710
      %1967 = vst [vmem:[%s145 + $0x184] sm:$0xf] %v1711
      %1968 = vst [vmem:[%s145 + $0x188] sm:$0xf] %v1712
      %1969 = vst [vmem:[%s145 + $0x18c] sm:$0xf] %v1713
      %1970 = vst [vmem:[%s145 + $0x190] sm:$0xf] %v1714
      %1971 = vst [vmem:[%s145 + $0x194] sm:$0xf] %v1715
      %1972 = vst [vmem:[%s145 + $0x198] sm:$0xf] %v1716
      %1973 = vst [vmem:[%s145 + $0x19c] sm:$0xf] %v1717
      %1974 = vst [vmem:[%s145 + $0x1a0] sm:$0xf] %v1718
      %1975 = vst [vmem:[%s145 + $0x1a4] sm:$0xf] %v1719
      %1976 = vst [vmem:[%s145 + $0x1a8] sm:$0xf] %v1720
      %1977 = vst [vmem:[%s145 + $0x1ac] sm:$0xf] %v1721
      %1978 = vst [vmem:[%s145 + $0x1b0] sm:$0xf] %v1722
      %1979 = vst [vmem:[%s145 + $0x1b4] sm:$0xf] %v1723
      %1980 = vst [vmem:[%s145 + $0x1b8] sm:$0xf] %v1724
      %1981 = vst [vmem:[%s145 + $0x1bc] sm:$0xf] %v1725
      %1982 = vst [vmem:[%s145 + $0x1c0] sm:$0xf] %v1726
      %1983 = vst [vmem:[%s145 + $0x1c4] sm:$0xf] %v1727
      %1984 = vst [vmem:[%s145 + $0x1c8] sm:$0xf] %v1728
      %1985 = vst [vmem:[%s145 + $0x1cc] sm:$0xf] %v1729
      %1986 = vst [vmem:[%s145 + $0x1d0] sm:$0xf] %v1730
      %1987 = vst [vmem:[%s145 + $0x1d4] sm:$0xf] %v1731
      %1988 = vst [vmem:[%s145 + $0x1d8] sm:$0xf] %v1732
      %1989 = vst [vmem:[%s145 + $0x1dc] sm:$0xf] %v1733
      %1990 = vst [vmem:[%s145 + $0x1e0] sm:$0xf] %v1734
      %1991 = vst [vmem:[%s145 + $0x1e4] sm:$0xf] %v1735
      %1992 = vst [vmem:[%s145 + $0x1e8] sm:$0xf] %v1736
      %1993 = vst [vmem:[%s145 + $0x1ec] sm:$0xf] %v1737
      %1994 = vst [vmem:[%s145 + $0x1f0] sm:$0xf] %v1738
      %1995 = vst [vmem:[%s145 + $0x1f4] sm:$0xf] %v1739
      %1996 = vst [vmem:[%s145 + $0x1f8] sm:$0xf] %v1740
      %1997 = vst [vmem:[%s145 + $0x1fc] sm:$0xf] %v1741
      %s1998 = smul.u32 128, %s13
      %p1999 = scmp.lt.s32.totalorder %s1998, 255
      %s2000 = scalar_select %p1999, %s1998, 255
      %s2001 = smul.addr %s2000, 4
      %s2002 = scalar_lea.vmem %s2, %s2001
      // Predicated region
      $region29: #{discriminator_stage_1.5} parent=27 // pred_check
        %p2003 = pneg %p78
      $region30: #{discriminator_stage_1.5} parent=27 // pred_check_branch
        %2005 = sbr.rel (%p2003) target = $region32
      $region31: #{discriminator_stage_1.5} parent=27 // pred_region
        %s2006 = smul.u32 128, %s13
      $region32: #{discriminator_stage_1.5} parent=27 // pred_fallthru
        _
    $region28: #{discriminator_stage_1.5} parent=5 // pred_fallthru
      _
    %p2007 = scmp.le.s32.totalorder 2, %s8
    // Predicated region
    $region33: #{discriminator_stage_1.5} parent=5 // pred_check
      %p2008 = pneg %p2007
    $region34: #{discriminator_stage_1.5} parent=5 // pred_check_branch
      %2010 = sbr.rel (%p2008) target = $region36
    $region35: #{discriminator_stage_1.5} parent=5 // pred_region
      %s2011 = ssub.s32 %s8, 2
      // Predicated region
      $region37: #{discriminator_stage_1.5} parent=35 // pred_check
        %p2012 = pneg %p84
      $region38: #{discriminator_stage_1.5} parent=35 // pred_check_branch
        %2014 = sbr.rel (%p2012) target = $region40
      $region39: #{discriminator_stage_1.5} parent=35 // pred_region
        %s2015 = smul.u32 128, %s14
        %p2016 = scmp.lt.s32.totalorder %s2015, 255
        %s2017 = scalar_select %p2016, %s2015, 255
        %s2018 = smul.addr %s2017, 4
        %s2019 = scalar_lea.vmem %s2, %s2018
      $region40: #{discriminator_stage_1.5} parent=35 // pred_fallthru
        _
    $region36: #{discriminator_stage_1.5} parent=5 // pred_fallthru
      _
  $region6: #{discriminator_stage_1.5} parent=0 // loop_footer
    %s12 = sadd.s32 1, %s8
  $region7: #{discriminator_stage_1.5} parent=0 // loop_footer_branch
    %7 = sbr.rel target = $region3
  $region8: #{discriminator_stage_1.5} parent=0 // loop_exit
    _

// kernel: tile.22
$region0: #{tile.22}
  #allocation0 [shape = 's32[1]{0}', space=sflag, size = 0x4, scoped, tag = 'scoped memory for tile.22']
  %s0 = inlined_call_operand.<no memory space> [shape: f32[], index: 0, kind: input, shape index: {}]
  %s1 = inlined_call_operand.vmem [shape: f32[1,128], index: 1, kind: output, shape index: {}]
  %v2 = vstv %s0
  %3 = vst [vmem:[%s1] sm:$0x1] %v2

// kernel: discriminator_stage_1.6
$region0: #{discriminator_stage_1.6}
  #allocation0 [shape = 'u32[]', space=smem, size = 0x4, offset = 0x4, fixed_abs, tag = 'smem constant byte address 0x4 - core index']
  #allocation1 [shape = 'u32[144,128]{1,0:T(1,128)}', space=vmem, size = 0x12000, scoped, tag = 'internal scratch']
  %s0 = inlined_call_operand.vmem [shape: bf16[512,128], index: 0, kind: input, shape index: {}]
  %s1 = inlined_call_operand.vmem [shape: f32[1,128], index: 1, kind: input, shape index: {}]
  %s2 = inlined_call_operand.vmem [shape: f32[1,128], index: 2, kind: input, shape index: {}]
  %s3 = inlined_call_operand.vmem [shape: bf16[128,128], index: 3, kind: input, shape index: {}]
  %s4 = inlined_call_operand.vmem [shape: bf16[512,128], index: 4, kind: output, shape index: {0}]
  %s5 = inlined_call_operand.vmem [shape: f32[8,128], index: 5, kind: output, shape index: {1}]
  %s6 = inlined_call_operand.vmem [shape: f32[8,128], index: 6, kind: output, shape index: {2}]
  %7 = xla_tuple %s4, %s5, %s6
  %s8 = sld [smem:[#allocation0]]
  $region42: #{discriminator_stage_1.6} parent=0
    _
  %s10 = ssub.s32 1, %s8
  %s11 = scalar_select 0, %s10, %s8
  // Predicated region
  $region2: #{discriminator_stage_1.6} parent=0 // pred_check
    _
  $region3: #{discriminator_stage_1.6} parent=0 // pred_check_branch
    %13 = sbr.rel (0) target = $region5
  $region4: #{discriminator_stage_1.6} parent=0 // pred_region
    _
  $region5: #{discriminator_stage_1.6} parent=0 // pred_fallthru
    _
  // Predicated region
  $region6: #{discriminator_stage_1.6} parent=0 // pred_check
    _
  $region7: #{discriminator_stage_1.6} parent=0 // pred_check_branch
    %15 = sbr.rel (0) target = $region9
  $region8: #{discriminator_stage_1.6} parent=0 // pred_region
    _
  $region9: #{discriminator_stage_1.6} parent=0 // pred_fallthru
    _
  // Predicated region
  $region10: #{discriminator_stage_1.6} parent=0 // pred_check
    _
  $region11: #{discriminator_stage_1.6} parent=0 // pred_check_branch
    %17 = sbr.rel (0) target = $region13
  $region12: #{discriminator_stage_1.6} parent=0 // pred_region
    _
  $region13: #{discriminator_stage_1.6} parent=0 // pred_fallthru
    _
  // Predicated region
  $region14: #{discriminator_stage_1.6} parent=0 // pred_check
    _
  $region15: #{discriminator_stage_1.6} parent=0 // pred_check_branch
    %19 = sbr.rel (0) target = $region17
  $region16: #{discriminator_stage_1.6} parent=0 // pred_region
    _
  $region17: #{discriminator_stage_1.6} parent=0 // pred_fallthru
    _
  %v21 = vld [vmem:[%s0] sm:$0xf]
  %v22 = vld [vmem:[%s0 + $0x4] sm:$0xf]
  %v23 = vld [vmem:[%s0 + $0x8] sm:$0xf]
  %v24 = vld [vmem:[%s0 + $0xc] sm:$0xf]
  %v25 = vld [vmem:[%s0 + $0x10] sm:$0xf]
  %v26 = vld [vmem:[%s0 + $0x14] sm:$0xf]
  %v27 = vld [vmem:[%s0 + $0x18] sm:$0xf]
  %v28 = vld [vmem:[%s0 + $0x1c] sm:$0xf]
  %v29 = vld [vmem:[%s0 + $0x20] sm:$0xf]
  %v30 = vld [vmem:[%s0 + $0x24] sm:$0xf]
  %v31 = vld [vmem:[%s0 + $0x28] sm:$0xf]
  %v32 = vld [vmem:[%s0 + $0x2c] sm:$0xf]
  %v33 = vld [vmem:[%s0 + $0x30] sm:$0xf]
  %v34 = vld [vmem:[%s0 + $0x34] sm:$0xf]
  %v35 = vld [vmem:[%s0 + $0x38] sm:$0xf]
  %v36 = vld [vmem:[%s0 + $0x3c] sm:$0xf]
  %v37 = vld [vmem:[%s0 + $0x40] sm:$0xf]
  %v38 = vld [vmem:[%s0 + $0x44] sm:$0xf]
  %v39 = vld [vmem:[%s0 + $0x48] sm:$0xf]
  %v40 = vld [vmem:[%s0 + $0x4c] sm:$0xf]
  %v41 = vld [vmem:[%s0 + $0x50] sm:$0xf]
  %v42 = vld [vmem:[%s0 + $0x54] sm:$0xf]
  %v43 = vld [vmem:[%s0 + $0x58] sm:$0xf]
  %v44 = vld [vmem:[%s0 + $0x5c] sm:$0xf]
  %v45 = vld [vmem:[%s0 + $0x60] sm:$0xf]
  %v46 = vld [vmem:[%s0 + $0x64] sm:$0xf]
  %v47 = vld [vmem:[%s0 + $0x68] sm:$0xf]
  %v48 = vld [vmem:[%s0 + $0x6c] sm:$0xf]
  %v49 = vld [vmem:[%s0 + $0x70] sm:$0xf]
  %v50 = vld [vmem:[%s0 + $0x74] sm:$0xf]
  %v51 = vld [vmem:[%s0 + $0x78] sm:$0xf]
  %v52 = vld [vmem:[%s0 + $0x7c] sm:$0xf]
  %v53 = vld [vmem:[%s0 + $0x80] sm:$0xf]
  %v54 = vld [vmem:[%s0 + $0x84] sm:$0xf]
  %v55 = vld [vmem:[%s0 + $0x88] sm:$0xf]
  %v56 = vld [vmem:[%s0 + $0x8c] sm:$0xf]
  %v57 = vld [vmem:[%s0 + $0x90] sm:$0xf]
  %v58 = vld [vmem:[%s0 + $0x94] sm:$0xf]
  %v59 = vld [vmem:[%s0 + $0x98] sm:$0xf]
  %v60 = vld [vmem:[%s0 + $0x9c] sm:$0xf]
  %v61 = vld [vmem:[%s0 + $0xa0] sm:$0xf]
  %v62 = vld [vmem:[%s0 + $0xa4] sm:$0xf]
  %v63 = vld [vmem:[%s0 + $0xa8] sm:$0xf]
  %v64 = vld [vmem:[%s0 + $0xac] sm:$0xf]
  %v65 = vld [vmem:[%s0 + $0xb0] sm:$0xf]
  %v66 = vld [vmem:[%s0 + $0xb4] sm:$0xf]
  %v67 = vld [vmem:[%s0 + $0xb8] sm:$0xf]
  %v68 = vld [vmem:[%s0 + $0xbc] sm:$0xf]
  %v69 = vld [vmem:[%s0 + $0xc0] sm:$0xf]
  %v70 = vld [vmem:[%s0 + $0xc4] sm:$0xf]
  %v71 = vld [vmem:[%s0 + $0xc8] sm:$0xf]
  %v72 = vld [vmem:[%s0 + $0xcc] sm:$0xf]
  %v73 = vld [vmem:[%s0 + $0xd0] sm:$0xf]
  %v74 = vld [vmem:[%s0 + $0xd4] sm:$0xf]
  %v75 = vld [vmem:[%s0 + $0xd8] sm:$0xf]
  %v76 = vld [vmem:[%s0 + $0xdc] sm:$0xf]
  %v77 = vld [vmem:[%s0 + $0xe0] sm:$0xf]
  %v78 = vld [vmem:[%s0 + $0xe4] sm:$0xf]
  %v79 = vld [vmem:[%s0 + $0xe8] sm:$0xf]
  %v80 = vld [vmem:[%s0 + $0xec] sm:$0xf]
  %v81 = vld [vmem:[%s0 + $0xf0] sm:$0xf]
  %v82 = vld [vmem:[%s0 + $0xf4] sm:$0xf]
  %v83 = vld [vmem:[%s0 + $0xf8] sm:$0xf]
  %v84 = vld [vmem:[%s0 + $0xfc] sm:$0xf]
  %v85 = vunpack.c.l.bf16 %v21
  %v86 = vunpack.c.l.bf16 %v22
  %v87 = vunpack.c.l.bf16 %v23
  %v88 = vunpack.c.l.bf16 %v24
  %v89 = vunpack.c.l.bf16 %v25
  %v90 = vunpack.c.l.bf16 %v26
  %v91 = vunpack.c.l.bf16 %v27
  %v92 = vunpack.c.l.bf16 %v28
  %v93 = vunpack.c.l.bf16 %v29
  %v94 = vunpack.c.l.bf16 %v30
  %v95 = vunpack.c.l.bf16 %v31
  %v96 = vunpack.c.l.bf16 %v32
  %v97 = vunpack.c.l.bf16 %v33
  %v98 = vunpack.c.l.bf16 %v34
  %v99 = vunpack.c.l.bf16 %v35
  %v100 = vunpack.c.l.bf16 %v36
  %v101 = vunpack.c.l.bf16 %v37
  %v102 = vunpack.c.l.bf16 %v38
  %v103 = vunpack.c.l.bf16 %v39
  %v104 = vunpack.c.l.bf16 %v40
  %v105 = vunpack.c.l.bf16 %v41
  %v106 = vunpack.c.l.bf16 %v42
  %v107 = vunpack.c.l.bf16 %v43
  %v108 = vunpack.c.l.bf16 %v44
  %v109 = vunpack.c.l.bf16 %v45
  %v110 = vunpack.c.l.bf16 %v46
  %v111 = vunpack.c.l.bf16 %v47
  %v112 = vunpack.c.l.bf16 %v48
  %v113 = vunpack.c.l.bf16 %v49
  %v114 = vunpack.c.l.bf16 %v50
  %v115 = vunpack.c.l.bf16 %v51
  %v116 = vunpack.c.l.bf16 %v52
  %v117 = vunpack.c.l.bf16 %v53
  %v118 = vunpack.c.l.bf16 %v54
  %v119 = vunpack.c.l.bf16 %v55
  %v120 = vunpack.c.l.bf16 %v56
  %v121 = vunpack.c.l.bf16 %v57
  %v122 = vunpack.c.l.bf16 %v58
  %v123 = vunpack.c.l.bf16 %v59
  %v124 = vunpack.c.l.bf16 %v60
  %v125 = vunpack.c.l.bf16 %v61
  %v126 = vunpack.c.l.bf16 %v62
  %v127 = vunpack.c.l.bf16 %v63
  %v128 = vunpack.c.l.bf16 %v64
  %v129 = vunpack.c.l.bf16 %v65
  %v130 = vunpack.c.l.bf16 %v66
  %v131 = vunpack.c.l.bf16 %v67
  %v132 = vunpack.c.l.bf16 %v68
  %v133 = vunpack.c.l.bf16 %v69
  %v134 = vunpack.c.l.bf16 %v70
  %v135 = vunpack.c.l.bf16 %v71
  %v136 = vunpack.c.l.bf16 %v72
  %v137 = vunpack.c.l.bf16 %v73
  %v138 = vunpack.c.l.bf16 %v74
  %v139 = vunpack.c.l.bf16 %v75
  %v140 = vunpack.c.l.bf16 %v76
  %v141 = vunpack.c.l.bf16 %v77
  %v142 = vunpack.c.l.bf16 %v78
  %v143 = vunpack.c.l.bf16 %v79
  %v144 = vunpack.c.l.bf16 %v80
  %v145 = vunpack.c.l.bf16 %v81
  %v146 = vunpack.c.l.bf16 %v82
  %v147 = vunpack.c.l.bf16 %v83
  %v148 = vunpack.c.l.bf16 %v84
  %v149 = vld [vmem:[%s1] sm:$0x1]
  %v151 = vlaneseq
  %v152 = vshrl.u32 %v151, 7
  %v153 = vsub.s32 0, %v152
  %v154 = vrot.slane %v149, %v153
  %v156 = vmul.f32 %v85, %v154
  %v157 = vmul.f32 %v86, %v154
  %v158 = vmul.f32 %v87, %v154
  %v159 = vmul.f32 %v88, %v154
  %v160 = vmul.f32 %v89, %v154
  %v161 = vmul.f32 %v90, %v154
  %v162 = vmul.f32 %v91, %v154
  %v163 = vmul.f32 %v92, %v154
  %v164 = vmul.f32 %v93, %v154
  %v165 = vmul.f32 %v94, %v154
  %v166 = vmul.f32 %v95, %v154
  %v167 = vmul.f32 %v96, %v154
  %v168 = vmul.f32 %v97, %v154
  %v169 = vmul.f32 %v98, %v154
  %v170 = vmul.f32 %v99, %v154
  %v171 = vmul.f32 %v100, %v154
  %v172 = vmul.f32 %v101, %v154
  %v173 = vmul.f32 %v102, %v154
  %v174 = vmul.f32 %v103, %v154
  %v175 = vmul.f32 %v104, %v154
  %v176 = vmul.f32 %v105, %v154
  %v177 = vmul.f32 %v106, %v154
  %v178 = vmul.f32 %v107, %v154
  %v179 = vmul.f32 %v108, %v154
  %v180 = vmul.f32 %v109, %v154
  %v181 = vmul.f32 %v110, %v154
  %v182 = vmul.f32 %v111, %v154
  %v183 = vmul.f32 %v112, %v154
  %v184 = vmul.f32 %v113, %v154
  %v185 = vmul.f32 %v114, %v154
  %v186 = vmul.f32 %v115, %v154
  %v187 = vmul.f32 %v116, %v154
  %v188 = vmul.f32 %v117, %v154
  %v189 = vmul.f32 %v118, %v154
  %v190 = vmul.f32 %v119, %v154
  %v191 = vmul.f32 %v120, %v154
  %v192 = vmul.f32 %v121, %v154
  %v193 = vmul.f32 %v122, %v154
  %v194 = vmul.f32 %v123, %v154
  %v195 = vmul.f32 %v124, %v154
  %v196 = vmul.f32 %v125, %v154
  %v197 = vmul.f32 %v126, %v154
  %v198 = vmul.f32 %v127, %v154
  %v199 = vmul.f32 %v128, %v154
  %v200 = vmul.f32 %v129, %v154
  %v201 = vmul.f32 %v130, %v154
  %v202 = vmul.f32 %v131, %v154
  %v203 = vmul.f32 %v132, %v154
  %v204 = vmul.f32 %v133, %v154
  %v205 = vmul.f32 %v134, %v154
  %v206 = vmul.f32 %v135, %v154
  %v207 = vmul.f32 %v136, %v154
  %v208 = vmul.f32 %v137, %v154
  %v209 = vmul.f32 %v138, %v154
  %v210 = vmul.f32 %v139, %v154
  %v211 = vmul.f32 %v140, %v154
  %v212 = vmul.f32 %v141, %v154
  %v213 = vmul.f32 %v142, %v154
  %v214 = vmul.f32 %v143, %v154
  %v215 = vmul.f32 %v144, %v154
  %v216 = vmul.f32 %v145, %v154
  %v217 = vmul.f32 %v146, %v154
  %v218 = vmul.f32 %v147, %v154
  %v219 = vmul.f32 %v148, %v154
  %v220 = vld [vmem:[%s2] sm:$0x1]
  %v222 = vlaneseq
  %v223 = vshrl.u32 %v222, 7
  %v224 = vsub.s32 0, %v223
  %v225 = vrot.slane %v220, %v224
  %v227 = vadd.f32 %v156, %v225
  %v228 = vadd.f32 %v157, %v225
  %v229 = vadd.f32 %v158, %v225
  %v230 = vadd.f32 %v159, %v225
  %v231 = vadd.f32 %v160, %v225
  %v232 = vadd.f32 %v161, %v225
  %v233 = vadd.f32 %v162, %v225
  %v234 = vadd.f32 %v163, %v225
  %v235 = vadd.f32 %v164, %v225
  %v236 = vadd.f32 %v165, %v225
  %v237 = vadd.f32 %v166, %v225
  %v238 = vadd.f32 %v167, %v225
  %v239 = vadd.f32 %v168, %v225
  %v240 = vadd.f32 %v169, %v225
  %v241 = vadd.f32 %v170, %v225
  %v242 = vadd.f32 %v171, %v225
  %v243 = vadd.f32 %v172, %v225
  %v244 = vadd.f32 %v173, %v225
  %v245 = vadd.f32 %v174, %v225
  %v246 = vadd.f32 %v175, %v225
  %v247 = vadd.f32 %v176, %v225
  %v248 = vadd.f32 %v177, %v225
  %v249 = vadd.f32 %v178, %v225
  %v250 = vadd.f32 %v179, %v225
  %v251 = vadd.f32 %v180, %v225
  %v252 = vadd.f32 %v181, %v225
  %v253 = vadd.f32 %v182, %v225
  %v254 = vadd.f32 %v183, %v225
  %v255 = vadd.f32 %v184, %v225
  %v256 = vadd.f32 %v185, %v225
  %v257 = vadd.f32 %v186, %v225
  %v258 = vadd.f32 %v187, %v225
  %v259 = vadd.f32 %v188, %v225
  %v260 = vadd.f32 %v189, %v225
  %v261 = vadd.f32 %v190, %v225
  %v262 = vadd.f32 %v191, %v225
  %v263 = vadd.f32 %v192, %v225
  %v264 = vadd.f32 %v193, %v225
  %v265 = vadd.f32 %v194, %v225
  %v266 = vadd.f32 %v195, %v225
  %v267 = vadd.f32 %v196, %v225
  %v268 = vadd.f32 %v197, %v225
  %v269 = vadd.f32 %v198, %v225
  %v270 = vadd.f32 %v199, %v225
  %v271 = vadd.f32 %v200, %v225
  %v272 = vadd.f32 %v201, %v225
  %v273 = vadd.f32 %v202, %v225
  %v274 = vadd.f32 %v203, %v225
  %v275 = vadd.f32 %v204, %v225
  %v276 = vadd.f32 %v205, %v225
  %v277 = vadd.f32 %v206, %v225
  %v278 = vadd.f32 %v207, %v225
  %v279 = vadd.f32 %v208, %v225
  %v280 = vadd.f32 %v209, %v225
  %v281 = vadd.f32 %v210, %v225
  %v282 = vadd.f32 %v211, %v225
  %v283 = vadd.f32 %v212, %v225
  %v284 = vadd.f32 %v213, %v225
  %v285 = vadd.f32 %v214, %v225
  %v286 = vadd.f32 %v215, %v225
  %v287 = vadd.f32 %v216, %v225
  %v288 = vadd.f32 %v217, %v225
  %v289 = vadd.f32 %v218, %v225
  %v290 = vadd.f32 %v219, %v225
  %vm291 = vcmp.gt.f32.partialorder %v227, 0.0
  %vm292 = vcmp.gt.f32.partialorder %v228, 0.0
  %vm293 = vcmp.gt.f32.partialorder %v229, 0.0
  %vm294 = vcmp.gt.f32.partialorder %v230, 0.0
  %vm295 = vcmp.gt.f32.partialorder %v231, 0.0
  %vm296 = vcmp.gt.f32.partialorder %v232, 0.0
  %vm297 = vcmp.gt.f32.partialorder %v233, 0.0
  %vm298 = vcmp.gt.f32.partialorder %v234, 0.0
  %vm299 = vcmp.gt.f32.partialorder %v235, 0.0
  %vm300 = vcmp.gt.f32.partialorder %v236, 0.0
  %vm301 = vcmp.gt.f32.partialorder %v237, 0.0
  %vm302 = vcmp.gt.f32.partialorder %v238, 0.0
  %vm303 = vcmp.gt.f32.partialorder %v239, 0.0
  %vm304 = vcmp.gt.f32.partialorder %v240, 0.0
  %vm305 = vcmp.gt.f32.partialorder %v241, 0.0
  %vm306 = vcmp.gt.f32.partialorder %v242, 0.0
  %vm307 = vcmp.gt.f32.partialorder %v243, 0.0
  %vm308 = vcmp.gt.f32.partialorder %v244, 0.0
  %vm309 = vcmp.gt.f32.partialorder %v245, 0.0
  %vm310 = vcmp.gt.f32.partialorder %v246, 0.0
  %vm311 = vcmp.gt.f32.partialorder %v247, 0.0
  %vm312 = vcmp.gt.f32.partialorder %v248, 0.0
  %vm313 = vcmp.gt.f32.partialorder %v249, 0.0
  %vm314 = vcmp.gt.f32.partialorder %v250, 0.0
  %vm315 = vcmp.gt.f32.partialorder %v251, 0.0
  %vm316 = vcmp.gt.f32.partialorder %v252, 0.0
  %vm317 = vcmp.gt.f32.partialorder %v253, 0.0
  %vm318 = vcmp.gt.f32.partialorder %v254, 0.0
  %vm319 = vcmp.gt.f32.partialorder %v255, 0.0
  %vm320 = vcmp.gt.f32.partialorder %v256, 0.0
  %vm321 = vcmp.gt.f32.partialorder %v257, 0.0
  %vm322 = vcmp.gt.f32.partialorder %v258, 0.0
  %vm323 = vcmp.gt.f32.partialorder %v259, 0.0
  %vm324 = vcmp.gt.f32.partialorder %v260, 0.0
  %vm325 = vcmp.gt.f32.partialorder %v261, 0.0
  %vm326 = vcmp.gt.f32.partialorder %v262, 0.0
  %vm327 = vcmp.gt.f32.partialorder %v263, 0.0
  %vm328 = vcmp.gt.f32.partialorder %v264, 0.0
  %vm329 = vcmp.gt.f32.partialorder %v265, 0.0
  %vm330 = vcmp.gt.f32.partialorder %v266, 0.0
  %vm331 = vcmp.gt.f32.partialorder %v267, 0.0
  %vm332 = vcmp.gt.f32.partialorder %v268, 0.0
  %vm333 = vcmp.gt.f32.partialorder %v269, 0.0
  %vm334 = vcmp.gt.f32.partialorder %v270, 0.0
  %vm335 = vcmp.gt.f32.partialorder %v271, 0.0
  %vm336 = vcmp.gt.f32.partialorder %v272, 0.0
  %vm337 = vcmp.gt.f32.partialorder %v273, 0.0
  %vm338 = vcmp.gt.f32.partialorder %v274, 0.0
  %vm339 = vcmp.gt.f32.partialorder %v275, 0.0
  %vm340 = vcmp.gt.f32.partialorder %v276, 0.0
  %vm341 = vcmp.gt.f32.partialorder %v277, 0.0
  %vm342 = vcmp.gt.f32.partialorder %v278, 0.0
  %vm343 = vcmp.gt.f32.partialorder %v279, 0.0
  %vm344 = vcmp.gt.f32.partialorder %v280, 0.0
  %vm345 = vcmp.gt.f32.partialorder %v281, 0.0
  %vm346 = vcmp.gt.f32.partialorder %v282, 0.0
  %vm347 = vcmp.gt.f32.partialorder %v283, 0.0
  %vm348 = vcmp.gt.f32.partialorder %v284, 0.0
  %vm349 = vcmp.gt.f32.partialorder %v285, 0.0
  %vm350 = vcmp.gt.f32.partialorder %v286, 0.0
  %vm351 = vcmp.gt.f32.partialorder %v287, 0.0
  %vm352 = vcmp.gt.f32.partialorder %v288, 0.0
  %vm353 = vcmp.gt.f32.partialorder %v289, 0.0
  %vm354 = vcmp.gt.f32.partialorder %v290, 0.0
  %v355 = vmul.f32 %v227, 0.2
  %v356 = vmul.f32 %v228, 0.2
  %v357 = vmul.f32 %v229, 0.2
  %v358 = vmul.f32 %v230, 0.2
  %v359 = vmul.f32 %v231, 0.2
  %v360 = vmul.f32 %v232, 0.2
  %v361 = vmul.f32 %v233, 0.2
  %v362 = vmul.f32 %v234, 0.2
  %v363 = vmul.f32 %v235, 0.2
  %v364 = vmul.f32 %v236, 0.2
  %v365 = vmul.f32 %v237, 0.2
  %v366 = vmul.f32 %v238, 0.2
  %v367 = vmul.f32 %v239, 0.2
  %v368 = vmul.f32 %v240, 0.2
  %v369 = vmul.f32 %v241, 0.2
  %v370 = vmul.f32 %v242, 0.2
  %v371 = vmul.f32 %v243, 0.2
  %v372 = vmul.f32 %v244, 0.2
  %v373 = vmul.f32 %v245, 0.2
  %v374 = vmul.f32 %v246, 0.2
  %v375 = vmul.f32 %v247, 0.2
  %v376 = vmul.f32 %v248, 0.2
  %v377 = vmul.f32 %v249, 0.2
  %v378 = vmul.f32 %v250, 0.2
  %v379 = vmul.f32 %v251, 0.2
  %v380 = vmul.f32 %v252, 0.2
  %v381 = vmul.f32 %v253, 0.2
  %v382 = vmul.f32 %v254, 0.2
  %v383 = vmul.f32 %v255, 0.2
  %v384 = vmul.f32 %v256, 0.2
  %v385 = vmul.f32 %v257, 0.2
  %v386 = vmul.f32 %v258, 0.2
  %v387 = vmul.f32 %v259, 0.2
  %v388 = vmul.f32 %v260, 0.2
  %v389 = vmul.f32 %v261, 0.2
  %v390 = vmul.f32 %v262, 0.2
  %v391 = vmul.f32 %v263, 0.2
  %v392 = vmul.f32 %v264, 0.2
  %v393 = vmul.f32 %v265, 0.2
  %v394 = vmul.f32 %v266, 0.2
  %v395 = vmul.f32 %v267, 0.2
  %v396 = vmul.f32 %v268, 0.2
  %v397 = vmul.f32 %v269, 0.2
  %v398 = vmul.f32 %v270, 0.2
  %v399 = vmul.f32 %v271, 0.2
  %v400 = vmul.f32 %v272, 0.2
  %v401 = vmul.f32 %v273, 0.2
  %v402 = vmul.f32 %v274, 0.2
  %v403 = vmul.f32 %v275, 0.2
  %v404 = vmul.f32 %v276, 0.2
  %v405 = vmul.f32 %v277, 0.2
  %v406 = vmul.f32 %v278, 0.2
  %v407 = vmul.f32 %v279, 0.2
  %v408 = vmul.f32 %v280, 0.2
  %v409 = vmul.f32 %v281, 0.2
  %v410 = vmul.f32 %v282, 0.2
  %v411 = vmul.f32 %v283, 0.2
  %v412 = vmul.f32 %v284, 0.2
  %v413 = vmul.f32 %v285, 0.2
  %v414 = vmul.f32 %v286, 0.2
  %v415 = vmul.f32 %v287, 0.2
  %v416 = vmul.f32 %v288, 0.2
  %v417 = vmul.f32 %v289, 0.2
  %v418 = vmul.f32 %v290, 0.2
  %v419 = vsel %vm291, %v227, %v355
  %v420 = vsel %vm292, %v228, %v356
  %v421 = vsel %vm293, %v229, %v357
  %v422 = vsel %vm294, %v230, %v358
  %v423 = vsel %vm295, %v231, %v359
  %v424 = vsel %vm296, %v232, %v360
  %v425 = vsel %vm297, %v233, %v361
  %v426 = vsel %vm298, %v234, %v362
  %v427 = vsel %vm299, %v235, %v363
  %v428 = vsel %vm300, %v236, %v364
  %v429 = vsel %vm301, %v237, %v365
  %v430 = vsel %vm302, %v238, %v366
  %v431 = vsel %vm303, %v239, %v367
  %v432 = vsel %vm304, %v240, %v368
  %v433 = vsel %vm305, %v241, %v369
  %v434 = vsel %vm306, %v242, %v370
  %v435 = vsel %vm307, %v243, %v371
  %v436 = vsel %vm308, %v244, %v372
  %v437 = vsel %vm309, %v245, %v373
  %v438 = vsel %vm310, %v246, %v374
  %v439 = vsel %vm311, %v247, %v375
  %v440 = vsel %vm312, %v248, %v376
  %v441 = vsel %vm313, %v249, %v377
  %v442 = vsel %vm314, %v250, %v378
  %v443 = vsel %vm315, %v251, %v379
  %v444 = vsel %vm316, %v252, %v380
  %v445 = vsel %vm317, %v253, %v381
  %v446 = vsel %vm318, %v254, %v382
  %v447 = vsel %vm319, %v255, %v383
  %v448 = vsel %vm320, %v256, %v384
  %v449 = vsel %vm321, %v257, %v385
  %v450 = vsel %vm322, %v258, %v386
  %v451 = vsel %vm323, %v259, %v387
  %v452 = vsel %vm324, %v260, %v388
  %v453 = vsel %vm325, %v261, %v389
  %v454 = vsel %vm326, %v262, %v390
  %v455 = vsel %vm327, %v263, %v391
  %v456 = vsel %vm328, %v264, %v392
  %v457 = vsel %vm329, %v265, %v393
  %v458 = vsel %vm330, %v266, %v394
  %v459 = vsel %vm331, %v267, %v395
  %v460 = vsel %vm332, %v268, %v396
  %v461 = vsel %vm333, %v269, %v397
  %v462 = vsel %vm334, %v270, %v398
  %v463 = vsel %vm335, %v271, %v399
  %v464 = vsel %vm336, %v272, %v400
  %v465 = vsel %vm337, %v273, %v401
  %v466 = vsel %vm338, %v274, %v402
  %v467 = vsel %vm339, %v275, %v403
  %v468 = vsel %vm340, %v276, %v404
  %v469 = vsel %vm341, %v277, %v405
  %v470 = vsel %vm342, %v278, %v406
  %v471 = vsel %vm343, %v279, %v407
  %v472 = vsel %vm344, %v280, %v408
  %v473 = vsel %vm345, %v281, %v409
  %v474 = vsel %vm346, %v282, %v410
  %v475 = vsel %vm347, %v283, %v411
  %v476 = vsel %vm348, %v284, %v412
  %v477 = vsel %vm349, %v285, %v413
  %v478 = vsel %vm350, %v286, %v414
  %v479 = vsel %vm351, %v287, %v415
  %v480 = vsel %vm352, %v288, %v416
  %v481 = vsel %vm353, %v289, %v417
  %v482 = vsel %vm354, %v290, %v418
  %v483 = vpack.c.bf16 %v420, %v419
  %v484 = vpack.c.bf16 %v422, %v421
  %v485 = vpack.c.bf16 %v424, %v423
  %v486 = vpack.c.bf16 %v426, %v425
  %v487 = vpack.c.bf16 %v428, %v427
  %v488 = vpack.c.bf16 %v430, %v429
  %v489 = vpack.c.bf16 %v432, %v431
  %v490 = vpack.c.bf16 %v434, %v433
  %v491 = vpack.c.bf16 %v436, %v435
  %v492 = vpack.c.bf16 %v438, %v437
  %v493 = vpack.c.bf16 %v440, %v439
  %v494 = vpack.c.bf16 %v442, %v441
  %v495 = vpack.c.bf16 %v444, %v443
  %v496 = vpack.c.bf16 %v446, %v445
  %v497 = vpack.c.bf16 %v448, %v447
  %v498 = vpack.c.bf16 %v450, %v449
  %v499 = vpack.c.bf16 %v452, %v451
  %v500 = vpack.c.bf16 %v454, %v453
  %v501 = vpack.c.bf16 %v456, %v455
  %v502 = vpack.c.bf16 %v458, %v457
  %v503 = vpack.c.bf16 %v460, %v459
  %v504 = vpack.c.bf16 %v462, %v461
  %v505 = vpack.c.bf16 %v464, %v463
  %v506 = vpack.c.bf16 %v466, %v465
  %v507 = vpack.c.bf16 %v468, %v467
  %v508 = vpack.c.bf16 %v470, %v469
  %v509 = vpack.c.bf16 %v472, %v471
  %v510 = vpack.c.bf16 %v474, %v473
  %v511 = vpack.c.bf16 %v476, %v475
  %v512 = vpack.c.bf16 %v478, %v477
  %v513 = vpack.c.bf16 %v480, %v479
  %v514 = vpack.c.bf16 %v482, %v481
  %v515 = vld [vmem:[%s3] sm:$0xf]
  %v516 = vld [vmem:[%s3 + $0x4] sm:$0xf]
  %v517 = vld [vmem:[%s3 + $0x8] sm:$0xf]
  %v518 = vld [vmem:[%s3 + $0xc] sm:$0xf]
  %v519 = vld [vmem:[%s3 + $0x10] sm:$0xf]
  %v520 = vld [vmem:[%s3 + $0x14] sm:$0xf]
  %v521 = vld [vmem:[%s3 + $0x18] sm:$0xf]
  %v522 = vld [vmem:[%s3 + $0x1c] sm:$0xf]
  %v523 = vld [vmem:[%s3 + $0x20] sm:$0xf]
  %v524 = vld [vmem:[%s3 + $0x24] sm:$0xf]
  %v525 = vld [vmem:[%s3 + $0x28] sm:$0xf]
  %v526 = vld [vmem:[%s3 + $0x2c] sm:$0xf]
  %v527 = vld [vmem:[%s3 + $0x30] sm:$0xf]
  %v528 = vld [vmem:[%s3 + $0x34] sm:$0xf]
  %v529 = vld [vmem:[%s3 + $0x38] sm:$0xf]
  %v530 = vld [vmem:[%s3 + $0x3c] sm:$0xf]
  %v547 = vunpack.c.l.b16 %v515
  %v548 = vunpack.c.l.b16 %v516
  %v549 = vunpack.c.l.b16 %v517
  %v550 = vunpack.c.l.b16 %v518
  %v551 = vunpack.c.l.b16 %v519
  %v552 = vunpack.c.l.b16 %v520
  %v553 = vunpack.c.l.b16 %v521
  %v554 = vunpack.c.l.b16 %v522
  %v555 = vunpack.c.l.b16 %v523
  %v556 = vunpack.c.l.b16 %v524
  %v557 = vunpack.c.l.b16 %v525
  %v558 = vunpack.c.l.b16 %v526
  %v559 = vunpack.c.l.b16 %v527
  %v560 = vunpack.c.l.b16 %v528
  %v561 = vunpack.c.l.b16 %v529
  %v562 = vunpack.c.l.b16 %v530
  %v563 = vpack.c.b16 %v548, %v547
  %v564 = vpack.c.b16 %v550, %v549
  %v565 = vpack.c.b16 %v552, %v551
  %v566 = vpack.c.b16 %v554, %v553
  %v567 = vpack.c.b16 %v556, %v555
  %v568 = vpack.c.b16 %v558, %v557
  %v569 = vpack.c.b16 %v560, %v559
  %v570 = vpack.c.b16 %v562, %v561
  %579 = vmatprep.subr.bf16.mxu0 0
  %580 = vmatpush1.bf16.msra.mxu0 %v563
  %581 = vmatprep.subr.bf16.mxu0 0
  %582 = vmatpush1.bf16.msra.mxu0 %v564
  %583 = vmatprep.subr.bf16.mxu0 0
  %584 = vmatpush1.bf16.msra.mxu0 %v565
  %585 = vmatprep.subr.bf16.mxu0 0
  %586 = vmatpush1.bf16.msra.mxu0 %v566
  %587 = vmatprep.subr.bf16.mxu0 0
  %588 = vmatpush1.bf16.msra.mxu0 %v567
  %589 = vmatprep.subr.bf16.mxu0 0
  %590 = vmatpush1.bf16.msra.mxu0 %v568
  %591 = vmatprep.subr.bf16.mxu0 0
  %592 = vmatpush1.bf16.msra.mxu0 %v569
  %593 = vmatprep.subr.bf16.mxu0 0
  %594 = vmatpush1.bf16.msra.mxu0 %v570
  %595 = vmatprep.subr.bf16.mxu0 0
  %596 = vmatpush1.bf16.msra.mxu0 0
  %597 = vmatprep.subr.bf16.mxu0 0
  %598 = vmatpush1.bf16.msra.mxu0 0
  %599 = vmatprep.subr.bf16.mxu0 0
  %600 = vmatpush1.bf16.msra.mxu0 0
  %601 = vmatprep.subr.bf16.mxu0 0
  %602 = vmatpush1.bf16.msra.mxu0 0
  %603 = vmatprep.subr.bf16.mxu0 0
  %604 = vmatpush1.bf16.msra.mxu0 0
  %605 = vmatprep.subr.bf16.mxu0 0
  %606 = vmatpush1.bf16.msra.mxu0 0
  %607 = vmatprep.subr.bf16.mxu0 0
  %608 = vmatpush1.bf16.msra.mxu0 0
  %609 = vmatprep.subr.bf16.mxu0 0
  %610 = vmatpush1.bf16.msra.mxu0 0
  %611 = vmatprep.mubr.bf16.mxu0 0
  %612 = vmatmul.mubr.bf16.gmra.mrb[0].mxu0 %v483
  %v613 = vpop.f32.mrb[0].mxu0
  %v614 = vadd.f32 0.0, %v613
  %v615 = vpop.f32.mrb[0].mxu0
  %v616 = vpop.f32.mrb[0].mxu0
  %v617 = vadd.f32 0.0, %v616
  %v618 = vpop.f32.mrb[0].mxu0
  %619 = vmatprep.mubr.bf16.mxu0 0
  %620 = vmatmul.mubr.bf16.gmra.mrb[0].mxu0 %v484
  %v621 = vpop.f32.mrb[0].mxu0
  %v622 = vadd.f32 0.0, %v621
  %v623 = vpop.f32.mrb[0].mxu0
  %v624 = vpop.f32.mrb[0].mxu0
  %v625 = vadd.f32 0.0, %v624
  %v626 = vpop.f32.mrb[0].mxu0
  %627 = vmatprep.mubr.bf16.mxu0 0
  %628 = vmatmul.mubr.bf16.gmra.mrb[0].mxu0 %v485
  %v629 = vpop.f32.mrb[0].mxu0
  %v630 = vadd.f32 0.0, %v629
  %v631 = vpop.f32.mrb[0].mxu0
  %v632 = vpop.f32.mrb[0].mxu0
  %v633 = vadd.f32 0.0, %v632
  %v634 = vpop.f32.mrb[0].mxu0
  %635 = vmatprep.mubr.bf16.mxu0 0
  %636 = vmatmul.mubr.bf16.gmra.mrb[0].mxu0 %v486
  %v637 = vpop.f32.mrb[0].mxu0
  %v638 = vadd.f32 0.0, %v637
  %v639 = vpop.f32.mrb[0].mxu0
  %v640 = vpop.f32.mrb[0].mxu0
  %v641 = vadd.f32 0.0, %v640
  %v642 = vpop.f32.mrb[0].mxu0
  %643 = vmatprep.mubr.bf16.mxu0 0
  %644 = vmatmul.mubr.bf16.gmra.mrb[0].mxu0 %v487
  %v645 = vpop.f32.mrb[0].mxu0
  %v646 = vadd.f32 0.0, %v645
  %v647 = vpop.f32.mrb[0].mxu0
  %v648 = vpop.f32.mrb[0].mxu0
  %v649 = vadd.f32 0.0, %v648
  %v650 = vpop.f32.mrb[0].mxu0
  %651 = vmatprep.mubr.bf16.mxu0 0
  %652 = vmatmul.mubr.bf16.gmra.mrb[0].mxu0 %v488
  %v653 = vpop.f32.mrb[0].mxu0
  %v654 = vadd.f32 0.0, %v653
  %v655 = vpop.f32.mrb[0].mxu0
  %v656 = vpop.f32.mrb[0].mxu0
  %v657 = vadd.f32 0.0, %v656
  %v658 = vpop.f32.mrb[0].mxu0
  %659 = vmatprep.mubr.bf16.mxu0 0
  %660 = vmatmul.mubr.bf16.gmra.mrb[0].mxu0 %v489
  %v661 = vpop.f32.mrb[0].mxu0
  %v662 = vadd.f32 0.0, %v661
  %v663 = vpop.f32.mrb[0].mxu0
  %v664 = vpop.f32.mrb[0].mxu0
  %v665 = vadd.f32 0.0, %v664
  %v666 = vpop.f32.mrb[0].mxu0
  %667 = vmatprep.mubr.bf16.mxu0 0
  %668 = vmatmul.mubr.bf16.gmra.mrb[0].mxu0 %v490
  %v669 = vpop.f32.mrb[0].mxu0
  %v670 = vadd.f32 0.0, %v669
  %v671 = vpop.f32.mrb[0].mxu0
  %v672 = vpop.f32.mrb[0].mxu0
  %v673 = vadd.f32 0.0, %v672
  %v674 = vpop.f32.mrb[0].mxu0
  %675 = vmatprep.mubr.bf16.mxu0 0
  %676 = vmatmul.mubr.bf16.gmra.mrb[0].mxu0 %v491
  %v677 = vpop.f32.mrb[0].mxu0
  %v678 = vadd.f32 0.0, %v677
  %v679 = vpop.f32.mrb[0].mxu0
  %v680 = vpop.f32.mrb[0].mxu0
  %v681 = vadd.f32 0.0, %v680
  %v682 = vpop.f32.mrb[0].mxu0
  %683 = vmatprep.mubr.bf16.mxu0 0
  %684 = vmatmul.mubr.bf16.gmra.mrb[0].mxu0 %v492
  %v685 = vpop.f32.mrb[0].mxu0
  %v686 = vadd.f32 0.0, %v685
  %v687 = vpop.f32.mrb[0].mxu0
  %v688 = vpop.f32.mrb[0].mxu0
  %v689 = vadd.f32 0.0, %v688
  %v690 = vpop.f32.mrb[0].mxu0
  %691 = vmatprep.mubr.bf16.mxu0 0
  %692 = vmatmul.mubr.bf16.gmra.mrb[0].mxu0 %v493
  %v693 = vpop.f32.mrb[0].mxu0
  %v694 = vadd.f32 0.0, %v693
  %v695 = vpop.f32.mrb[0].mxu0
  %v696 = vpop.f32.mrb[0].mxu0
  %v697 = vadd.f32 0.0, %v696
  %v698 = vpop.f32.mrb[0].mxu0
  %699 = vmatprep.mubr.bf16.mxu0 0
  %700 = vmatmul.mubr.bf16.gmra.mrb[0].mxu0 %v494
  %v701 = vpop.f32.mrb[0].mxu0
  %v702 = vadd.f32 0.0, %v701
  %v703 = vpop.f32.mrb[0].mxu0
  %v704 = vpop.f32.mrb[0].mxu0
  %v705 = vadd.f32 0.0, %v704
  %v706 = vpop.f32.mrb[0].mxu0
  %707 = vmatprep.mubr.bf16.mxu0 0
  %708 = vmatmul.mubr.bf16.gmra.mrb[0].mxu0 %v495
  %v709 = vpop.f32.mrb[0].mxu0
  %v710 = vadd.f32 0.0, %v709
  %v711 = vpop.f32.mrb[0].mxu0
  %v712 = vpop.f32.mrb[0].mxu0
  %v713 = vadd.f32 0.0, %v712
  %v714 = vpop.f32.mrb[0].mxu0
  %715 = vmatprep.mubr.bf16.mxu0 0
  %716 = vmatmul.mubr.bf16.gmra.mrb[0].mxu0 %v496
  %v717 = vpop.f32.mrb[0].mxu0
  %v718 = vadd.f32 0.0, %v717
  %v719 = vpop.f32.mrb[0].mxu0
  %v720 = vpop.f32.mrb[0].mxu0
  %v721 = vadd.f32 0.0, %v720
  %v722 = vpop.f32.mrb[0].mxu0
  %723 = vmatprep.mubr.bf16.mxu0 0
  %724 = vmatmul.mubr.bf16.gmra.mrb[0].mxu0 %v497
  %v725 = vpop.f32.mrb[0].mxu0
  %v726 = vadd.f32 0.0, %v725
  %v727 = vpop.f32.mrb[0].mxu0
  %v728 = vpop.f32.mrb[0].mxu0
  %v729 = vadd.f32 0.0, %v728
  %v730 = vpop.f32.mrb[0].mxu0
  %731 = vmatprep.mubr.bf16.mxu0 0
  %732 = vmatmul.mubr.bf16.gmra.mrb[0].mxu0 %v498
  %v733 = vpop.f32.mrb[0].mxu0
  %v734 = vadd.f32 0.0, %v733
  %v735 = vpop.f32.mrb[0].mxu0
  %v736 = vpop.f32.mrb[0].mxu0
  %v737 = vadd.f32 0.0, %v736
  %v738 = vpop.f32.mrb[0].mxu0
  %739 = vmatprep.mubr.bf16.mxu0 0
  %740 = vmatmul.mubr.bf16.gmra.mrb[0].mxu0 %v499
  %v741 = vpop.f32.mrb[0].mxu0
  %v742 = vadd.f32 0.0, %v741
  %v743 = vpop.f32.mrb[0].mxu0
  %v744 = vpop.f32.mrb[0].mxu0
  %v745 = vadd.f32 0.0, %v744
  %v746 = vpop.f32.mrb[0].mxu0
  %747 = vmatprep.mubr.bf16.mxu0 0
  %748 = vmatmul.mubr.bf16.gmra.mrb[0].mxu0 %v500
  %v749 = vpop.f32.mrb[0].mxu0
  %v750 = vadd.f32 0.0, %v749
  %v751 = vpop.f32.mrb[0].mxu0
  %v752 = vpop.f32.mrb[0].mxu0
  %v753 = vadd.f32 0.0, %v752
  %v754 = vpop.f32.mrb[0].mxu0
  %755 = vmatprep.mubr.bf16.mxu0 0
  %756 = vmatmul.mubr.bf16.gmra.mrb[0].mxu0 %v501
  %v757 = vpop.f32.mrb[0].mxu0
  %v758 = vadd.f32 0.0, %v757
  %v759 = vpop.f32.mrb[0].mxu0
  %v760 = vpop.f32.mrb[0].mxu0
  %v761 = vadd.f32 0.0, %v760
  %v762 = vpop.f32.mrb[0].mxu0
  %763 = vmatprep.mubr.bf16.mxu0 0
  %764 = vmatmul.mubr.bf16.gmra.mrb[0].mxu0 %v502
  %v765 = vpop.f32.mrb[0].mxu0
  %v766 = vadd.f32 0.0, %v765
  %v767 = vpop.f32.mrb[0].mxu0
  %v768 = vpop.f32.mrb[0].mxu0
  %v769 = vadd.f32 0.0, %v768
  %v770 = vpop.f32.mrb[0].mxu0
  %771 = vmatprep.mubr.bf16.mxu0 0
  %772 = vmatmul.mubr.bf16.gmra.mrb[0].mxu0 %v503
  %v773 = vpop.f32.mrb[0].mxu0
  %v774 = vadd.f32 0.0, %v773
  %v775 = vpop.f32.mrb[0].mxu0
  %v776 = vpop.f32.mrb[0].mxu0
  %v777 = vadd.f32 0.0, %v776
  %v778 = vpop.f32.mrb[0].mxu0
  %779 = vmatprep.mubr.bf16.mxu0 0
  %780 = vmatmul.mubr.bf16.gmra.mrb[0].mxu0 %v504
  %v781 = vpop.f32.mrb[0].mxu0
  %v782 = vadd.f32 0.0, %v781
  %v783 = vpop.f32.mrb[0].mxu0
  %v784 = vpop.f32.mrb[0].mxu0
  %v785 = vadd.f32 0.0, %v784
  %v786 = vpop.f32.mrb[0].mxu0
  %787 = vmatprep.mubr.bf16.mxu0 0
  %788 = vmatmul.mubr.bf16.gmra.mrb[0].mxu0 %v505
  %v789 = vpop.f32.mrb[0].mxu0
  %v790 = vadd.f32 0.0, %v789
  %v791 = vpop.f32.mrb[0].mxu0
  %v792 = vpop.f32.mrb[0].mxu0
  %v793 = vadd.f32 0.0, %v792
  %v794 = vpop.f32.mrb[0].mxu0
  %795 = vmatprep.mubr.bf16.mxu0 0
  %796 = vmatmul.mubr.bf16.gmra.mrb[0].mxu0 %v506
  %v797 = vpop.f32.mrb[0].mxu0
  %v798 = vadd.f32 0.0, %v797
  %v799 = vpop.f32.mrb[0].mxu0
  %v800 = vpop.f32.mrb[0].mxu0
  %v801 = vadd.f32 0.0, %v800
  %v802 = vpop.f32.mrb[0].mxu0
  %803 = vmatprep.mubr.bf16.mxu0 0
  %804 = vmatmul.mubr.bf16.gmra.mrb[0].mxu0 %v507
  %v805 = vpop.f32.mrb[0].mxu0
  %v806 = vadd.f32 0.0, %v805
  %v807 = vpop.f32.mrb[0].mxu0
  %v808 = vpop.f32.mrb[0].mxu0
  %v809 = vadd.f32 0.0, %v808
  %v810 = vpop.f32.mrb[0].mxu0
  %811 = vmatprep.mubr.bf16.mxu0 0
  %812 = vmatmul.mubr.bf16.gmra.mrb[0].mxu0 %v508
  %v813 = vpop.f32.mrb[0].mxu0
  %v814 = vadd.f32 0.0, %v813
  %v815 = vpop.f32.mrb[0].mxu0
  %v816 = vpop.f32.mrb[0].mxu0
  %v817 = vadd.f32 0.0, %v816
  %v818 = vpop.f32.mrb[0].mxu0
  %819 = vmatprep.mubr.bf16.mxu0 0
  %820 = vmatmul.mubr.bf16.gmra.mrb[0].mxu0 %v509
  %v821 = vpop.f32.mrb[0].mxu0
  %v822 = vadd.f32 0.0, %v821
  %v823 = vpop.f32.mrb[0].mxu0
  %v824 = vpop.f32.mrb[0].mxu0
  %v825 = vadd.f32 0.0, %v824
  %v826 = vpop.f32.mrb[0].mxu0
  %827 = vmatprep.mubr.bf16.mxu0 0
  %828 = vmatmul.mubr.bf16.gmra.mrb[0].mxu0 %v510
  %v829 = vpop.f32.mrb[0].mxu0
  %v830 = vadd.f32 0.0, %v829
  %v831 = vpop.f32.mrb[0].mxu0
  %v832 = vpop.f32.mrb[0].mxu0
  %v833 = vadd.f32 0.0, %v832
  %v834 = vpop.f32.mrb[0].mxu0
  %835 = vmatprep.mubr.bf16.mxu0 0
  %836 = vmatmul.mubr.bf16.gmra.mrb[0].mxu0 %v511
  %v837 = vpop.f32.mrb[0].mxu0
  %v838 = vadd.f32 0.0, %v837
  %v839 = vpop.f32.mrb[0].mxu0
  %v840 = vpop.f32.mrb[0].mxu0
  %v841 = vadd.f32 0.0, %v840
  %v842 = vpop.f32.mrb[0].mxu0
  %843 = vmatprep.mubr.bf16.mxu0 0
  %844 = vmatmul.mubr.bf16.gmra.mrb[0].mxu0 %v512
  %v845 = vpop.f32.mrb[0].mxu0
  %v846 = vadd.f32 0.0, %v845
  %v847 = vpop.f32.mrb[0].mxu0
  %v848 = vpop.f32.mrb[0].mxu0
  %v849 = vadd.f32 0.0, %v848
  %v850 = vpop.f32.mrb[0].mxu0
  %851 = vmatprep.mubr.bf16.mxu0 0
  %852 = vmatmul.mubr.bf16.gmra.mrb[0].mxu0 %v513
  %v853 = vpop.f32.mrb[0].mxu0
  %v854 = vadd.f32 0.0, %v853
  %v855 = vpop.f32.mrb[0].mxu0
  %v856 = vpop.f32.mrb[0].mxu0
  %v857 = vadd.f32 0.0, %v856
  %v858 = vpop.f32.mrb[0].mxu0
  %859 = vmatprep.mubr.bf16.mxu0 0
  %860 = vmatmul.mubr.bf16.gmra.mrb[0].mxu0 %v514
  %v861 = vpop.f32.mrb[0].mxu0
  %v862 = vadd.f32 0.0, %v861
  %v863 = vpop.f32.mrb[0].mxu0
  %v864 = vpop.f32.mrb[0].mxu0
  %v865 = vadd.f32 0.0, %v864
  %v866 = vpop.f32.mrb[0].mxu0
  %867 = vdwg.mxu0
  %v868 = vpack.c.bf16 %v617, %v614
  %v869 = vpack.c.bf16 %v625, %v622
  %v870 = vpack.c.bf16 %v633, %v630
  %v871 = vpack.c.bf16 %v641, %v638
  %v872 = vpack.c.bf16 %v649, %v646
  %v873 = vpack.c.bf16 %v657, %v654
  %v874 = vpack.c.bf16 %v665, %v662
  %v875 = vpack.c.bf16 %v673, %v670
  %v876 = vpack.c.bf16 %v681, %v678
  %v877 = vpack.c.bf16 %v689, %v686
  %v878 = vpack.c.bf16 %v697, %v694
  %v879 = vpack.c.bf16 %v705, %v702
  %v880 = vpack.c.bf16 %v713, %v710
  %v881 = vpack.c.bf16 %v721, %v718
  %v882 = vpack.c.bf16 %v729, %v726
  %v883 = vpack.c.bf16 %v737, %v734
  %v884 = vpack.c.bf16 %v745, %v742
  %v885 = vpack.c.bf16 %v753, %v750
  %v886 = vpack.c.bf16 %v761, %v758
  %v887 = vpack.c.bf16 %v769, %v766
  %v888 = vpack.c.bf16 %v777, %v774
  %v889 = vpack.c.bf16 %v785, %v782
  %v890 = vpack.c.bf16 %v793, %v790
  %v891 = vpack.c.bf16 %v801, %v798
  %v892 = vpack.c.bf16 %v809, %v806
  %v893 = vpack.c.bf16 %v817, %v814
  %v894 = vpack.c.bf16 %v825, %v822
  %v895 = vpack.c.bf16 %v833, %v830
  %v896 = vpack.c.bf16 %v841, %v838
  %v897 = vpack.c.bf16 %v849, %v846
  %v898 = vpack.c.bf16 %v857, %v854
  %v899 = vpack.c.bf16 %v865, %v862
  %v932 = vunpack.c.l.b16 %v868
  %v933 = vunpack.c.h.b16 %v868
  %v934 = vunpack.c.l.b16 %v869
  %v935 = vunpack.c.h.b16 %v869
  %v936 = vunpack.c.l.b16 %v870
  %v937 = vunpack.c.h.b16 %v870
  %v938 = vunpack.c.l.b16 %v871
  %v939 = vunpack.c.h.b16 %v871
  %v940 = vunpack.c.l.b16 %v872
  %v941 = vunpack.c.h.b16 %v872
  %v942 = vunpack.c.l.b16 %v873
  %v943 = vunpack.c.h.b16 %v873
  %v944 = vunpack.c.l.b16 %v874
  %v945 = vunpack.c.h.b16 %v874
  %v946 = vunpack.c.l.b16 %v875
  %v947 = vunpack.c.h.b16 %v875
  %v948 = vunpack.c.l.b16 %v876
  %v949 = vunpack.c.h.b16 %v876
  %v950 = vunpack.c.l.b16 %v877
  %v951 = vunpack.c.h.b16 %v877
  %v952 = vunpack.c.l.b16 %v878
  %v953 = vunpack.c.h.b16 %v878
  %v954 = vunpack.c.l.b16 %v879
  %v955 = vunpack.c.h.b16 %v879
  %v956 = vunpack.c.l.b16 %v880
  %v957 = vunpack.c.h.b16 %v880
  %v958 = vunpack.c.l.b16 %v881
  %v959 = vunpack.c.h.b16 %v881
  %v960 = vunpack.c.l.b16 %v882
  %v961 = vunpack.c.h.b16 %v882
  %v962 = vunpack.c.l.b16 %v883
  %v963 = vunpack.c.h.b16 %v883
  %v964 = vunpack.c.l.b16 %v884
  %v965 = vunpack.c.h.b16 %v884
  %v966 = vunpack.c.l.b16 %v885
  %v967 = vunpack.c.h.b16 %v885
  %v968 = vunpack.c.l.b16 %v886
  %v969 = vunpack.c.h.b16 %v886
  %v970 = vunpack.c.l.b16 %v887
  %v971 = vunpack.c.h.b16 %v887
  %v972 = vunpack.c.l.b16 %v888
  %v973 = vunpack.c.h.b16 %v888
  %v974 = vunpack.c.l.b16 %v889
  %v975 = vunpack.c.h.b16 %v889
  %v976 = vunpack.c.l.b16 %v890
  %v977 = vunpack.c.h.b16 %v890
  %v978 = vunpack.c.l.b16 %v891
  %v979 = vunpack.c.h.b16 %v891
  %v980 = vunpack.c.l.b16 %v892
  %v981 = vunpack.c.h.b16 %v892
  %v982 = vunpack.c.l.b16 %v893
  %v983 = vunpack.c.h.b16 %v893
  %v984 = vunpack.c.l.b16 %v894
  %v985 = vunpack.c.h.b16 %v894
  %v986 = vunpack.c.l.b16 %v895
  %v987 = vunpack.c.h.b16 %v895
  %v988 = vunpack.c.l.b16 %v896
  %v989 = vunpack.c.h.b16 %v896
  %v990 = vunpack.c.l.b16 %v897
  %v991 = vunpack.c.h.b16 %v897
  %v992 = vunpack.c.l.b16 %v898
  %v993 = vunpack.c.h.b16 %v898
  %v994 = vunpack.c.l.b16 %v899
  %v995 = vunpack.c.h.b16 %v899
  %v996 = vpack.c.b16 %v932, %v932
  %v997 = vpack.c.b16 %v933, %v933
  %v998 = vpack.c.b16 %v934, %v934
  %v999 = vpack.c.b16 %v935, %v935
  %v1000 = vpack.c.b16 %v936, %v936
  %v1001 = vpack.c.b16 %v937, %v937
  %v1002 = vpack.c.b16 %v938, %v938
  %v1003 = vpack.c.b16 %v939, %v939
  %v1004 = vpack.c.b16 %v940, %v940
  %v1005 = vpack.c.b16 %v941, %v941
  %v1006 = vpack.c.b16 %v942, %v942
  %v1007 = vpack.c.b16 %v943, %v943
  %v1008 = vpack.c.b16 %v944, %v944
  %v1009 = vpack.c.b16 %v945, %v945
  %v1010 = vpack.c.b16 %v946, %v946
  %v1011 = vpack.c.b16 %v947, %v947
  %v1012 = vpack.c.b16 %v948, %v948
  %v1013 = vpack.c.b16 %v949, %v949
  %v1014 = vpack.c.b16 %v950, %v950
  %v1015 = vpack.c.b16 %v951, %v951
  %v1016 = vpack.c.b16 %v952, %v952
  %v1017 = vpack.c.b16 %v953, %v953
  %v1018 = vpack.c.b16 %v954, %v954
  %v1019 = vpack.c.b16 %v955, %v955
  %v1020 = vpack.c.b16 %v956, %v956
  %v1021 = vpack.c.b16 %v957, %v957
  %v1022 = vpack.c.b16 %v958, %v958
  %v1023 = vpack.c.b16 %v959, %v959
  %v1024 = vpack.c.b16 %v960, %v960
  %v1025 = vpack.c.b16 %v961, %v961
  %v1026 = vpack.c.b16 %v962, %v962
  %v1027 = vpack.c.b16 %v963, %v963
  %v1028 = vpack.c.b16 %v964, %v964
  %v1029 = vpack.c.b16 %v965, %v965
  %v1030 = vpack.c.b16 %v966, %v966
  %v1031 = vpack.c.b16 %v967, %v967
  %v1032 = vpack.c.b16 %v968, %v968
  %v1033 = vpack.c.b16 %v969, %v969
  %v1034 = vpack.c.b16 %v970, %v970
  %v1035 = vpack.c.b16 %v971, %v971
  %v1036 = vpack.c.b16 %v972, %v972
  %v1037 = vpack.c.b16 %v973, %v973
  %v1038 = vpack.c.b16 %v974, %v974
  %v1039 = vpack.c.b16 %v975, %v975
  %v1040 = vpack.c.b16 %v976, %v976
  %v1041 = vpack.c.b16 %v977, %v977
  %v1042 = vpack.c.b16 %v978, %v978
  %v1043 = vpack.c.b16 %v979, %v979
  %v1044 = vpack.c.b16 %v980, %v980
  %v1045 = vpack.c.b16 %v981, %v981
  %v1046 = vpack.c.b16 %v982, %v982
  %v1047 = vpack.c.b16 %v983, %v983
  %v1048 = vpack.c.b16 %v984, %v984
  %v1049 = vpack.c.b16 %v985, %v985
  %v1050 = vpack.c.b16 %v986, %v986
  %v1051 = vpack.c.b16 %v987, %v987
  %v1052 = vpack.c.b16 %v988, %v988
  %v1053 = vpack.c.b16 %v989, %v989
  %v1054 = vpack.c.b16 %v990, %v990
  %v1055 = vpack.c.b16 %v991, %v991
  %v1056 = vpack.c.b16 %v992, %v992
  %v1057 = vpack.c.b16 %v993, %v993
  %v1058 = vpack.c.b16 %v994, %v994
  %v1059 = vpack.c.b16 %v995, %v995
  %1124 = vst [vmem:[%s4] sm:$0xf] %v996
  %1125 = vst [vmem:[%s4 + $0x4] sm:$0xf] %v997
  %1126 = vst [vmem:[%s4 + $0x8] sm:$0xf] %v998
  %1127 = vst [vmem:[%s4 + $0xc] sm:$0xf] %v999
  %1128 = vst [vmem:[%s4 + $0x10] sm:$0xf] %v1000
  %1129 = vst [vmem:[%s4 + $0x14] sm:$0xf] %v1001
  %1130 = vst [vmem:[%s4 + $0x18] sm:$0xf] %v1002
  %1131 = vst [vmem:[%s4 + $0x1c] sm:$0xf] %v1003
  %1132 = vst [vmem:[%s4 + $0x20] sm:$0xf] %v1004
  %1133 = vst [vmem:[%s4 + $0x24] sm:$0xf] %v1005
  %1134 = vst [vmem:[%s4 + $0x28] sm:$0xf] %v1006
  %1135 = vst [vmem:[%s4 + $0x2c] sm:$0xf] %v1007
  %1136 = vst [vmem:[%s4 + $0x30] sm:$0xf] %v1008
  %1137 = vst [vmem:[%s4 + $0x34] sm:$0xf] %v1009
  %1138 = vst [vmem:[%s4 + $0x38] sm:$0xf] %v1010
  %1139 = vst [vmem:[%s4 + $0x3c] sm:$0xf] %v1011
  %1140 = vst [vmem:[%s4 + $0x40] sm:$0xf] %v1012
  %1141 = vst [vmem:[%s4 + $0x44] sm:$0xf] %v1013
  %1142 = vst [vmem:[%s4 + $0x48] sm:$0xf] %v1014
  %1143 = vst [vmem:[%s4 + $0x4c] sm:$0xf] %v1015
  %1144 = vst [vmem:[%s4 + $0x50] sm:$0xf] %v1016
  %1145 = vst [vmem:[%s4 + $0x54] sm:$0xf] %v1017
  %1146 = vst [vmem:[%s4 + $0x58] sm:$0xf] %v1018
  %1147 = vst [vmem:[%s4 + $0x5c] sm:$0xf] %v1019
  %1148 = vst [vmem:[%s4 + $0x60] sm:$0xf] %v1020
  %1149 = vst [vmem:[%s4 + $0x64] sm:$0xf] %v1021
  %1150 = vst [vmem:[%s4 + $0x68] sm:$0xf] %v1022
  %1151 = vst [vmem:[%s4 + $0x6c] sm:$0xf] %v1023
  %1152 = vst [vmem:[%s4 + $0x70] sm:$0xf] %v1024
  %1153 = vst [vmem:[%s4 + $0x74] sm:$0xf] %v1025
  %1154 = vst [vmem:[%s4 + $0x78] sm:$0xf] %v1026
  %1155 = vst [vmem:[%s4 + $0x7c] sm:$0xf] %v1027
  %1156 = vst [vmem:[%s4 + $0x80] sm:$0xf] %v1028
  %1157 = vst [vmem:[%s4 + $0x84] sm:$0xf] %v1029
  %1158 = vst [vmem:[%s4 + $0x88] sm:$0xf] %v1030
  %1159 = vst [vmem:[%s4 + $0x8c] sm:$0xf] %v1031
  %1160 = vst [vmem:[%s4 + $0x90] sm:$0xf] %v1032
  %1161 = vst [vmem:[%s4 + $0x94] sm:$0xf] %v1033
  %1162 = vst [vmem:[%s4 + $0x98] sm:$0xf] %v1034
  %1163 = vst [vmem:[%s4 + $0x9c] sm:$0xf] %v1035
  %1164 = vst [vmem:[%s4 + $0xa0] sm:$0xf] %v1036
  %1165 = vst [vmem:[%s4 + $0xa4] sm:$0xf] %v1037
  %1166 = vst [vmem:[%s4 + $0xa8] sm:$0xf] %v1038
  %1167 = vst [vmem:[%s4 + $0xac] sm:$0xf] %v1039
  %1168 = vst [vmem:[%s4 + $0xb0] sm:$0xf] %v1040
  %1169 = vst [vmem:[%s4 + $0xb4] sm:$0xf] %v1041
  %1170 = vst [vmem:[%s4 + $0xb8] sm:$0xf] %v1042
  %1171 = vst [vmem:[%s4 + $0xbc] sm:$0xf] %v1043
  %1172 = vst [vmem:[%s4 + $0xc0] sm:$0xf] %v1044
  %1173 = vst [vmem:[%s4 + $0xc4] sm:$0xf] %v1045
  %1174 = vst [vmem:[%s4 + $0xc8] sm:$0xf] %v1046
  %1175 = vst [vmem:[%s4 + $0xcc] sm:$0xf] %v1047
  %1176 = vst [vmem:[%s4 + $0xd0] sm:$0xf] %v1048
  %1177 = vst [vmem:[%s4 + $0xd4] sm:$0xf] %v1049
  %1178 = vst [vmem:[%s4 + $0xd8] sm:$0xf] %v1050
  %1179 = vst [vmem:[%s4 + $0xdc] sm:$0xf] %v1051
  %1180 = vst [vmem:[%s4 + $0xe0] sm:$0xf] %v1052
  %1181 = vst [vmem:[%s4 + $0xe4] sm:$0xf] %v1053
  %1182 = vst [vmem:[%s4 + $0xe8] sm:$0xf] %v1054
  %1183 = vst [vmem:[%s4 + $0xec] sm:$0xf] %v1055
  %1184 = vst [vmem:[%s4 + $0xf0] sm:$0xf] %v1056
  %1185 = vst [vmem:[%s4 + $0xf4] sm:$0xf] %v1057
  %1186 = vst [vmem:[%s4 + $0xf8] sm:$0xf] %v1058
  %1187 = vst [vmem:[%s4 + $0xfc] sm:$0xf] %v1059
  %v1188 = vadd.f32 %v614, %v617
  %v1189 = vadd.f32 %v1188, %v622
  %v1190 = vadd.f32 %v1189, %v625
  %v1191 = vadd.f32 %v1190, %v630
  %v1192 = vadd.f32 %v1191, %v633
  %v1193 = vadd.f32 %v1192, %v638
  %v1194 = vadd.f32 %v1193, %v641
  %v1195 = vadd.f32 %v1194, %v646
  %v1196 = vadd.f32 %v1195, %v649
  %v1197 = vadd.f32 %v1196, %v654
  %v1198 = vadd.f32 %v1197, %v657
  %v1199 = vadd.f32 %v1198, %v662
  %v1200 = vadd.f32 %v1199, %v665
  %v1201 = vadd.f32 %v1200, %v670
  %v1202 = vadd.f32 %v1201, %v673
  %v1203 = vadd.f32 %v1202, %v678
  %v1204 = vadd.f32 %v1203, %v681
  %v1205 = vadd.f32 %v1204, %v686
  %v1206 = vadd.f32 %v1205, %v689
  %v1207 = vadd.f32 %v1206, %v694
  %v1208 = vadd.f32 %v1207, %v697
  %v1209 = vadd.f32 %v1208, %v702
  %v1210 = vadd.f32 %v1209, %v705
  %v1211 = vadd.f32 %v1210, %v710
  %v1212 = vadd.f32 %v1211, %v713
  %v1213 = vadd.f32 %v1212, %v718
  %v1214 = vadd.f32 %v1213, %v721
  %v1215 = vadd.f32 %v1214, %v726
  %v1216 = vadd.f32 %v1215, %v729
  %v1217 = vadd.f32 %v1216, %v734
  %v1218 = vadd.f32 %v1217, %v737
  %v1219 = vadd.f32 %v1218, %v742
  %v1220 = vadd.f32 %v1219, %v745
  %v1221 = vadd.f32 %v1220, %v750
  %v1222 = vadd.f32 %v1221, %v753
  %v1223 = vadd.f32 %v1222, %v758
  %v1224 = vadd.f32 %v1223, %v761
  %v1225 = vadd.f32 %v1224, %v766
  %v1226 = vadd.f32 %v1225, %v769
  %v1227 = vadd.f32 %v1226, %v774
  %v1228 = vadd.f32 %v1227, %v777
  %v1229 = vadd.f32 %v1228, %v782
  %v1230 = vadd.f32 %v1229, %v785
  %v1231 = vadd.f32 %v1230, %v790
  %v1232 = vadd.f32 %v1231, %v793
  %v1233 = vadd.f32 %v1232, %v798
  %v1234 = vadd.f32 %v1233, %v801
  %v1235 = vadd.f32 %v1234, %v806
  %v1236 = vadd.f32 %v1235, %v809
  %v1237 = vadd.f32 %v1236, %v814
  %v1238 = vadd.f32 %v1237, %v817
  %v1239 = vadd.f32 %v1238, %v822
  %v1240 = vadd.f32 %v1239, %v825
  %v1241 = vadd.f32 %v1240, %v830
  %v1242 = vadd.f32 %v1241, %v833
  %v1243 = vadd.f32 %v1242, %v838
  %v1244 = vadd.f32 %v1243, %v841
  %v1245 = vadd.f32 %v1244, %v846
  %v1246 = vadd.f32 %v1245, %v849
  %v1247 = vadd.f32 %v1246, %v854
  %v1248 = vadd.f32 %v1247, %v857
  %v1249 = vadd.f32 %v1248, %v862
  %v1250 = vadd.f32 %v1249, %v865
  %v1251 = vrot.slane %v1250, 4
  %v1252 = vadd.f32 %v1250, %v1251
  %v1253 = vrot.slane %v1252, 2
  %v1254 = vadd.f32 %v1252, %v1253
  %v1255 = vrot.slane %v1254, 1
  %v1256 = vadd.f32 %v1254, %v1255
  %1257 = vst [vmem:[%s5] sm:$0xff] %v1256
  %v1258 = vmul.f32 %v614, %v614
  %v1259 = vmul.f32 %v617, %v617
  %v1260 = vmul.f32 %v622, %v622
  %v1261 = vmul.f32 %v625, %v625
  %v1262 = vmul.f32 %v630, %v630
  %v1263 = vmul.f32 %v633, %v633
  %v1264 = vmul.f32 %v638, %v638
  %v1265 = vmul.f32 %v641, %v641
  %v1266 = vmul.f32 %v646, %v646
  %v1267 = vmul.f32 %v649, %v649
  %v1268 = vmul.f32 %v654, %v654
  %v1269 = vmul.f32 %v657, %v657
  %v1270 = vmul.f32 %v662, %v662
  %v1271 = vmul.f32 %v665, %v665
  %v1272 = vmul.f32 %v670, %v670
  %v1273 = vmul.f32 %v673, %v673
  %v1274 = vmul.f32 %v678, %v678
  %v1275 = vmul.f32 %v681, %v681
  %v1276 = vmul.f32 %v686, %v686
  %v1277 = vmul.f32 %v689, %v689
  %v1278 = vmul.f32 %v694, %v694
  %v1279 = vmul.f32 %v697, %v697
  %v1280 = vmul.f32 %v702, %v702
  %v1281 = vmul.f32 %v705, %v705
  %v1282 = vmul.f32 %v710, %v710
  %v1283 = vmul.f32 %v713, %v713
  %v1284 = vmul.f32 %v718, %v718
  %v1285 = vmul.f32 %v721, %v721
  %v1286 = vmul.f32 %v726, %v726
  %v1287 = vmul.f32 %v729, %v729
  %v1288 = vmul.f32 %v734, %v734
  %v1289 = vmul.f32 %v737, %v737
  %v1290 = vmul.f32 %v742, %v742
  %v1291 = vmul.f32 %v745, %v745
  %v1292 = vmul.f32 %v750, %v750
  %v1293 = vmul.f32 %v753, %v753
  %v1294 = vmul.f32 %v758, %v758
  %v1295 = vmul.f32 %v761, %v761
  %v1296 = vmul.f32 %v766, %v766
  %v1297 = vmul.f32 %v769, %v769
  %v1298 = vmul.f32 %v774, %v774
  %v1299 = vmul.f32 %v777, %v777
  %v1300 = vmul.f32 %v782, %v782
  %v1301 = vmul.f32 %v785, %v785
  %v1302 = vmul.f32 %v790, %v790
  %v1303 = vmul.f32 %v793, %v793
  %v1304 = vmul.f32 %v798, %v798
  %v1305 = vmul.f32 %v801, %v801
  %v1306 = vmul.f32 %v806, %v806
  %v1307 = vmul.f32 %v809, %v809
  %v1308 = vmul.f32 %v814, %v814
  %v1309 = vmul.f32 %v817, %v817
  %v1310 = vmul.f32 %v822, %v822
  %v1311 = vmul.f32 %v825, %v825
  %v1312 = vmul.f32 %v830, %v830
  %v1313 = vmul.f32 %v833, %v833
  %v1314 = vmul.f32 %v838, %v838
  %v1315 = vmul.f32 %v841, %v841
  %v1316 = vmul.f32 %v846, %v846
  %v1317 = vmul.f32 %v849, %v849
  %v1318 = vmul.f32 %v854, %v854
  %v1319 = vmul.f32 %v857, %v857
  %v1320 = vmul.f32 %v862, %v862
  %v1321 = vmul.f32 %v865, %v865
  %v1322 = vadd.f32 %v1258, %v1259
  %v1323 = vadd.f32 %v1322, %v1260
  %v1324 = vadd.f32 %v1323, %v1261
  %v1325 = vadd.f32 %v1324, %v1262
  %v1326 = vadd.f32 %v1325, %v1263
  %v1327 = vadd.f32 %v1326, %v1264
  %v1328 = vadd.f32 %v1327, %v1265
  %v1329 = vadd.f32 %v1328, %v1266
  %v1330 = vadd.f32 %v1329, %v1267
  %v1331 = vadd.f32 %v1330, %v1268
  %v1332 = vadd.f32 %v1331, %v1269
  %v1333 = vadd.f32 %v1332, %v1270
  %v1334 = vadd.f32 %v1333, %v1271
  %v1335 = vadd.f32 %v1334, %v1272
  %v1336 = vadd.f32 %v1335, %v1273
  %v1337 = vadd.f32 %v1336, %v1274
  %v1338 = vadd.f32 %v1337, %v1275
  %v1339 = vadd.f32 %v1338, %v1276
  %v1340 = vadd.f32 %v1339, %v1277
  %v1341 = vadd.f32 %v1340, %v1278
  %v1342 = vadd.f32 %v1341, %v1279
  %v1343 = vadd.f32 %v1342, %v1280
  %v1344 = vadd.f32 %v1343, %v1281
  %v1345 = vadd.f32 %v1344, %v1282
  %v1346 = vadd.f32 %v1345, %v1283
  %v1347 = vadd.f32 %v1346, %v1284
  %v1348 = vadd.f32 %v1347, %v1285
  %v1349 = vadd.f32 %v1348, %v1286
  %v1350 = vadd.f32 %v1349, %v1287
  %v1351 = vadd.f32 %v1350, %v1288
  %v1352 = vadd.f32 %v1351, %v1289
  %v1353 = vadd.f32 %v1352, %v1290
  %v1354 = vadd.f32 %v1353, %v1291
  %v1355 = vadd.f32 %v1354, %v1292
  %v1356 = vadd.f32 %v1355, %v1293
  %v1357 = vadd.f32 %v1356, %v1294
  %v1358 = vadd.f32 %v1357, %v1295
  %v1359 = vadd.f32 %v1358, %v1296
  %v1360 = vadd.f32 %v1359, %v1297
  %v1361 = vadd.f32 %v1360, %v1298
  %v1362 = vadd.f32 %v1361, %v1299
  %v1363 = vadd.f32 %v1362, %v1300
  %v1364 = vadd.f32 %v1363, %v1301
  %v1365 = vadd.f32 %v1364, %v1302
  %v1366 = vadd.f32 %v1365, %v1303
  %v1367 = vadd.f32 %v1366, %v1304
  %v1368 = vadd.f32 %v1367, %v1305
  %v1369 = vadd.f32 %v1368, %v1306
  %v1370 = vadd.f32 %v1369, %v1307
  %v1371 = vadd.f32 %v1370, %v1308
  %v1372 = vadd.f32 %v1371, %v1309
  %v1373 = vadd.f32 %v1372, %v1310
  %v1374 = vadd.f32 %v1373, %v1311
  %v1375 = vadd.f32 %v1374, %v1312
  %v1376 = vadd.f32 %v1375, %v1313
  %v1377 = vadd.f32 %v1376, %v1314
  %v1378 = vadd.f32 %v1377, %v1315
  %v1379 = vadd.f32 %v1378, %v1316
  %v1380 = vadd.f32 %v1379, %v1317
  %v1381 = vadd.f32 %v1380, %v1318
  %v1382 = vadd.f32 %v1381, %v1319
  %v1383 = vadd.f32 %v1382, %v1320
  %v1384 = vadd.f32 %v1383, %v1321
  %v1385 = vrot.slane %v1384, 4
  %v1386 = vadd.f32 %v1384, %v1385
  %v1387 = vrot.slane %v1386, 2
  %v1388 = vadd.f32 %v1386, %v1387
  %v1389 = vrot.slane %v1388, 1
  %v1390 = vadd.f32 %v1388, %v1389
  %1391 = vst [vmem:[%s6] sm:$0xff] %v1390
  // Predicated region
  $region18: #{discriminator_stage_1.6} parent=0 // pred_check
    _
  $region19: #{discriminator_stage_1.6} parent=0 // pred_check_branch
    %1393 = sbr.rel (0) target = $region21
  $region20: #{discriminator_stage_1.6} parent=0 // pred_region
    _
  $region21: #{discriminator_stage_1.6} parent=0 // pred_fallthru
    _
  // Predicated region
  $region22: #{discriminator_stage_1.6} parent=0 // pred_check
    _
  $region23: #{discriminator_stage_1.6} parent=0 // pred_check_branch
    %1395 = sbr.rel (0) target = $region25
  $region24: #{discriminator_stage_1.6} parent=0 // pred_region
    _
  $region25: #{discriminator_stage_1.6} parent=0 // pred_fallthru
    _
  // Predicated region
  $region26: #{discriminator_stage_1.6} parent=0 // pred_check
    _
  $region27: #{discriminator_stage_1.6} parent=0 // pred_check_branch
    %1397 = sbr.rel (0) target = $region29
  $region28: #{discriminator_stage_1.6} parent=0 // pred_region
    _
  $region29: #{discriminator_stage_1.6} parent=0 // pred_fallthru
    _
  // Predicated region
  $region30: #{discriminator_stage_1.6} parent=0 // pred_check
    _
  $region31: #{discriminator_stage_1.6} parent=0 // pred_check_branch
    %1399 = sbr.rel (0) target = $region33
  $region32: #{discriminator_stage_1.6} parent=0 // pred_region
    _
  $region33: #{discriminator_stage_1.6} parent=0 // pred_fallthru
    _
  // Predicated region
  $region34: #{discriminator_stage_1.6} parent=0 // pred_check
    _
  $region35: #{discriminator_stage_1.6} parent=0 // pred_check_branch
    %1401 = sbr.rel (0) target = $region37
  $region36: #{discriminator_stage_1.6} parent=0 // pred_region
    _
  $region37: #{discriminator_stage_1.6} parent=0 // pred_fallthru
    _
  // Predicated region
  $region38: #{discriminator_stage_1.6} parent=0 // pred_check
    _
  $region39: #{discriminator_stage_1.6} parent=0 // pred_check_branch
    %1403 = sbr.rel (0) target = $region41
  $region40: #{discriminator_stage_1.6} parent=0 // pred_region
    _
  $region41: #{discriminator_stage_1.6} parent=0 // pred_fallthru
    _

// kernel: tile.27
$region0: #{tile.27}
  #allocation0 [shape = 's32[1]{0}', space=sflag, size = 0x4, scoped, tag = 'scoped memory for tile.27']
  %s0 = inlined_call_operand.vmem [shape: f32[16], index: 0, kind: input, shape index: {}]
  %s1 = inlined_call_operand.vmem [shape: f32[16,16], index: 1, kind: output, shape index: {}]
  // Predicated region
  $region2: #{tile.27} parent=0 // pred_check
    _
  $region3: #{tile.27} parent=0 // pred_check_branch
    %3 = sbr.rel (0) target = $region5
  $region4: #{tile.27} parent=0 // pred_region
    _
  $region5: #{tile.27} parent=0 // pred_fallthru
    _
  %v4 = vld [vmem:[%s0] ss:$0 sm:$0xff]
  %5 = vst [vmem:[%s1] sm:$0xff] %v4
  %s6 = scalar_lea.vmem %s1, 8
  %7 = vst [vmem:[%s6] sm:$0xff] %v4

// kernel: tile.28
$region0: #{tile.28}
  %s0 = inlined_call_operand.vmem [shape: f32[16,16], index: 0, kind: input, shape index: {}]
  %s1 = inlined_call_operand.vmem [shape: f32[1,256], index: 1, kind: output, shape index: {}]
  $region1: #{tile.28} parent=0
    #allocation0 [shape = 'u8[8192]{0}', space=vmem, size = 0x2000, scoped, tag = 'scoped mem for output reshape']
    %s2 = smov 3
    %v3 = vld [vmem:[%s0] ss:$8 sm:%s2]
    %vm4 = vcmask 130048
    %5 = vst.msk [vmem:[#allocation0] ss:$8 sm:$0x3] %vm4, %v3
    %s6 = scalar_lea.vmem %s0, 7
    %s7 = smov 3
    %v8 = vld [vmem:[%s6] ss:$8 sm:%s7]
    %9 = vrot.lane.b32.xlu0 %v8, 112
    %v10 = vpop.permute.xlu0 %9
    %vm11 = vcmask 1048448
    %12 = vst.msk [vmem:[#allocation0] ss:$8 sm:$0x3] %vm11, %v10
    %s13 = scalar_lea.vmem %s0, 6
    %s14 = smov 3
    %v15 = vld [vmem:[%s13] ss:$8 sm:%s14]
    %16 = vrot.lane.b32.xlu0 %v15, 96
    %v17 = vpop.permute.xlu0 %16
    %vm18 = vcmask 917248
    %19 = vst.msk [vmem:[#allocation0] ss:$8 sm:$0x3] %vm18, %v17
    %s20 = scalar_lea.vmem %s0, 5
    %s21 = smov 3
    %v22 = vld [vmem:[%s20] ss:$8 sm:%s21]
    %23 = vrot.lane.b32.xlu0 %v22, 80
    %v24 = vpop.permute.xlu0 %23
    %vm25 = vcmask 786048
    %26 = vst.msk [vmem:[#allocation0] ss:$8 sm:$0x3] %vm25, %v24
    %s27 = scalar_lea.vmem %s0, 4
    %s28 = smov 3
    %v29 = vld [vmem:[%s27] ss:$8 sm:%s28]
    %30 = vrot.lane.b32.xlu0 %v29, 64
    %v31 = vpop.permute.xlu0 %30
    %vm32 = vcmask 654848
    %33 = vst.msk [vmem:[#allocation0] ss:$8 sm:$0x3] %vm32, %v31
    %s34 = scalar_lea.vmem %s0, 3
    %s35 = smov 3
    %v36 = vld [vmem:[%s34] ss:$8 sm:%s35]
    %37 = vrot.lane.b32.xlu0 %v36, 48
    %v38 = vpop.permute.xlu0 %37
    %vm39 = vcmask 523648
    %40 = vst.msk [vmem:[#allocation0] ss:$8 sm:$0x3] %vm39, %v38
    %s41 = scalar_lea.vmem %s0, 2
    %s42 = smov 3
    %v43 = vld [vmem:[%s41] ss:$8 sm:%s42]
    %44 = vrot.lane.b32.xlu0 %v43, 32
    %v45 = vpop.permute.xlu0 %44
    %vm46 = vcmask 392448
    %47 = vst.msk [vmem:[#allocation0] ss:$8 sm:$0x3] %vm46, %v45
    %s48 = scalar_lea.vmem %s0, 1
    %s49 = smov 3
    %v50 = vld [vmem:[%s48] ss:$8 sm:%s49]
    %51 = vrot.lane.b32.xlu0 %v50, 16
    %v52 = vpop.permute.xlu0 %51
    %vm53 = vcmask 261248
    %54 = vst.msk [vmem:[#allocation0] ss:$8 sm:$0x3] %vm53, %v52
    %s56 = sshllo.u32 0, 1
    %v58 = vld [vmem:[#allocation0] sm:%s56]
    %s59 = sshllo.u32 0, 1
    %60 = vst [vmem:[%s1] sm:%s59] %v58
    %s61 = scalar_lea.vmem [#allocation0], 8
    %v62 = vld [vmem:[%s61] sm:%s56]
    %s63 = sshllo.u32 0, 1
    %s64 = scalar_lea.vmem %s1, 1
    %65 = vst [vmem:[%s64] sm:%s63] %v62

// kernel: discriminator_stage_1.7
$region0: #{discriminator_stage_1.7}
  #allocation0 [shape = 'u32[]', space=smem, size = 0x4, offset = 0x4, fixed_abs, tag = 'smem constant byte address 0x4 - core index']
  #allocation1 [shape = 'u32[144,128]{1,0:T(1,128)}', space=vmem, size = 0x12000, scoped, tag = 'internal scratch']
  %s0 = inlined_call_operand.vmem [shape: bf16[128,256], index: 0, kind: input, shape index: {}]
  %s1 = inlined_call_operand.vmem [shape: f32[1,256], index: 1, kind: input, shape index: {}]
  %s2 = inlined_call_operand.vmem [shape: f32[1,256], index: 2, kind: input, shape index: {}]
  %s3 = inlined_call_operand.vmem [shape: bf16[256,128], index: 3, kind: input, shape index: {}]
  %s4 = inlined_call_operand.vmem [shape: bf16[128,128], index: 4, kind: output, shape index: {0}]
  %s5 = inlined_call_operand.vmem [shape: f32[8,128], index: 5, kind: output, shape index: {1}]
  %s6 = inlined_call_operand.vmem [shape: f32[8,128], index: 6, kind: output, shape index: {2}]
  %7 = xla_tuple %s4, %s5, %s6
  %s8 = sld [smem:[#allocation0]]
  $region42: #{discriminator_stage_1.7} parent=0
    _
  %s10 = ssub.s32 1, %s8
  %s11 = scalar_select 0, %s10, %s8
  // Predicated region
  $region2: #{discriminator_stage_1.7} parent=0 // pred_check
    _
  $region3: #{discriminator_stage_1.7} parent=0 // pred_check_branch
    %13 = sbr.rel (0) target = $region5
  $region4: #{discriminator_stage_1.7} parent=0 // pred_region
    _
  $region5: #{discriminator_stage_1.7} parent=0 // pred_fallthru
    _
  // Predicated region
  $region6: #{discriminator_stage_1.7} parent=0 // pred_check
    _
  $region7: #{discriminator_stage_1.7} parent=0 // pred_check_branch
    %15 = sbr.rel (0) target = $region9
  $region8: #{discriminator_stage_1.7} parent=0 // pred_region
    _
  $region9: #{discriminator_stage_1.7} parent=0 // pred_fallthru
    _
  // Predicated region
  $region10: #{discriminator_stage_1.7} parent=0 // pred_check
    _
  $region11: #{discriminator_stage_1.7} parent=0 // pred_check_branch
    %17 = sbr.rel (0) target = $region13
  $region12: #{discriminator_stage_1.7} parent=0 // pred_region
    _
  $region13: #{discriminator_stage_1.7} parent=0 // pred_fallthru
    _
  // Predicated region
  $region14: #{discriminator_stage_1.7} parent=0 // pred_check
    _
  $region15: #{discriminator_stage_1.7} parent=0 // pred_check_branch
    %19 = sbr.rel (0) target = $region17
  $region16: #{discriminator_stage_1.7} parent=0 // pred_region
    _
  $region17: #{discriminator_stage_1.7} parent=0 // pred_fallthru
    _
  %v21 = vld [vmem:[%s0] sm:$0xff]
  %v22 = vld [vmem:[%s0 + $0x8] sm:$0xff]
  %v23 = vld [vmem:[%s0 + $0x10] sm:$0xff]
  %v24 = vld [vmem:[%s0 + $0x18] sm:$0xff]
  %v25 = vld [vmem:[%s0 + $0x20] sm:$0xff]
  %v26 = vld [vmem:[%s0 + $0x28] sm:$0xff]
  %v27 = vld [vmem:[%s0 + $0x30] sm:$0xff]
  %v28 = vld [vmem:[%s0 + $0x38] sm:$0xff]
  %v29 = vld [vmem:[%s0 + $0x40] sm:$0xff]
  %v30 = vld [vmem:[%s0 + $0x48] sm:$0xff]
  %v31 = vld [vmem:[%s0 + $0x50] sm:$0xff]
  %v32 = vld [vmem:[%s0 + $0x58] sm:$0xff]
  %v33 = vld [vmem:[%s0 + $0x60] sm:$0xff]
  %v34 = vld [vmem:[%s0 + $0x68] sm:$0xff]
  %v35 = vld [vmem:[%s0 + $0x70] sm:$0xff]
  %v36 = vld [vmem:[%s0 + $0x78] sm:$0xff]
  %v37 = vunpack.c.l.bf16 %v21
  %v38 = vunpack.c.h.bf16 %v21
  %v39 = vunpack.c.l.bf16 %v22
  %v40 = vunpack.c.h.bf16 %v22
  %v41 = vunpack.c.l.bf16 %v23
  %v42 = vunpack.c.h.bf16 %v23
  %v43 = vunpack.c.l.bf16 %v24
  %v44 = vunpack.c.h.bf16 %v24
  %v45 = vunpack.c.l.bf16 %v25
  %v46 = vunpack.c.h.bf16 %v25
  %v47 = vunpack.c.l.bf16 %v26
  %v48 = vunpack.c.h.bf16 %v26
  %v49 = vunpack.c.l.bf16 %v27
  %v50 = vunpack.c.h.bf16 %v27
  %v51 = vunpack.c.l.bf16 %v28
  %v52 = vunpack.c.h.bf16 %v28
  %v53 = vunpack.c.l.bf16 %v29
  %v54 = vunpack.c.h.bf16 %v29
  %v55 = vunpack.c.l.bf16 %v30
  %v56 = vunpack.c.h.bf16 %v30
  %v57 = vunpack.c.l.bf16 %v31
  %v58 = vunpack.c.h.bf16 %v31
  %v59 = vunpack.c.l.bf16 %v32
  %v60 = vunpack.c.h.bf16 %v32
  %v61 = vunpack.c.l.bf16 %v33
  %v62 = vunpack.c.h.bf16 %v33
  %v63 = vunpack.c.l.bf16 %v34
  %v64 = vunpack.c.h.bf16 %v34
  %v65 = vunpack.c.l.bf16 %v35
  %v66 = vunpack.c.h.bf16 %v35
  %v67 = vunpack.c.l.bf16 %v36
  %v68 = vunpack.c.h.bf16 %v36
  %v69 = vld [vmem:[%s1] sm:$0x3]
  %v71 = vlaneseq
  %v72 = vshrl.u32 %v71, 7
  %v73 = vsub.s32 0, %v72
  %v74 = vrot.slane %v69, %v73
  %v75 = vlaneseq
  %v76 = vshrl.u32 %v75, 7
  %v77 = vsub.s32 1, %v76
  %v78 = vrot.slane %v69, %v77
  %v81 = vmul.f32 %v37, %v74
  %v82 = vmul.f32 %v38, %v78
  %v83 = vmul.f32 %v39, %v74
  %v84 = vmul.f32 %v40, %v78
  %v85 = vmul.f32 %v41, %v74
  %v86 = vmul.f32 %v42, %v78
  %v87 = vmul.f32 %v43, %v74
  %v88 = vmul.f32 %v44, %v78
  %v89 = vmul.f32 %v45, %v74
  %v90 = vmul.f32 %v46, %v78
  %v91 = vmul.f32 %v47, %v74
  %v92 = vmul.f32 %v48, %v78
  %v93 = vmul.f32 %v49, %v74
  %v94 = vmul.f32 %v50, %v78
  %v95 = vmul.f32 %v51, %v74
  %v96 = vmul.f32 %v52, %v78
  %v97 = vmul.f32 %v53, %v74
  %v98 = vmul.f32 %v54, %v78
  %v99 = vmul.f32 %v55, %v74
  %v100 = vmul.f32 %v56, %v78
  %v101 = vmul.f32 %v57, %v74
  %v102 = vmul.f32 %v58, %v78
  %v103 = vmul.f32 %v59, %v74
  %v104 = vmul.f32 %v60, %v78
  %v105 = vmul.f32 %v61, %v74
  %v106 = vmul.f32 %v62, %v78
  %v107 = vmul.f32 %v63, %v74
  %v108 = vmul.f32 %v64, %v78
  %v109 = vmul.f32 %v65, %v74
  %v110 = vmul.f32 %v66, %v78
  %v111 = vmul.f32 %v67, %v74
  %v112 = vmul.f32 %v68, %v78
  %v113 = vld [vmem:[%s2] sm:$0x3]
  %v115 = vlaneseq
  %v116 = vshrl.u32 %v115, 7
  %v117 = vsub.s32 0, %v116
  %v118 = vrot.slane %v113, %v117
  %v119 = vlaneseq
  %v120 = vshrl.u32 %v119, 7
  %v121 = vsub.s32 1, %v120
  %v122 = vrot.slane %v113, %v121
  %v125 = vadd.f32 %v81, %v118
  %v126 = vadd.f32 %v82, %v122
  %v127 = vadd.f32 %v83, %v118
  %v128 = vadd.f32 %v84, %v122
  %v129 = vadd.f32 %v85, %v118
  %v130 = vadd.f32 %v86, %v122
  %v131 = vadd.f32 %v87, %v118
  %v132 = vadd.f32 %v88, %v122
  %v133 = vadd.f32 %v89, %v118
  %v134 = vadd.f32 %v90, %v122
  %v135 = vadd.f32 %v91, %v118
  %v136 = vadd.f32 %v92, %v122
  %v137 = vadd.f32 %v93, %v118
  %v138 = vadd.f32 %v94, %v122
  %v139 = vadd.f32 %v95, %v118
  %v140 = vadd.f32 %v96, %v122
  %v141 = vadd.f32 %v97, %v118
  %v142 = vadd.f32 %v98, %v122
  %v143 = vadd.f32 %v99, %v118
  %v144 = vadd.f32 %v100, %v122
  %v145 = vadd.f32 %v101, %v118
  %v146 = vadd.f32 %v102, %v122
  %v147 = vadd.f32 %v103, %v118
  %v148 = vadd.f32 %v104, %v122
  %v149 = vadd.f32 %v105, %v118
  %v150 = vadd.f32 %v106, %v122
  %v151 = vadd.f32 %v107, %v118
  %v152 = vadd.f32 %v108, %v122
  %v153 = vadd.f32 %v109, %v118
  %v154 = vadd.f32 %v110, %v122
  %v155 = vadd.f32 %v111, %v118
  %v156 = vadd.f32 %v112, %v122
  %vm157 = vcmp.gt.f32.partialorder %v125, 0.0
  %vm158 = vcmp.gt.f32.partialorder %v126, 0.0
  %vm159 = vcmp.gt.f32.partialorder %v127, 0.0
  %vm160 = vcmp.gt.f32.partialorder %v128, 0.0
  %vm161 = vcmp.gt.f32.partialorder %v129, 0.0
  %vm162 = vcmp.gt.f32.partialorder %v130, 0.0
  %vm163 = vcmp.gt.f32.partialorder %v131, 0.0
  %vm164 = vcmp.gt.f32.partialorder %v132, 0.0
  %vm165 = vcmp.gt.f32.partialorder %v133, 0.0
  %vm166 = vcmp.gt.f32.partialorder %v134, 0.0
  %vm167 = vcmp.gt.f32.partialorder %v135, 0.0
  %vm168 = vcmp.gt.f32.partialorder %v136, 0.0
  %vm169 = vcmp.gt.f32.partialorder %v137, 0.0
  %vm170 = vcmp.gt.f32.partialorder %v138, 0.0
  %vm171 = vcmp.gt.f32.partialorder %v139, 0.0
  %vm172 = vcmp.gt.f32.partialorder %v140, 0.0
  %vm173 = vcmp.gt.f32.partialorder %v141, 0.0
  %vm174 = vcmp.gt.f32.partialorder %v142, 0.0
  %vm175 = vcmp.gt.f32.partialorder %v143, 0.0
  %vm176 = vcmp.gt.f32.partialorder %v144, 0.0
  %vm177 = vcmp.gt.f32.partialorder %v145, 0.0
  %vm178 = vcmp.gt.f32.partialorder %v146, 0.0
  %vm179 = vcmp.gt.f32.partialorder %v147, 0.0
  %vm180 = vcmp.gt.f32.partialorder %v148, 0.0
  %vm181 = vcmp.gt.f32.partialorder %v149, 0.0
  %vm182 = vcmp.gt.f32.partialorder %v150, 0.0
  %vm183 = vcmp.gt.f32.partialorder %v151, 0.0
  %vm184 = vcmp.gt.f32.partialorder %v152, 0.0
  %vm185 = vcmp.gt.f32.partialorder %v153, 0.0
  %vm186 = vcmp.gt.f32.partialorder %v154, 0.0
  %vm187 = vcmp.gt.f32.partialorder %v155, 0.0
  %vm188 = vcmp.gt.f32.partialorder %v156, 0.0
  %v189 = vmul.f32 %v125, 0.2
  %v190 = vmul.f32 %v126, 0.2
  %v191 = vmul.f32 %v127, 0.2
  %v192 = vmul.f32 %v128, 0.2
  %v193 = vmul.f32 %v129, 0.2
  %v194 = vmul.f32 %v130, 0.2
  %v195 = vmul.f32 %v131, 0.2
  %v196 = vmul.f32 %v132, 0.2
  %v197 = vmul.f32 %v133, 0.2
  %v198 = vmul.f32 %v134, 0.2
  %v199 = vmul.f32 %v135, 0.2
  %v200 = vmul.f32 %v136, 0.2
  %v201 = vmul.f32 %v137, 0.2
  %v202 = vmul.f32 %v138, 0.2
  %v203 = vmul.f32 %v139, 0.2
  %v204 = vmul.f32 %v140, 0.2
  %v205 = vmul.f32 %v141, 0.2
  %v206 = vmul.f32 %v142, 0.2
  %v207 = vmul.f32 %v143, 0.2
  %v208 = vmul.f32 %v144, 0.2
  %v209 = vmul.f32 %v145, 0.2
  %v210 = vmul.f32 %v146, 0.2
  %v211 = vmul.f32 %v147, 0.2
  %v212 = vmul.f32 %v148, 0.2
  %v213 = vmul.f32 %v149, 0.2
  %v214 = vmul.f32 %v150, 0.2
  %v215 = vmul.f32 %v151, 0.2
  %v216 = vmul.f32 %v152, 0.2
  %v217 = vmul.f32 %v153, 0.2
  %v218 = vmul.f32 %v154, 0.2
  %v219 = vmul.f32 %v155, 0.2
  %v220 = vmul.f32 %v156, 0.2
  %v221 = vsel %vm157, %v125, %v189
  %v222 = vsel %vm158, %v126, %v190
  %v223 = vsel %vm159, %v127, %v191
  %v224 = vsel %vm160, %v128, %v192
  %v225 = vsel %vm161, %v129, %v193
  %v226 = vsel %vm162, %v130, %v194
  %v227 = vsel %vm163, %v131, %v195
  %v228 = vsel %vm164, %v132, %v196
  %v229 = vsel %vm165, %v133, %v197
  %v230 = vsel %vm166, %v134, %v198
  %v231 = vsel %vm167, %v135, %v199
  %v232 = vsel %vm168, %v136, %v200
  %v233 = vsel %vm169, %v137, %v201
  %v234 = vsel %vm170, %v138, %v202
  %v235 = vsel %vm171, %v139, %v203
  %v236 = vsel %vm172, %v140, %v204
  %v237 = vsel %vm173, %v141, %v205
  %v238 = vsel %vm174, %v142, %v206
  %v239 = vsel %vm175, %v143, %v207
  %v240 = vsel %vm176, %v144, %v208
  %v241 = vsel %vm177, %v145, %v209
  %v242 = vsel %vm178, %v146, %v210
  %v243 = vsel %vm179, %v147, %v211
  %v244 = vsel %vm180, %v148, %v212
  %v245 = vsel %vm181, %v149, %v213
  %v246 = vsel %vm182, %v150, %v214
  %v247 = vsel %vm183, %v151, %v215
  %v248 = vsel %vm184, %v152, %v216
  %v249 = vsel %vm185, %v153, %v217
  %v250 = vsel %vm186, %v154, %v218
  %v251 = vsel %vm187, %v155, %v219
  %v252 = vsel %vm188, %v156, %v220
  %v253 = vpack.c.bf16 %v223, %v221
  %v254 = vpack.c.bf16 %v224, %v222
  %v255 = vpack.c.bf16 %v227, %v225
  %v256 = vpack.c.bf16 %v228, %v226
  %v257 = vpack.c.bf16 %v231, %v229
  %v258 = vpack.c.bf16 %v232, %v230
  %v259 = vpack.c.bf16 %v235, %v233
  %v260 = vpack.c.bf16 %v236, %v234
  %v261 = vpack.c.bf16 %v239, %v237
  %v262 = vpack.c.bf16 %v240, %v238
  %v263 = vpack.c.bf16 %v243, %v241
  %v264 = vpack.c.bf16 %v244, %v242
  %v265 = vpack.c.bf16 %v247, %v245
  %v266 = vpack.c.bf16 %v248, %v246
  %v267 = vpack.c.bf16 %v251, %v249
  %v268 = vpack.c.bf16 %v252, %v250
  %v269 = vld [vmem:[%s3] sm:$0xf]
  %v270 = vld [vmem:[%s3 + $0x4] sm:$0xf]
  %v271 = vld [vmem:[%s3 + $0x8] sm:$0xf]
  %v272 = vld [vmem:[%s3 + $0xc] sm:$0xf]
  %v273 = vld [vmem:[%s3 + $0x10] sm:$0xf]
  %v274 = vld [vmem:[%s3 + $0x14] sm:$0xf]
  %v275 = vld [vmem:[%s3 + $0x18] sm:$0xf]
  %v276 = vld [vmem:[%s3 + $0x1c] sm:$0xf]
  %v277 = vld [vmem:[%s3 + $0x20] sm:$0xf]
  %v278 = vld [vmem:[%s3 + $0x24] sm:$0xf]
  %v279 = vld [vmem:[%s3 + $0x28] sm:$0xf]
  %v280 = vld [vmem:[%s3 + $0x2c] sm:$0xf]
  %v281 = vld [vmem:[%s3 + $0x30] sm:$0xf]
  %v282 = vld [vmem:[%s3 + $0x34] sm:$0xf]
  %v283 = vld [vmem:[%s3 + $0x38] sm:$0xf]
  %v284 = vld [vmem:[%s3 + $0x3c] sm:$0xf]
  %v285 = vld [vmem:[%s3 + $0x40] sm:$0xf]
  %v286 = vld [vmem:[%s3 + $0x44] sm:$0xf]
  %v287 = vld [vmem:[%s3 + $0x48] sm:$0xf]
  %v288 = vld [vmem:[%s3 + $0x4c] sm:$0xf]
  %v289 = vld [vmem:[%s3 + $0x50] sm:$0xf]
  %v290 = vld [vmem:[%s3 + $0x54] sm:$0xf]
  %v291 = vld [vmem:[%s3 + $0x58] sm:$0xf]
  %v292 = vld [vmem:[%s3 + $0x5c] sm:$0xf]
  %v293 = vld [vmem:[%s3 + $0x60] sm:$0xf]
  %v294 = vld [vmem:[%s3 + $0x64] sm:$0xf]
  %v295 = vld [vmem:[%s3 + $0x68] sm:$0xf]
  %v296 = vld [vmem:[%s3 + $0x6c] sm:$0xf]
  %v297 = vld [vmem:[%s3 + $0x70] sm:$0xf]
  %v298 = vld [vmem:[%s3 + $0x74] sm:$0xf]
  %v299 = vld [vmem:[%s3 + $0x78] sm:$0xf]
  %v300 = vld [vmem:[%s3 + $0x7c] sm:$0xf]
  %v333 = vunpack.c.l.b16 %v269
  %v334 = vunpack.c.l.b16 %v270
  %v335 = vunpack.c.l.b16 %v271
  %v336 = vunpack.c.l.b16 %v272
  %v337 = vunpack.c.l.b16 %v273
  %v338 = vunpack.c.l.b16 %v274
  %v339 = vunpack.c.l.b16 %v275
  %v340 = vunpack.c.l.b16 %v276
  %v341 = vunpack.c.l.b16 %v277
  %v342 = vunpack.c.l.b16 %v278
  %v343 = vunpack.c.l.b16 %v279
  %v344 = vunpack.c.l.b16 %v280
  %v345 = vunpack.c.l.b16 %v281
  %v346 = vunpack.c.l.b16 %v282
  %v347 = vunpack.c.l.b16 %v283
  %v348 = vunpack.c.l.b16 %v284
  %v349 = vunpack.c.l.b16 %v285
  %v350 = vunpack.c.l.b16 %v286
  %v351 = vunpack.c.l.b16 %v287
  %v352 = vunpack.c.l.b16 %v288
  %v353 = vunpack.c.l.b16 %v289
  %v354 = vunpack.c.l.b16 %v290
  %v355 = vunpack.c.l.b16 %v291
  %v356 = vunpack.c.l.b16 %v292
  %v357 = vunpack.c.l.b16 %v293
  %v358 = vunpack.c.l.b16 %v294
  %v359 = vunpack.c.l.b16 %v295
  %v360 = vunpack.c.l.b16 %v296
  %v361 = vunpack.c.l.b16 %v297
  %v362 = vunpack.c.l.b16 %v298
  %v363 = vunpack.c.l.b16 %v299
  %v364 = vunpack.c.l.b16 %v300
  %v365 = vpack.c.b16 %v334, %v333
  %v366 = vpack.c.b16 %v336, %v335
  %v367 = vpack.c.b16 %v338, %v337
  %v368 = vpack.c.b16 %v340, %v339
  %v369 = vpack.c.b16 %v342, %v341
  %v370 = vpack.c.b16 %v344, %v343
  %v371 = vpack.c.b16 %v346, %v345
  %v372 = vpack.c.b16 %v348, %v347
  %v373 = vpack.c.b16 %v350, %v349
  %v374 = vpack.c.b16 %v352, %v351
  %v375 = vpack.c.b16 %v354, %v353
  %v376 = vpack.c.b16 %v356, %v355
  %v377 = vpack.c.b16 %v358, %v357
  %v378 = vpack.c.b16 %v360, %v359
  %v379 = vpack.c.b16 %v362, %v361
  %v380 = vpack.c.b16 %v364, %v363
  %397 = vmatprep.subr.bf16.mxu0 0
  %398 = vmatpush1.bf16.msra.mxu0 %v365
  %399 = vmatprep.subr.bf16.mxu0 0
  %400 = vmatpush1.bf16.msra.mxu0 %v366
  %401 = vmatprep.subr.bf16.mxu0 0
  %402 = vmatpush1.bf16.msra.mxu0 %v367
  %403 = vmatprep.subr.bf16.mxu0 0
  %404 = vmatpush1.bf16.msra.mxu0 %v368
  %405 = vmatprep.subr.bf16.mxu0 0
  %406 = vmatpush1.bf16.msra.mxu0 %v369
  %407 = vmatprep.subr.bf16.mxu0 0
  %408 = vmatpush1.bf16.msra.mxu0 %v370
  %409 = vmatprep.subr.bf16.mxu0 0
  %410 = vmatpush1.bf16.msra.mxu0 %v371
  %411 = vmatprep.subr.bf16.mxu0 0
  %412 = vmatpush1.bf16.msra.mxu0 %v372
  %413 = vmatprep.subr.bf16.mxu0 0
  %414 = vmatpush1.bf16.msra.mxu0 %v373
  %415 = vmatprep.subr.bf16.mxu0 0
  %416 = vmatpush1.bf16.msra.mxu0 %v374
  %417 = vmatprep.subr.bf16.mxu0 0
  %418 = vmatpush1.bf16.msra.mxu0 %v375
  %419 = vmatprep.subr.bf16.mxu0 0
  %420 = vmatpush1.bf16.msra.mxu0 %v376
  %421 = vmatprep.subr.bf16.mxu0 0
  %422 = vmatpush1.bf16.msra.mxu0 %v377
  %423 = vmatprep.subr.bf16.mxu0 0
  %424 = vmatpush1.bf16.msra.mxu0 %v378
  %425 = vmatprep.subr.bf16.mxu0 0
  %426 = vmatpush1.bf16.msra.mxu0 %v379
  %427 = vmatprep.subr.bf16.mxu0 0
  %428 = vmatpush1.bf16.msra.mxu0 %v380
  %429 = vmatprep.mubr.bf16.mxu0 %v254
  %430 = vmatmul.mubr.bf16.gmra.mrb[0].mxu0 %v253
  %v431 = vpop.f32.mrb[0].mxu0
  %v432 = vadd.f32 0.0, %v431
  %v433 = vpop.f32.mrb[0].mxu0
  %v434 = vpop.f32.mrb[0].mxu0
  %v435 = vadd.f32 0.0, %v434
  %v436 = vpop.f32.mrb[0].mxu0
  %437 = vmatprep.mubr.bf16.mxu0 %v256
  %438 = vmatmul.mubr.bf16.gmra.mrb[0].mxu0 %v255
  %v439 = vpop.f32.mrb[0].mxu0
  %v440 = vadd.f32 0.0, %v439
  %v441 = vpop.f32.mrb[0].mxu0
  %v442 = vpop.f32.mrb[0].mxu0
  %v443 = vadd.f32 0.0, %v442
  %v444 = vpop.f32.mrb[0].mxu0
  %445 = vmatprep.mubr.bf16.mxu0 %v258
  %446 = vmatmul.mubr.bf16.gmra.mrb[0].mxu0 %v257
  %v447 = vpop.f32.mrb[0].mxu0
  %v448 = vadd.f32 0.0, %v447
  %v449 = vpop.f32.mrb[0].mxu0
  %v450 = vpop.f32.mrb[0].mxu0
  %v451 = vadd.f32 0.0, %v450
  %v452 = vpop.f32.mrb[0].mxu0
  %453 = vmatprep.mubr.bf16.mxu0 %v260
  %454 = vmatmul.mubr.bf16.gmra.mrb[0].mxu0 %v259
  %v455 = vpop.f32.mrb[0].mxu0
  %v456 = vadd.f32 0.0, %v455
  %v457 = vpop.f32.mrb[0].mxu0
  %v458 = vpop.f32.mrb[0].mxu0
  %v459 = vadd.f32 0.0, %v458
  %v460 = vpop.f32.mrb[0].mxu0
  %461 = vmatprep.mubr.bf16.mxu0 %v262
  %462 = vmatmul.mubr.bf16.gmra.mrb[0].mxu0 %v261
  %v463 = vpop.f32.mrb[0].mxu0
  %v464 = vadd.f32 0.0, %v463
  %v465 = vpop.f32.mrb[0].mxu0
  %v466 = vpop.f32.mrb[0].mxu0
  %v467 = vadd.f32 0.0, %v466
  %v468 = vpop.f32.mrb[0].mxu0
  %469 = vmatprep.mubr.bf16.mxu0 %v264
  %470 = vmatmul.mubr.bf16.gmra.mrb[0].mxu0 %v263
  %v471 = vpop.f32.mrb[0].mxu0
  %v472 = vadd.f32 0.0, %v471
  %v473 = vpop.f32.mrb[0].mxu0
  %v474 = vpop.f32.mrb[0].mxu0
  %v475 = vadd.f32 0.0, %v474
  %v476 = vpop.f32.mrb[0].mxu0
  %477 = vmatprep.mubr.bf16.mxu0 %v266
  %478 = vmatmul.mubr.bf16.gmra.mrb[0].mxu0 %v265
  %v479 = vpop.f32.mrb[0].mxu0
  %v480 = vadd.f32 0.0, %v479
  %v481 = vpop.f32.mrb[0].mxu0
  %v482 = vpop.f32.mrb[0].mxu0
  %v483 = vadd.f32 0.0, %v482
  %v484 = vpop.f32.mrb[0].mxu0
  %485 = vmatprep.mubr.bf16.mxu0 %v268
  %486 = vmatmul.mubr.bf16.gmra.mrb[0].mxu0 %v267
  %v487 = vpop.f32.mrb[0].mxu0
  %v488 = vadd.f32 0.0, %v487
  %v489 = vpop.f32.mrb[0].mxu0
  %v490 = vpop.f32.mrb[0].mxu0
  %v491 = vadd.f32 0.0, %v490
  %v492 = vpop.f32.mrb[0].mxu0
  %493 = vdwg.mxu0
  %v494 = vpack.c.bf16 %v435, %v432
  %v495 = vpack.c.bf16 %v443, %v440
  %v496 = vpack.c.bf16 %v451, %v448
  %v497 = vpack.c.bf16 %v459, %v456
  %v498 = vpack.c.bf16 %v467, %v464
  %v499 = vpack.c.bf16 %v475, %v472
  %v500 = vpack.c.bf16 %v483, %v480
  %v501 = vpack.c.bf16 %v491, %v488
  %v510 = vunpack.c.l.b16 %v494
  %v511 = vunpack.c.h.b16 %v494
  %v512 = vunpack.c.l.b16 %v495
  %v513 = vunpack.c.h.b16 %v495
  %v514 = vunpack.c.l.b16 %v496
  %v515 = vunpack.c.h.b16 %v496
  %v516 = vunpack.c.l.b16 %v497
  %v517 = vunpack.c.h.b16 %v497
  %v518 = vunpack.c.l.b16 %v498
  %v519 = vunpack.c.h.b16 %v498
  %v520 = vunpack.c.l.b16 %v499
  %v521 = vunpack.c.h.b16 %v499
  %v522 = vunpack.c.l.b16 %v500
  %v523 = vunpack.c.h.b16 %v500
  %v524 = vunpack.c.l.b16 %v501
  %v525 = vunpack.c.h.b16 %v501
  %v526 = vpack.c.b16 %v510, %v510
  %v527 = vpack.c.b16 %v511, %v511
  %v528 = vpack.c.b16 %v512, %v512
  %v529 = vpack.c.b16 %v513, %v513
  %v530 = vpack.c.b16 %v514, %v514
  %v531 = vpack.c.b16 %v515, %v515
  %v532 = vpack.c.b16 %v516, %v516
  %v533 = vpack.c.b16 %v517, %v517
  %v534 = vpack.c.b16 %v518, %v518
  %v535 = vpack.c.b16 %v519, %v519
  %v536 = vpack.c.b16 %v520, %v520
  %v537 = vpack.c.b16 %v521, %v521
  %v538 = vpack.c.b16 %v522, %v522
  %v539 = vpack.c.b16 %v523, %v523
  %v540 = vpack.c.b16 %v524, %v524
  %v541 = vpack.c.b16 %v525, %v525
  %558 = vst [vmem:[%s4] sm:$0xf] %v526
  %559 = vst [vmem:[%s4 + $0x4] sm:$0xf] %v527
  %560 = vst [vmem:[%s4 + $0x8] sm:$0xf] %v528
  %561 = vst [vmem:[%s4 + $0xc] sm:$0xf] %v529
  %562 = vst [vmem:[%s4 + $0x10] sm:$0xf] %v530
  %563 = vst [vmem:[%s4 + $0x14] sm:$0xf] %v531
  %564 = vst [vmem:[%s4 + $0x18] sm:$0xf] %v532
  %565 = vst [vmem:[%s4 + $0x1c] sm:$0xf] %v533
  %566 = vst [vmem:[%s4 + $0x20] sm:$0xf] %v534
  %567 = vst [vmem:[%s4 + $0x24] sm:$0xf] %v535
  %568 = vst [vmem:[%s4 + $0x28] sm:$0xf] %v536
  %569 = vst [vmem:[%s4 + $0x2c] sm:$0xf] %v537
  %570 = vst [vmem:[%s4 + $0x30] sm:$0xf] %v538
  %571 = vst [vmem:[%s4 + $0x34] sm:$0xf] %v539
  %572 = vst [vmem:[%s4 + $0x38] sm:$0xf] %v540
  %573 = vst [vmem:[%s4 + $0x3c] sm:$0xf] %v541
  %v574 = vadd.f32 %v432, %v435
  %v575 = vadd.f32 %v574, %v440
  %v576 = vadd.f32 %v575, %v443
  %v577 = vadd.f32 %v576, %v448
  %v578 = vadd.f32 %v577, %v451
  %v579 = vadd.f32 %v578, %v456
  %v580 = vadd.f32 %v579, %v459
  %v581 = vadd.f32 %v580, %v464
  %v582 = vadd.f32 %v581, %v467
  %v583 = vadd.f32 %v582, %v472
  %v584 = vadd.f32 %v583, %v475
  %v585 = vadd.f32 %v584, %v480
  %v586 = vadd.f32 %v585, %v483
  %v587 = vadd.f32 %v586, %v488
  %v588 = vadd.f32 %v587, %v491
  %v589 = vrot.slane %v588, 4
  %v590 = vadd.f32 %v588, %v589
  %v591 = vrot.slane %v590, 2
  %v592 = vadd.f32 %v590, %v591
  %v593 = vrot.slane %v592, 1
  %v594 = vadd.f32 %v592, %v593
  %595 = vst [vmem:[%s5] sm:$0xff] %v594
  %v596 = vmul.f32 %v432, %v432
  %v597 = vmul.f32 %v435, %v435
  %v598 = vmul.f32 %v440, %v440
  %v599 = vmul.f32 %v443, %v443
  %v600 = vmul.f32 %v448, %v448
  %v601 = vmul.f32 %v451, %v451
  %v602 = vmul.f32 %v456, %v456
  %v603 = vmul.f32 %v459, %v459
  %v604 = vmul.f32 %v464, %v464
  %v605 = vmul.f32 %v467, %v467
  %v606 = vmul.f32 %v472, %v472
  %v607 = vmul.f32 %v475, %v475
  %v608 = vmul.f32 %v480, %v480
  %v609 = vmul.f32 %v483, %v483
  %v610 = vmul.f32 %v488, %v488
  %v611 = vmul.f32 %v491, %v491
  %v612 = vadd.f32 %v596, %v597
  %v613 = vadd.f32 %v612, %v598
  %v614 = vadd.f32 %v613, %v599
  %v615 = vadd.f32 %v614, %v600
  %v616 = vadd.f32 %v615, %v601
  %v617 = vadd.f32 %v616, %v602
  %v618 = vadd.f32 %v617, %v603
  %v619 = vadd.f32 %v618, %v604
  %v620 = vadd.f32 %v619, %v605
  %v621 = vadd.f32 %v620, %v606
  %v622 = vadd.f32 %v621, %v607
  %v623 = vadd.f32 %v622, %v608
  %v624 = vadd.f32 %v623, %v609
  %v625 = vadd.f32 %v624, %v610
  %v626 = vadd.f32 %v625, %v611
  %v627 = vrot.slane %v626, 4
  %v628 = vadd.f32 %v626, %v627
  %v629 = vrot.slane %v628, 2
  %v630 = vadd.f32 %v628, %v629
  %v631 = vrot.slane %v630, 1
  %v632 = vadd.f32 %v630, %v631
  %633 = vst [vmem:[%s6] sm:$0xff] %v632
  // Predicated region
  $region18: #{discriminator_stage_1.7} parent=0 // pred_check
    _
  $region19: #{discriminator_stage_1.7} parent=0 // pred_check_branch
    %635 = sbr.rel (0) target = $region21
  $region20: #{discriminator_stage_1.7} parent=0 // pred_region
    _
  $region21: #{discriminator_stage_1.7} parent=0 // pred_fallthru
    _
  // Predicated region
  $region22: #{discriminator_stage_1.7} parent=0 // pred_check
    _
  $region23: #{discriminator_stage_1.7} parent=0 // pred_check_branch
    %637 = sbr.rel (0) target = $region25
  $region24: #{discriminator_stage_1.7} parent=0 // pred_region
    _
  $region25: #{discriminator_stage_1.7} parent=0 // pred_fallthru
    _
  // Predicated region
  $region26: #{discriminator_stage_1.7} parent=0 // pred_check
    _
  $region27: #{discriminator_stage_1.7} parent=0 // pred_check_branch
    %639 = sbr.rel (0) target = $region29
  $region28: #{discriminator_stage_1.7} parent=0 // pred_region
    _
  $region29: #{discriminator_stage_1.7} parent=0 // pred_fallthru
    _
  // Predicated region
  $region30: #{discriminator_stage_1.7} parent=0 // pred_check
    _
  $region31: #{discriminator_stage_1.7} parent=0 // pred_check_branch
    %641 = sbr.rel (0) target = $region33
  $region32: #{discriminator_stage_1.7} parent=0 // pred_region
    _
  $region33: #{discriminator_stage_1.7} parent=0 // pred_fallthru
    _
  // Predicated region
  $region34: #{discriminator_stage_1.7} parent=0 // pred_check
    _
  $region35: #{discriminator_stage_1.7} parent=0 // pred_check_branch
    %643 = sbr.rel (0) target = $region37
  $region36: #{discriminator_stage_1.7} parent=0 // pred_region
    _
  $region37: #{discriminator_stage_1.7} parent=0 // pred_fallthru
    _
  // Predicated region
  $region38: #{discriminator_stage_1.7} parent=0 // pred_check
    _
  $region39: #{discriminator_stage_1.7} parent=0 // pred_check_branch
    %645 = sbr.rel (0) target = $region41
  $region40: #{discriminator_stage_1.7} parent=0 // pred_region
    _
  $region41: #{discriminator_stage_1.7} parent=0 // pred_fallthru
    _

// kernel: tile.37
$region0: #{tile.37}
  #allocation0 [shape = 's32[1]{0}', space=sflag, size = 0x4, scoped, tag = 'scoped memory for tile.37']
  %s0 = inlined_call_operand.vmem [shape: f32[32], index: 0, kind: input, shape index: {}]
  %s1 = inlined_call_operand.vmem [shape: f32[16,32], index: 1, kind: output, shape index: {}]
  // Predicated region
  $region2: #{tile.37} parent=0 // pred_check
    _
  $region3: #{tile.37} parent=0 // pred_check_branch
    %3 = sbr.rel (0) target = $region5
  $region4: #{tile.37} parent=0 // pred_region
    _
  $region5: #{tile.37} parent=0 // pred_fallthru
    _
  %v4 = vld [vmem:[%s0] ss:$0 sm:$0xff]
  %5 = vst [vmem:[%s1] sm:$0xff] %v4
  %s6 = scalar_lea.vmem %s1, 8
  %7 = vst [vmem:[%s6] sm:$0xff] %v4

// kernel: tile.38
$region0: #{tile.38}
  %s0 = inlined_call_operand.vmem [shape: f32[16,32], index: 0, kind: input, shape index: {}]
  %s1 = inlined_call_operand.vmem [shape: f32[1,512], index: 1, kind: output, shape index: {}]
  $region1: #{tile.38} parent=0
    #allocation0 [shape = 'u8[16384]{0}', space=vmem, size = 0x4000, scoped, tag = 'scoped mem for output reshape']
    %v2 = vld [vmem:[%s0] ss:$4 sm:$0xf]
    %vm3 = vcmask 261120
    %4 = vst.msk [vmem:[#allocation0] ss:$8 sm:$0xf] %vm3, %v2
    %s5 = scalar_lea.vmem %s0, 3
    %v6 = vld [vmem:[%s5] ss:$4 sm:$0xf]
    %7 = vrot.lane.b32.xlu0 %v6, 96
    %v8 = vpop.permute.xlu0 %7
    %vm9 = vcmask 1048320
    %10 = vst.msk [vmem:[#allocation0] ss:$8 sm:$0xf] %vm9, %v8
    %s11 = scalar_lea.vmem %s0, 2
    %v12 = vld [vmem:[%s11] ss:$4 sm:$0xf]
    %13 = vrot.lane.b32.xlu0 %v12, 64
    %v14 = vpop.permute.xlu0 %13
    %vm15 = vcmask 785920
    %16 = vst.msk [vmem:[#allocation0] ss:$8 sm:$0xf] %vm15, %v14
    %s17 = scalar_lea.vmem %s0, 1
    %v18 = vld [vmem:[%s17] ss:$4 sm:$0xf]
    %19 = vrot.lane.b32.xlu0 %v18, 32
    %v20 = vpop.permute.xlu0 %19
    %vm21 = vcmask 523520
    %22 = vst.msk [vmem:[#allocation0] ss:$8 sm:$0xf] %vm21, %v20
    %s24 = sshllo.u32 0, 1
    %v26 = vld [vmem:[#allocation0] sm:%s24]
    %s27 = sshllo.u32 0, 1
    %28 = vst [vmem:[%s1] sm:%s27] %v26
    %s29 = scalar_lea.vmem [#allocation0], 8
    %v30 = vld [vmem:[%s29] sm:%s24]
    %s31 = sshllo.u32 0, 1
    %s32 = scalar_lea.vmem %s1, 1
    %33 = vst [vmem:[%s32] sm:%s31] %v30
    %s34 = scalar_lea.vmem [#allocation0], 16
    %v35 = vld [vmem:[%s34] sm:%s24]
    %s36 = sshllo.u32 0, 1
    %s37 = smul.addr 1, 2
    %s38 = scalar_lea.vmem %s1, %s37
    %39 = vst [vmem:[%s38] sm:%s36] %v35
    %s40 = scalar_lea.vmem [#allocation0], 24
    %v41 = vld [vmem:[%s40] sm:%s24]
    %s42 = sshllo.u32 0, 1
    %s43 = smul.addr 1, 3
    %s44 = scalar_lea.vmem %s1, %s43
    %45 = vst [vmem:[%s44] sm:%s42] %v41

// kernel: discriminator_stage_1.9
$region0: #{discriminator_stage_1.9}
  #allocation0 [shape = 'u32[]', space=smem, size = 0x4, offset = 0x4, fixed_abs, tag = 'smem constant byte address 0x4 - core index']
  #allocation1 [shape = 'u32[144,128]{1,0:T(1,128)}', space=vmem, size = 0x12000, scoped, tag = 'internal scratch']
  %s0 = inlined_call_operand.vmem [shape: bf16[32,128], index: 0, kind: input, shape index: {}]
  %s1 = inlined_call_operand.vmem [shape: f32[1,128], index: 1, kind: input, shape index: {}]
  %s2 = inlined_call_operand.vmem [shape: f32[1,128], index: 2, kind: input, shape index: {}]
  %s3 = inlined_call_operand.vmem [shape: f32[16,128], index: 3, kind: input, shape index: {}]
  %s4 = inlined_call_operand.vmem [shape: f32[2,1], index: 4, kind: output, shape index: {}]
  %s5 = sld [smem:[#allocation0]]
  $region26: #{discriminator_stage_1.9} parent=0
    _
  %s7 = ssub.s32 1, %s5
  %s8 = scalar_select 0, %s7, %s5
  // Predicated region
  $region2: #{discriminator_stage_1.9} parent=0 // pred_check
    _
  $region3: #{discriminator_stage_1.9} parent=0 // pred_check_branch
    %10 = sbr.rel (0) target = $region5
  $region4: #{discriminator_stage_1.9} parent=0 // pred_region
    _
  $region5: #{discriminator_stage_1.9} parent=0 // pred_fallthru
    _
  // Predicated region
  $region6: #{discriminator_stage_1.9} parent=0 // pred_check
    _
  $region7: #{discriminator_stage_1.9} parent=0 // pred_check_branch
    %12 = sbr.rel (0) target = $region9
  $region8: #{discriminator_stage_1.9} parent=0 // pred_region
    _
  $region9: #{discriminator_stage_1.9} parent=0 // pred_fallthru
    _
  // Predicated region
  $region10: #{discriminator_stage_1.9} parent=0 // pred_check
    _
  $region11: #{discriminator_stage_1.9} parent=0 // pred_check_branch
    %14 = sbr.rel (0) target = $region13
  $region12: #{discriminator_stage_1.9} parent=0 // pred_region
    _
  $region13: #{discriminator_stage_1.9} parent=0 // pred_fallthru
    _
  // Predicated region
  $region14: #{discriminator_stage_1.9} parent=0 // pred_check
    _
  $region15: #{discriminator_stage_1.9} parent=0 // pred_check_branch
    %16 = sbr.rel (0) target = $region17
  $region16: #{discriminator_stage_1.9} parent=0 // pred_region
    _
  $region17: #{discriminator_stage_1.9} parent=0 // pred_fallthru
    _
  %v17 = vld [vmem:[%s0] sm:$0xf]
  %v18 = vld [vmem:[%s0 + $0x4] sm:$0xf]
  %v19 = vld [vmem:[%s0 + $0x8] sm:$0xf]
  %v20 = vld [vmem:[%s0 + $0xc] sm:$0xf]
  %v21 = vunpack.c.l.bf16 %v17
  %v22 = vunpack.c.l.bf16 %v18
  %v23 = vunpack.c.l.bf16 %v19
  %v24 = vunpack.c.l.bf16 %v20
  %v25 = vld [vmem:[%s1] sm:$0x1]
  %v27 = vlaneseq
  %v28 = vshrl.u32 %v27, 7
  %v29 = vsub.s32 0, %v28
  %v30 = vrot.slane %v25, %v29
  %v32 = vmul.f32 %v21, %v30
  %v33 = vmul.f32 %v22, %v30
  %v34 = vmul.f32 %v23, %v30
  %v35 = vmul.f32 %v24, %v30
  %v36 = vld [vmem:[%s2] sm:$0x1]
  %v38 = vlaneseq
  %v39 = vshrl.u32 %v38, 7
  %v40 = vsub.s32 0, %v39
  %v41 = vrot.slane %v36, %v40
  %v43 = vadd.f32 %v32, %v41
  %v44 = vadd.f32 %v33, %v41
  %v45 = vadd.f32 %v34, %v41
  %v46 = vadd.f32 %v35, %v41
  %vm47 = vcmp.gt.f32.partialorder %v43, 0.0
  %vm48 = vcmp.gt.f32.partialorder %v44, 0.0
  %vm49 = vcmp.gt.f32.partialorder %v45, 0.0
  %vm50 = vcmp.gt.f32.partialorder %v46, 0.0
  %v51 = vmul.f32 %v43, 0.2
  %v52 = vmul.f32 %v44, 0.2
  %v53 = vmul.f32 %v45, 0.2
  %v54 = vmul.f32 %v46, 0.2
  %v55 = vsel %vm47, %v43, %v51
  %v56 = vsel %vm48, %v44, %v52
  %v57 = vsel %vm49, %v45, %v53
  %v58 = vsel %vm50, %v46, %v54
  %v59 = vld [vmem:[%s3] sm:$0xff]
  %v60 = vld [vmem:[%s3 + $0x8] sm:$0xff]
  %v61 = vmul.f32 %v55, %v59
  %v62 = vmul.f32 %v56, %v60
  %v63 = vmul.f32 %v57, %v59
  %v64 = vmul.f32 %v58, %v60
  %v65 = vadd.f32 %v61, %v62
  %v66 = vrot.slane %v65, 4
  %v67 = vadd.f32 %v65, %v66
  %v68 = vrot.slane %v67, 2
  %v69 = vadd.f32 %v67, %v68
  %v70 = vrot.slane %v69, 1
  %v71 = vadd.f32 %v69, %v70
  %v72 = vadd.f32 %v63, %v64
  %v73 = vrot.slane %v72, 4
  %v74 = vadd.f32 %v72, %v73
  %v75 = vrot.slane %v74, 2
  %v76 = vadd.f32 %v74, %v75
  %v77 = vrot.slane %v76, 1
  %v78 = vadd.f32 %v76, %v77
  %vm81 = vcmask 1041409
  %v82 = vsel %vm81, %v78, %v71
  %vm84 = vcmask 1041408
  %v85 = vsel %vm84, %v82, 0.0
  %86 = vadd.xlane.f32.xlu0 %v85
  %v87 = vpop.xlane.xlu0 %86
  %v88 = vand.u32 2147483647, %v87
  %v89 = vsub.f32 0.0, %v88
  %v90 = vmul.f32 %v89, 1.442695
  %v91 = vpow.pop %v90
  %vm92 = vcmp.ge.f32.partialorder %v87, 0.0
  %v93 = vadd.f32 %v91, 1.0
  %v94 = vrcp.pop %v93
  %v95 = vmul.f32 1.0, %v94
  %v96 = vmul.f32 %v91, %v94
  %v97 = vsel %vm92, %v95, %v96
  %vm98 = vcmask 1024
  %99 = vst.msk [vmem:[%s4] sm:$0x3] %vm98, %v97
  // Predicated region
  $region18: #{discriminator_stage_1.9} parent=0 // pred_check
    _
  $region19: #{discriminator_stage_1.9} parent=0 // pred_check_branch
    %101 = sbr.rel (0) target = $region21
  $region20: #{discriminator_stage_1.9} parent=0 // pred_region
    _
  $region21: #{discriminator_stage_1.9} parent=0 // pred_fallthru
    _
  // Predicated region
  $region22: #{discriminator_stage_1.9} parent=0 // pred_check
    _
  $region23: #{discriminator_stage_1.9} parent=0 // pred_check_branch
    %103 = sbr.rel (0) target = $region25
  $region24: #{discriminator_stage_1.9} parent=0 // pred_region
    _
  $region25: #{discriminator_stage_1.9} parent=0 // pred_fallthru
    _

// kernel: discriminator_stage_1.8
$region0: #{discriminator_stage_1.8}
  #allocation0 [shape = 'u32[]', space=smem, size = 0x4, offset = 0x4, fixed_abs, tag = 'smem constant byte address 0x4 - core index']
  #allocation1 [shape = 'u32[144,128]{1,0:T(1,128)}', space=vmem, size = 0x12000, scoped, tag = 'internal scratch']
  %s0 = inlined_call_operand.vmem [shape: bf16[32,512], index: 0, kind: input, shape index: {}]
  %s1 = inlined_call_operand.vmem [shape: f32[1,512], index: 1, kind: input, shape index: {}]
  %s2 = inlined_call_operand.vmem [shape: f32[1,512], index: 2, kind: input, shape index: {}]
  %s3 = inlined_call_operand.vmem [shape: bf16[512,128], index: 3, kind: input, shape index: {}]
  %s4 = inlined_call_operand.vmem [shape: bf16[32,128], index: 4, kind: output, shape index: {0}]
  %s5 = inlined_call_operand.vmem [shape: f32[8,128], index: 5, kind: output, shape index: {1}]
  %s6 = inlined_call_operand.vmem [shape: f32[8,128], index: 6, kind: output, shape index: {2}]
  %7 = xla_tuple %s4, %s5, %s6
  %s8 = sld [smem:[#allocation0]]
  $region42: #{discriminator_stage_1.8} parent=0
    _
  %s10 = ssub.s32 1, %s8
  %s11 = scalar_select 0, %s10, %s8
  // Predicated region
  $region2: #{discriminator_stage_1.8} parent=0 // pred_check
    _
  $region3: #{discriminator_stage_1.8} parent=0 // pred_check_branch
    %13 = sbr.rel (0) target = $region5
  $region4: #{discriminator_stage_1.8} parent=0 // pred_region
    _
  $region5: #{discriminator_stage_1.8} parent=0 // pred_fallthru
    _
  // Predicated region
  $region6: #{discriminator_stage_1.8} parent=0 // pred_check
    _
  $region7: #{discriminator_stage_1.8} parent=0 // pred_check_branch
    %15 = sbr.rel (0) target = $region9
  $region8: #{discriminator_stage_1.8} parent=0 // pred_region
    _
  $region9: #{discriminator_stage_1.8} parent=0 // pred_fallthru
    _
  // Predicated region
  $region10: #{discriminator_stage_1.8} parent=0 // pred_check
    _
  $region11: #{discriminator_stage_1.8} parent=0 // pred_check_branch
    %17 = sbr.rel (0) target = $region13
  $region12: #{discriminator_stage_1.8} parent=0 // pred_region
    _
  $region13: #{discriminator_stage_1.8} parent=0 // pred_fallthru
    _
  // Predicated region
  $region14: #{discriminator_stage_1.8} parent=0 // pred_check
    _
  $region15: #{discriminator_stage_1.8} parent=0 // pred_check_branch
    %19 = sbr.rel (0) target = $region17
  $region16: #{discriminator_stage_1.8} parent=0 // pred_region
    _
  $region17: #{discriminator_stage_1.8} parent=0 // pred_fallthru
    _
  %v21 = vld [vmem:[%s0] sm:$0xff]
  %v22 = vld [vmem:[%s0 + $0x8] sm:$0xff]
  %v23 = vld [vmem:[%s0 + $0x10] sm:$0xff]
  %v24 = vld [vmem:[%s0 + $0x18] sm:$0xff]
  %v25 = vld [vmem:[%s0 + $0x20] sm:$0xff]
  %v26 = vld [vmem:[%s0 + $0x28] sm:$0xff]
  %v27 = vld [vmem:[%s0 + $0x30] sm:$0xff]
  %v28 = vld [vmem:[%s0 + $0x38] sm:$0xff]
  %v29 = vunpack.c.l.bf16 %v21
  %v30 = vunpack.c.h.bf16 %v21
  %v31 = vunpack.c.l.bf16 %v22
  %v32 = vunpack.c.h.bf16 %v22
  %v33 = vunpack.c.l.bf16 %v23
  %v34 = vunpack.c.h.bf16 %v23
  %v35 = vunpack.c.l.bf16 %v24
  %v36 = vunpack.c.h.bf16 %v24
  %v37 = vunpack.c.l.bf16 %v25
  %v38 = vunpack.c.h.bf16 %v25
  %v39 = vunpack.c.l.bf16 %v26
  %v40 = vunpack.c.h.bf16 %v26
  %v41 = vunpack.c.l.bf16 %v27
  %v42 = vunpack.c.h.bf16 %v27
  %v43 = vunpack.c.l.bf16 %v28
  %v44 = vunpack.c.h.bf16 %v28
  %v45 = vld [vmem:[%s1] sm:$0xf]
  %v47 = vlaneseq
  %v48 = vshrl.u32 %v47, 7
  %v49 = vsub.s32 0, %v48
  %v50 = vrot.slane %v45, %v49
  %v51 = vlaneseq
  %v52 = vshrl.u32 %v51, 7
  %v53 = vsub.s32 1, %v52
  %v54 = vrot.slane %v45, %v53
  %v55 = vlaneseq
  %v56 = vshrl.u32 %v55, 7
  %v57 = vsub.s32 2, %v56
  %v58 = vrot.slane %v45, %v57
  %v59 = vlaneseq
  %v60 = vshrl.u32 %v59, 7
  %v61 = vsub.s32 3, %v60
  %v62 = vrot.slane %v45, %v61
  %v67 = vmul.f32 %v29, %v50
  %v68 = vmul.f32 %v30, %v54
  %v69 = vmul.f32 %v31, %v58
  %v70 = vmul.f32 %v32, %v62
  %v71 = vmul.f32 %v33, %v50
  %v72 = vmul.f32 %v34, %v54
  %v73 = vmul.f32 %v35, %v58
  %v74 = vmul.f32 %v36, %v62
  %v75 = vmul.f32 %v37, %v50
  %v76 = vmul.f32 %v38, %v54
  %v77 = vmul.f32 %v39, %v58
  %v78 = vmul.f32 %v40, %v62
  %v79 = vmul.f32 %v41, %v50
  %v80 = vmul.f32 %v42, %v54
  %v81 = vmul.f32 %v43, %v58
  %v82 = vmul.f32 %v44, %v62
  %v83 = vld [vmem:[%s2] sm:$0xf]
  %v85 = vlaneseq
  %v86 = vshrl.u32 %v85, 7
  %v87 = vsub.s32 0, %v86
  %v88 = vrot.slane %v83, %v87
  %v89 = vlaneseq
  %v90 = vshrl.u32 %v89, 7
  %v91 = vsub.s32 1, %v90
  %v92 = vrot.slane %v83, %v91
  %v93 = vlaneseq
  %v94 = vshrl.u32 %v93, 7
  %v95 = vsub.s32 2, %v94
  %v96 = vrot.slane %v83, %v95
  %v97 = vlaneseq
  %v98 = vshrl.u32 %v97, 7
  %v99 = vsub.s32 3, %v98
  %v100 = vrot.slane %v83, %v99
  %v105 = vadd.f32 %v67, %v88
  %v106 = vadd.f32 %v68, %v92
  %v107 = vadd.f32 %v69, %v96
  %v108 = vadd.f32 %v70, %v100
  %v109 = vadd.f32 %v71, %v88
  %v110 = vadd.f32 %v72, %v92
  %v111 = vadd.f32 %v73, %v96
  %v112 = vadd.f32 %v74, %v100
  %v113 = vadd.f32 %v75, %v88
  %v114 = vadd.f32 %v76, %v92
  %v115 = vadd.f32 %v77, %v96
  %v116 = vadd.f32 %v78, %v100
  %v117 = vadd.f32 %v79, %v88
  %v118 = vadd.f32 %v80, %v92
  %v119 = vadd.f32 %v81, %v96
  %v120 = vadd.f32 %v82, %v100
  %vm121 = vcmp.gt.f32.partialorder %v105, 0.0
  %vm122 = vcmp.gt.f32.partialorder %v106, 0.0
  %vm123 = vcmp.gt.f32.partialorder %v107, 0.0
  %vm124 = vcmp.gt.f32.partialorder %v108, 0.0
  %vm125 = vcmp.gt.f32.partialorder %v109, 0.0
  %vm126 = vcmp.gt.f32.partialorder %v110, 0.0
  %vm127 = vcmp.gt.f32.partialorder %v111, 0.0
  %vm128 = vcmp.gt.f32.partialorder %v112, 0.0
  %vm129 = vcmp.gt.f32.partialorder %v113, 0.0
  %vm130 = vcmp.gt.f32.partialorder %v114, 0.0
  %vm131 = vcmp.gt.f32.partialorder %v115, 0.0
  %vm132 = vcmp.gt.f32.partialorder %v116, 0.0
  %vm133 = vcmp.gt.f32.partialorder %v117, 0.0
  %vm134 = vcmp.gt.f32.partialorder %v118, 0.0
  %vm135 = vcmp.gt.f32.partialorder %v119, 0.0
  %vm136 = vcmp.gt.f32.partialorder %v120, 0.0
  %v137 = vmul.f32 %v105, 0.2
  %v138 = vmul.f32 %v106, 0.2
  %v139 = vmul.f32 %v107, 0.2
  %v140 = vmul.f32 %v108, 0.2
  %v141 = vmul.f32 %v109, 0.2
  %v142 = vmul.f32 %v110, 0.2
  %v143 = vmul.f32 %v111, 0.2
  %v144 = vmul.f32 %v112, 0.2
  %v145 = vmul.f32 %v113, 0.2
  %v146 = vmul.f32 %v114, 0.2
  %v147 = vmul.f32 %v115, 0.2
  %v148 = vmul.f32 %v116, 0.2
  %v149 = vmul.f32 %v117, 0.2
  %v150 = vmul.f32 %v118, 0.2
  %v151 = vmul.f32 %v119, 0.2
  %v152 = vmul.f32 %v120, 0.2
  %v153 = vsel %vm121, %v105, %v137
  %v154 = vsel %vm122, %v106, %v138
  %v155 = vsel %vm123, %v107, %v139
  %v156 = vsel %vm124, %v108, %v140
  %v157 = vsel %vm125, %v109, %v141
  %v158 = vsel %vm126, %v110, %v142
  %v159 = vsel %vm127, %v111, %v143
  %v160 = vsel %vm128, %v112, %v144
  %v161 = vsel %vm129, %v113, %v145
  %v162 = vsel %vm130, %v114, %v146
  %v163 = vsel %vm131, %v115, %v147
  %v164 = vsel %vm132, %v116, %v148
  %v165 = vsel %vm133, %v117, %v149
  %v166 = vsel %vm134, %v118, %v150
  %v167 = vsel %vm135, %v119, %v151
  %v168 = vsel %vm136, %v120, %v152
  %v169 = vpack.c.bf16 %v157, %v153
  %v170 = vpack.c.bf16 %v158, %v154
  %v171 = vpack.c.bf16 %v159, %v155
  %v172 = vpack.c.bf16 %v160, %v156
  %v173 = vpack.c.bf16 %v165, %v161
  %v174 = vpack.c.bf16 %v166, %v162
  %v175 = vpack.c.bf16 %v167, %v163
  %v176 = vpack.c.bf16 %v168, %v164
  %v177 = vld [vmem:[%s3] sm:$0xf]
  %v178 = vld [vmem:[%s3 + $0x4] sm:$0xf]
  %v179 = vld [vmem:[%s3 + $0x8] sm:$0xf]
  %v180 = vld [vmem:[%s3 + $0xc] sm:$0xf]
  %v181 = vld [vmem:[%s3 + $0x10] sm:$0xf]
  %v182 = vld [vmem:[%s3 + $0x14] sm:$0xf]
  %v183 = vld [vmem:[%s3 + $0x18] sm:$0xf]
  %v184 = vld [vmem:[%s3 + $0x1c] sm:$0xf]
  %v185 = vld [vmem:[%s3 + $0x20] sm:$0xf]
  %v186 = vld [vmem:[%s3 + $0x24] sm:$0xf]
  %v187 = vld [vmem:[%s3 + $0x28] sm:$0xf]
  %v188 = vld [vmem:[%s3 + $0x2c] sm:$0xf]
  %v189 = vld [vmem:[%s3 + $0x30] sm:$0xf]
  %v190 = vld [vmem:[%s3 + $0x34] sm:$0xf]
  %v191 = vld [vmem:[%s3 + $0x38] sm:$0xf]
  %v192 = vld [vmem:[%s3 + $0x3c] sm:$0xf]
  %v193 = vld [vmem:[%s3 + $0x40] sm:$0xf]
  %v194 = vld [vmem:[%s3 + $0x44] sm:$0xf]
  %v195 = vld [vmem:[%s3 + $0x48] sm:$0xf]
  %v196 = vld [vmem:[%s3 + $0x4c] sm:$0xf]
  %v197 = vld [vmem:[%s3 + $0x50] sm:$0xf]
  %v198 = vld [vmem:[%s3 + $0x54] sm:$0xf]
  %v199 = vld [vmem:[%s3 + $0x58] sm:$0xf]
  %v200 = vld [vmem:[%s3 + $0x5c] sm:$0xf]
  %v201 = vld [vmem:[%s3 + $0x60] sm:$0xf]
  %v202 = vld [vmem:[%s3 + $0x64] sm:$0xf]
  %v203 = vld [vmem:[%s3 + $0x68] sm:$0xf]
  %v204 = vld [vmem:[%s3 + $0x6c] sm:$0xf]
  %v205 = vld [vmem:[%s3 + $0x70] sm:$0xf]
  %v206 = vld [vmem:[%s3 + $0x74] sm:$0xf]
  %v207 = vld [vmem:[%s3 + $0x78] sm:$0xf]
  %v208 = vld [vmem:[%s3 + $0x7c] sm:$0xf]
  %v209 = vld [vmem:[%s3 + $0x80] sm:$0xf]
  %v210 = vld [vmem:[%s3 + $0x84] sm:$0xf]
  %v211 = vld [vmem:[%s3 + $0x88] sm:$0xf]
  %v212 = vld [vmem:[%s3 + $0x8c] sm:$0xf]
  %v213 = vld [vmem:[%s3 + $0x90] sm:$0xf]
  %v214 = vld [vmem:[%s3 + $0x94] sm:$0xf]
  %v215 = vld [vmem:[%s3 + $0x98] sm:$0xf]
  %v216 = vld [vmem:[%s3 + $0x9c] sm:$0xf]
  %v217 = vld [vmem:[%s3 + $0xa0] sm:$0xf]
  %v218 = vld [vmem:[%s3 + $0xa4] sm:$0xf]
  %v219 = vld [vmem:[%s3 + $0xa8] sm:$0xf]
  %v220 = vld [vmem:[%s3 + $0xac] sm:$0xf]
  %v221 = vld [vmem:[%s3 + $0xb0] sm:$0xf]
  %v222 = vld [vmem:[%s3 + $0xb4] sm:$0xf]
  %v223 = vld [vmem:[%s3 + $0xb8] sm:$0xf]
  %v224 = vld [vmem:[%s3 + $0xbc] sm:$0xf]
  %v225 = vld [vmem:[%s3 + $0xc0] sm:$0xf]
  %v226 = vld [vmem:[%s3 + $0xc4] sm:$0xf]
  %v227 = vld [vmem:[%s3 + $0xc8] sm:$0xf]
  %v228 = vld [vmem:[%s3 + $0xcc] sm:$0xf]
  %v229 = vld [vmem:[%s3 + $0xd0] sm:$0xf]
  %v230 = vld [vmem:[%s3 + $0xd4] sm:$0xf]
  %v231 = vld [vmem:[%s3 + $0xd8] sm:$0xf]
  %v232 = vld [vmem:[%s3 + $0xdc] sm:$0xf]
  %v233 = vld [vmem:[%s3 + $0xe0] sm:$0xf]
  %v234 = vld [vmem:[%s3 + $0xe4] sm:$0xf]
  %v235 = vld [vmem:[%s3 + $0xe8] sm:$0xf]
  %v236 = vld [vmem:[%s3 + $0xec] sm:$0xf]
  %v237 = vld [vmem:[%s3 + $0xf0] sm:$0xf]
  %v238 = vld [vmem:[%s3 + $0xf4] sm:$0xf]
  %v239 = vld [vmem:[%s3 + $0xf8] sm:$0xf]
  %v240 = vld [vmem:[%s3 + $0xfc] sm:$0xf]
  %v305 = vunpack.c.l.b16 %v177
  %v306 = vunpack.c.l.b16 %v178
  %v307 = vunpack.c.l.b16 %v179
  %v308 = vunpack.c.l.b16 %v180
  %v309 = vunpack.c.l.b16 %v181
  %v310 = vunpack.c.l.b16 %v182
  %v311 = vunpack.c.l.b16 %v183
  %v312 = vunpack.c.l.b16 %v184
  %v313 = vunpack.c.l.b16 %v185
  %v314 = vunpack.c.l.b16 %v186
  %v315 = vunpack.c.l.b16 %v187
  %v316 = vunpack.c.l.b16 %v188
  %v317 = vunpack.c.l.b16 %v189
  %v318 = vunpack.c.l.b16 %v190
  %v319 = vunpack.c.l.b16 %v191
  %v320 = vunpack.c.l.b16 %v192
  %v321 = vunpack.c.l.b16 %v193
  %v322 = vunpack.c.l.b16 %v194
  %v323 = vunpack.c.l.b16 %v195
  %v324 = vunpack.c.l.b16 %v196
  %v325 = vunpack.c.l.b16 %v197
  %v326 = vunpack.c.l.b16 %v198
  %v327 = vunpack.c.l.b16 %v199
  %v328 = vunpack.c.l.b16 %v200
  %v329 = vunpack.c.l.b16 %v201
  %v330 = vunpack.c.l.b16 %v202
  %v331 = vunpack.c.l.b16 %v203
  %v332 = vunpack.c.l.b16 %v204
  %v333 = vunpack.c.l.b16 %v205
  %v334 = vunpack.c.l.b16 %v206
  %v335 = vunpack.c.l.b16 %v207
  %v336 = vunpack.c.l.b16 %v208
  %v337 = vunpack.c.l.b16 %v209
  %v338 = vunpack.c.l.b16 %v210
  %v339 = vunpack.c.l.b16 %v211
  %v340 = vunpack.c.l.b16 %v212
  %v341 = vunpack.c.l.b16 %v213
  %v342 = vunpack.c.l.b16 %v214
  %v343 = vunpack.c.l.b16 %v215
  %v344 = vunpack.c.l.b16 %v216
  %v345 = vunpack.c.l.b16 %v217
  %v346 = vunpack.c.l.b16 %v218
  %v347 = vunpack.c.l.b16 %v219
  %v348 = vunpack.c.l.b16 %v220
  %v349 = vunpack.c.l.b16 %v221
  %v350 = vunpack.c.l.b16 %v222
  %v351 = vunpack.c.l.b16 %v223
  %v352 = vunpack.c.l.b16 %v224
  %v353 = vunpack.c.l.b16 %v225
  %v354 = vunpack.c.l.b16 %v226
  %v355 = vunpack.c.l.b16 %v227
  %v356 = vunpack.c.l.b16 %v228
  %v357 = vunpack.c.l.b16 %v229
  %v358 = vunpack.c.l.b16 %v230
  %v359 = vunpack.c.l.b16 %v231
  %v360 = vunpack.c.l.b16 %v232
  %v361 = vunpack.c.l.b16 %v233
  %v362 = vunpack.c.l.b16 %v234
  %v363 = vunpack.c.l.b16 %v235
  %v364 = vunpack.c.l.b16 %v236
  %v365 = vunpack.c.l.b16 %v237
  %v366 = vunpack.c.l.b16 %v238
  %v367 = vunpack.c.l.b16 %v239
  %v368 = vunpack.c.l.b16 %v240
  %v369 = vpack.c.b16 %v306, %v305
  %v370 = vpack.c.b16 %v308, %v307
  %v371 = vpack.c.b16 %v310, %v309
  %v372 = vpack.c.b16 %v312, %v311
  %v373 = vpack.c.b16 %v314, %v313
  %v374 = vpack.c.b16 %v316, %v315
  %v375 = vpack.c.b16 %v318, %v317
  %v376 = vpack.c.b16 %v320, %v319
  %v377 = vpack.c.b16 %v322, %v321
  %v378 = vpack.c.b16 %v324, %v323
  %v379 = vpack.c.b16 %v326, %v325
  %v380 = vpack.c.b16 %v328, %v327
  %v381 = vpack.c.b16 %v330, %v329
  %v382 = vpack.c.b16 %v332, %v331
  %v383 = vpack.c.b16 %v334, %v333
  %v384 = vpack.c.b16 %v336, %v335
  %v385 = vpack.c.b16 %v338, %v337
  %v386 = vpack.c.b16 %v340, %v339
  %v387 = vpack.c.b16 %v342, %v341
  %v388 = vpack.c.b16 %v344, %v343
  %v389 = vpack.c.b16 %v346, %v345
  %v390 = vpack.c.b16 %v348, %v347
  %v391 = vpack.c.b16 %v350, %v349
  %v392 = vpack.c.b16 %v352, %v351
  %v393 = vpack.c.b16 %v354, %v353
  %v394 = vpack.c.b16 %v356, %v355
  %v395 = vpack.c.b16 %v358, %v357
  %v396 = vpack.c.b16 %v360, %v359
  %v397 = vpack.c.b16 %v362, %v361
  %v398 = vpack.c.b16 %v364, %v363
  %v399 = vpack.c.b16 %v366, %v365
  %v400 = vpack.c.b16 %v368, %v367
  %433 = vmatprep.subr.bf16.mxu0 0
  %434 = vmatpush1.bf16.msra.mxu0 %v369
  %435 = vmatprep.subr.bf16.mxu0 0
  %436 = vmatpush1.bf16.msra.mxu0 %v370
  %437 = vmatprep.subr.bf16.mxu0 0
  %438 = vmatpush1.bf16.msra.mxu0 %v371
  %439 = vmatprep.subr.bf16.mxu0 0
  %440 = vmatpush1.bf16.msra.mxu0 %v372
  %441 = vmatprep.subr.bf16.mxu0 0
  %442 = vmatpush1.bf16.msra.mxu0 %v373
  %443 = vmatprep.subr.bf16.mxu0 0
  %444 = vmatpush1.bf16.msra.mxu0 %v374
  %445 = vmatprep.subr.bf16.mxu0 0
  %446 = vmatpush1.bf16.msra.mxu0 %v375
  %447 = vmatprep.subr.bf16.mxu0 0
  %448 = vmatpush1.bf16.msra.mxu0 %v376
  %449 = vmatprep.subr.bf16.mxu0 0
  %450 = vmatpush1.bf16.msra.mxu0 %v377
  %451 = vmatprep.subr.bf16.mxu0 0
  %452 = vmatpush1.bf16.msra.mxu0 %v378
  %453 = vmatprep.subr.bf16.mxu0 0
  %454 = vmatpush1.bf16.msra.mxu0 %v379
  %455 = vmatprep.subr.bf16.mxu0 0
  %456 = vmatpush1.bf16.msra.mxu0 %v380
  %457 = vmatprep.subr.bf16.mxu0 0
  %458 = vmatpush1.bf16.msra.mxu0 %v381
  %459 = vmatprep.subr.bf16.mxu0 0
  %460 = vmatpush1.bf16.msra.mxu0 %v382
  %461 = vmatprep.subr.bf16.mxu0 0
  %462 = vmatpush1.bf16.msra.mxu0 %v383
  %463 = vmatprep.subr.bf16.mxu0 0
  %464 = vmatpush1.bf16.msra.mxu0 %v384
  %465 = vmatprep.mubr.bf16.mxu0 %v170
  %466 = vmatmul.mubr.bf16.gmra.mrb[0].mxu0 %v169
  %v467 = vpop.f32.mrb[0].mxu0
  %v468 = vadd.f32 0.0, %v467
  %v469 = vpop.f32.mrb[0].mxu0
  %v470 = vpop.f32.mrb[0].mxu0
  %v471 = vadd.f32 0.0, %v470
  %v472 = vpop.f32.mrb[0].mxu0
  %473 = vmatprep.mubr.bf16.mxu0 %v174
  %474 = vmatmul.mubr.bf16.gmra.mrb[0].mxu0 %v173
  %v475 = vpop.f32.mrb[0].mxu0
  %v476 = vadd.f32 0.0, %v475
  %v477 = vpop.f32.mrb[0].mxu0
  %v478 = vpop.f32.mrb[0].mxu0
  %v479 = vadd.f32 0.0, %v478
  %v480 = vpop.f32.mrb[0].mxu0
  %481 = vdwg.mxu0
  %482 = vmatprep.subr.bf16.mxu0 0
  %483 = vmatpush1.bf16.msra.mxu0 %v385
  %484 = vmatprep.subr.bf16.mxu0 0
  %485 = vmatpush1.bf16.msra.mxu0 %v386
  %486 = vmatprep.subr.bf16.mxu0 0
  %487 = vmatpush1.bf16.msra.mxu0 %v387
  %488 = vmatprep.subr.bf16.mxu0 0
  %489 = vmatpush1.bf16.msra.mxu0 %v388
  %490 = vmatprep.subr.bf16.mxu0 0
  %491 = vmatpush1.bf16.msra.mxu0 %v389
  %492 = vmatprep.subr.bf16.mxu0 0
  %493 = vmatpush1.bf16.msra.mxu0 %v390
  %494 = vmatprep.subr.bf16.mxu0 0
  %495 = vmatpush1.bf16.msra.mxu0 %v391
  %496 = vmatprep.subr.bf16.mxu0 0
  %497 = vmatpush1.bf16.msra.mxu0 %v392
  %498 = vmatprep.subr.bf16.mxu0 0
  %499 = vmatpush1.bf16.msra.mxu0 %v393
  %500 = vmatprep.subr.bf16.mxu0 0
  %501 = vmatpush1.bf16.msra.mxu0 %v394
  %502 = vmatprep.subr.bf16.mxu0 0
  %503 = vmatpush1.bf16.msra.mxu0 %v395
  %504 = vmatprep.subr.bf16.mxu0 0
  %505 = vmatpush1.bf16.msra.mxu0 %v396
  %506 = vmatprep.subr.bf16.mxu0 0
  %507 = vmatpush1.bf16.msra.mxu0 %v397
  %508 = vmatprep.subr.bf16.mxu0 0
  %509 = vmatpush1.bf16.msra.mxu0 %v398
  %510 = vmatprep.subr.bf16.mxu0 0
  %511 = vmatpush1.bf16.msra.mxu0 %v399
  %512 = vmatprep.subr.bf16.mxu0 0
  %513 = vmatpush1.bf16.msra.mxu0 %v400
  %514 = vmatprep.mubr.bf16.mxu0 %v172
  %515 = vmatmul.mubr.bf16.gmra.mrb[0].mxu0 %v171
  %v516 = vpop.f32.mrb[0].mxu0
  %v517 = vadd.f32 %v468, %v516
  %v518 = vpop.f32.mrb[0].mxu0
  %v519 = vpop.f32.mrb[0].mxu0
  %v520 = vadd.f32 %v471, %v519
  %v521 = vpop.f32.mrb[0].mxu0
  %522 = vmatprep.mubr.bf16.mxu0 %v176
  %523 = vmatmul.mubr.bf16.gmra.mrb[0].mxu0 %v175
  %v524 = vpop.f32.mrb[0].mxu0
  %v525 = vadd.f32 %v476, %v524
  %v526 = vpop.f32.mrb[0].mxu0
  %v527 = vpop.f32.mrb[0].mxu0
  %v528 = vadd.f32 %v479, %v527
  %v529 = vpop.f32.mrb[0].mxu0
  %530 = vdwg.mxu0
  %v531 = vpack.c.bf16 %v520, %v517
  %v532 = vpack.c.bf16 %v528, %v525
  %v535 = vunpack.c.l.b16 %v531
  %v536 = vunpack.c.h.b16 %v531
  %v537 = vunpack.c.l.b16 %v532
  %v538 = vunpack.c.h.b16 %v532
  %v539 = vpack.c.b16 %v535, %v535
  %v540 = vpack.c.b16 %v536, %v536
  %v541 = vpack.c.b16 %v537, %v537
  %v542 = vpack.c.b16 %v538, %v538
  %547 = vst [vmem:[%s4] sm:$0xf] %v539
  %548 = vst [vmem:[%s4 + $0x4] sm:$0xf] %v540
  %549 = vst [vmem:[%s4 + $0x8] sm:$0xf] %v541
  %550 = vst [vmem:[%s4 + $0xc] sm:$0xf] %v542
  %v551 = vadd.f32 %v517, %v520
  %v552 = vadd.f32 %v551, %v525
  %v553 = vadd.f32 %v552, %v528
  %v554 = vrot.slane %v553, 4
  %v555 = vadd.f32 %v553, %v554
  %v556 = vrot.slane %v555, 2
  %v557 = vadd.f32 %v555, %v556
  %v558 = vrot.slane %v557, 1
  %v559 = vadd.f32 %v557, %v558
  %560 = vst [vmem:[%s5] sm:$0xff] %v559
  %v561 = vmul.f32 %v517, %v517
  %v562 = vmul.f32 %v520, %v520
  %v563 = vmul.f32 %v525, %v525
  %v564 = vmul.f32 %v528, %v528
  %v565 = vadd.f32 %v561, %v562
  %v566 = vadd.f32 %v565, %v563
  %v567 = vadd.f32 %v566, %v564
  %v568 = vrot.slane %v567, 4
  %v569 = vadd.f32 %v567, %v568
  %v570 = vrot.slane %v569, 2
  %v571 = vadd.f32 %v569, %v570
  %v572 = vrot.slane %v571, 1
  %v573 = vadd.f32 %v571, %v572
  %574 = vst [vmem:[%s6] sm:$0xff] %v573
  // Predicated region
  $region18: #{discriminator_stage_1.8} parent=0 // pred_check
    _
  $region19: #{discriminator_stage_1.8} parent=0 // pred_check_branch
    %576 = sbr.rel (0) target = $region21
  $region20: #{discriminator_stage_1.8} parent=0 // pred_region
    _
  $region21: #{discriminator_stage_1.8} parent=0 // pred_fallthru
    _
  // Predicated region
  $region22: #{discriminator_stage_1.8} parent=0 // pred_check
    _
  $region23: #{discriminator_stage_1.8} parent=0 // pred_check_branch
    %578 = sbr.rel (0) target = $region25
  $region24: #{discriminator_stage_1.8} parent=0 // pred_region
    _
  $region25: #{discriminator_stage_1.8} parent=0 // pred_fallthru
    _
  // Predicated region
  $region26: #{discriminator_stage_1.8} parent=0 // pred_check
    _
  $region27: #{discriminator_stage_1.8} parent=0 // pred_check_branch
    %580 = sbr.rel (0) target = $region29
  $region28: #{discriminator_stage_1.8} parent=0 // pred_region
    _
  $region29: #{discriminator_stage_1.8} parent=0 // pred_fallthru
    _
  // Predicated region
  $region30: #{discriminator_stage_1.8} parent=0 // pred_check
    _
  $region31: #{discriminator_stage_1.8} parent=0 // pred_check_branch
    %582 = sbr.rel (0) target = $region33
  $region32: #{discriminator_stage_1.8} parent=0 // pred_region
    _
  $region33: #{discriminator_stage_1.8} parent=0 // pred_fallthru
    _
  // Predicated region
  $region34: #{discriminator_stage_1.8} parent=0 // pred_check
    _
  $region35: #{discriminator_stage_1.8} parent=0 // pred_check_branch
    %584 = sbr.rel (0) target = $region37
  $region36: #{discriminator_stage_1.8} parent=0 // pred_region
    _
  $region37: #{discriminator_stage_1.8} parent=0 // pred_fallthru
    _
  // Predicated region
  $region38: #{discriminator_stage_1.8} parent=0 // pred_check
    _
  $region39: #{discriminator_stage_1.8} parent=0 // pred_check_branch
    %586 = sbr.rel (0) target = $region41
  $region40: #{discriminator_stage_1.8} parent=0 // pred_region
    _
  $region41: #{discriminator_stage_1.8} parent=0 // pred_fallthru
    _

</llo_original>
